<compile_context>
chip_gen: v5e
topology: v5e:2x2
jax: 0.10.0
libtpu: 0.0.40
codegen_flags: <defaults>
</compile_context>

<pallas_src>
import functools

import jax
import jax.numpy as jnp
import numpy as np
from jax.experimental import pallas as pl
from jax.experimental.pallas import tpu as pltpu


# ----------------------------------------------------------------------------
# Fused kernel: unary stacks (left + right) + correlation, one image pair/step
# ----------------------------------------------------------------------------
def _make_fused_kernel(H, W, C, layer_dims, k, n_out_lanes):
    KL = (W + 2) * C          # lane width of one padded image row
    HP = H + 2                # padded rows per image
    n_layers = len(layer_dims)

    def kernel(*refs):
        xin_ref, rred_ref = refs[0], refs[1]
        wb_refs = refs[2:2 + 2 * n_layers]
        o_ref = refs[2 + 2 * n_layers]
        xpad_ref = refs[3 + 2 * n_layers]

        if n_layers > 1:
            # Zero only the 4 halo rows of the activation scratch.  The halo
            # COLUMNS and channel-padding lanes of the interior rows become
            # exact zeros again on every layer writeback (banded weight has no
            # output columns there and the bias row is zero there).
            xpad_ref[0:1, :] = jnp.zeros((1, KL), xpad_ref.dtype)
            xpad_ref[HP - 1:HP + 1, :] = jnp.zeros((2, KL), xpad_ref.dtype)
            xpad_ref[2 * HP - 1:2 * HP, :] = jnp.zeros((1, KL), xpad_ref.dtype)

        # ---- unary conv stack: 3 banded MXU matmuls (one per dh tap) / image ----
        phi = [None, None]                      # final-layer features, f32 (H, KL)
        for layer in range(n_layers):
            w_ref = wb_refs[2 * layer]          # (3, KL, KL) bf16 banded conv weight
            b_ref = wb_refs[2 * layer + 1]      # (1, KL) f32 bias row (zero on halos)
            src_ref = xin_ref if layer == 0 else xpad_ref
            for s in range(2):                  # s=0: left image, s=1: right image
                row0 = s * HP
                acc = jnp.zeros((H, KL), jnp.float32)
                for dh in range(3):             # dh tap = sublane-offset slice
                    a = src_ref[row0 + dh:row0 + dh + H, :]        # bf16 (H, KL)
                    acc = acc + jnp.dot(a, w_ref[dh],
                                        preferred_element_type=jnp.float32)
                act = jnp.maximum(acc + b_ref[...], 0.0)           # f32 (H, KL)
                if layer + 1 < n_layers:
                    xpad_ref[row0 + 1:row0 + 1 + H, :] = act.astype(xpad_ref.dtype)
                else:
                    phi[s] = act

        phi_l, phi_r = phi

        # ---- correlation: channels stay folded in the lane axis ----
        # Disparity shift = static lane-offset slice (the 1-pixel zero halo
        # columns give exact zeros for w < d, so no validity mask is needed);
        # per-pixel channel sum = small MXU matmul with a 0/1 reduction matrix
        # whose output is lane-dense (H, 128).
        for d in range(k):
            off = d * C
            prod = phi_l[:, off:] * phi_r[:, :KL - off]            # (H, KL - off)
            corr = jnp.dot(prod, rred_ref[off:, :],
                           preferred_element_type=jnp.float32)     # (H, 128)
            o_ref[d] = corr

    return kernel


# ----------------------------------------------------------------------------
# Wrapper-side layout plumbing (all static / one-shot XLA ops)
# ----------------------------------------------------------------------------
def _prepare_input(l_nchw, r_nchw, C):
    """(N,Cin,H,W) x2 -> (N, 2*(H+2), (W+2)*C) bf16, zero halo + zero pad channels."""
    N, Cin, H, W = l_nchw.shape
    x = jnp.stack([l_nchw, r_nchw], axis=1)                    # (N,2,Cin,H,W)
    x = jnp.transpose(x, (0, 1, 3, 4, 2)).astype(jnp.float32)  # (N,2,H,W,Cin)
    xin = jnp.zeros((N, 2, H + 2, W + 2, C), jnp.float32)
    xin = xin.at[:, :, 1:H + 1, 1:W + 1, :Cin].set(x)
    return xin.reshape(N, 2 * (H + 2), (W + 2) * C).astype(jnp.bfloat16)


def _build_banded_weight(w, C, W, cin, cout):
    """(3,3,cin,cout) conv weight -> (3, (W+2)*C, (W+2)*C) bf16 banded matrices.

    B[dh][u*C+ci, v*C+co] = w[dh, u-v+1, ci, co] for v in 1..W (interior output
    pixels); zero rows for padding channels and zero columns for halo pixels /
    padding output channels.
    """
    mats = []
    for dh in range(3):
        acc = None
        for dw in range(3):
            sel = np.eye(W + 2, k=1 - dw, dtype=np.float32)     # u == v - 1 + dw
            sel[:, 0] = 0.0
            sel[:, W + 1] = 0.0                                 # no halo outputs
            wpad = jnp.zeros((C, C), jnp.float32).at[:cin, :cout].set(w[dh, dw])
            term = jnp.kron(jnp.asarray(sel), wpad)
            acc = term if acc is None else acc + term
        mats.append(acc)
    return jnp.stack(mats, axis=0).astype(jnp.bfloat16)


def _build_bias_row(b, C, W, cout):
    """(cout,) bias -> (1, (W+2)*C) f32 row, zero at halo / padding-channel lanes."""
    t = jnp.zeros((W + 2, C), jnp.float32)
    t = t.at[1:W + 1, :cout].set(jnp.broadcast_to(b, (W, cout)))
    return t.reshape(1, (W + 2) * C)


def _build_reduce_mat(C, W, c_last, n_out_lanes):
    """Static 0/1 matrix: R[(w+1)*C + c, w] = 1 for w<W, c<c_last (else 0)."""
    KL = (W + 2) * C
    R = np.zeros((KL, n_out_lanes), np.float32)
    for w in range(W):
        R[(w + 1) * C:(w + 1) * C + c_last, w] = 1.0
    return jnp.asarray(R)


def _stereo_forward_impl(l_nchw, r_nchw, params, k):
    N, Cin, H, W = l_nchw.shape
    layer_dims = tuple((int(w.shape[2]), int(w.shape[3])) for w, _ in params)
    assert layer_dims[0][0] == Cin
    c_last = layer_dims[-1][1]
    C = max(Cin, max(max(ci, co) for ci, co in layer_dims))     # lane stride / pixel
    KL = (W + 2) * C
    NL = 128                                                    # output lane width
    assert W <= NL and k * C <= KL

    xin = _prepare_input(l_nchw, r_nchw, C)                     # (N, 2*(H+2), KL) bf16
    rred = _build_reduce_mat(C, W, c_last, NL)                  # (KL, 128) f32

    flat_params = []
    in_specs = [
        pl.BlockSpec((None, 2 * (H + 2), KL), lambda n: (n, 0, 0)),
        pl.BlockSpec((KL, NL), lambda n: (0, 0)),
    ]
    for (w, b), (ci, co) in zip(params, layer_dims):
        flat_params.append(_build_banded_weight(w, C, W, ci, co))
        flat_params.append(_build_bias_row(b, C, W, co))
        in_specs.append(pl.BlockSpec((3, KL, KL), lambda n: (0, 0, 0)))
        in_specs.append(pl.BlockSpec((1, KL), lambda n: (0, 0)))

    kernel = _make_fused_kernel(H, W, C, layer_dims, k, NL)
    out = pl.pallas_call(
        kernel,
        out_shape=jax.ShapeDtypeStruct((N, k, H, NL), jnp.float32),
        grid_spec=pltpu.PrefetchScalarGridSpec(
            num_scalar_prefetch=0,
            grid=(N,),
            in_specs=in_specs,
            out_specs=pl.BlockSpec((None, k, H, NL), lambda n: (n, 0, 0, 0)),
            scratch_shapes=[
                pltpu.VMEM((2 * (H + 2), KL), jnp.bfloat16),    # padded L/R activations
            ],
        ),
        compiler_params=pltpu.CompilerParams(
            dimension_semantics=("parallel",),   # one image pair per core on v7x
        ),
    )(xin, rred, *flat_params)
    # Kernel writes lane-dense (H, 128) rows; crop the unused lanes here.
    return out[:, :, :, :W]


@functools.partial(jax.jit, static_argnums=(3,))
def stereo_cnn_forward(l_nchw, r_nchw, params, k):
    return _stereo_forward_impl(l_nchw, r_nchw, params, k)


# ----------------------------------------------------------------------------
# Parameter init (deterministic xavier_normal conv weights, zero bias)
# ----------------------------------------------------------------------------
def init_unary_params(key, num_layers, in_ch, feat_ch):
    params = []
    cin = in_ch
    for _ in range(num_layers):
        key, wk = jax.random.split(key)
        cout = feat_ch
        fan_in, fan_out = cin * 9, cout * 9
        std = (2.0 / (fan_in + fan_out)) ** 0.5
        w = std * jax.random.normal(wk, (3, 3, cin, cout), jnp.float32)
        b = jnp.zeros((cout,), jnp.float32)
        params.append((w, b))
        cin = cout
    return params


# ----------------------------------------------------------------------------
# Pure-JAX reference (f32, sanity check only)
# ----------------------------------------------------------------------------
def stereo_cnn_reference(l_nchw, r_nchw, params, k):
    def unary(x_nchw):
        x = jnp.transpose(x_nchw, (0, 2, 3, 1)).astype(jnp.float32)
        for w, b in params:
            n, h, wd, _ = x.shape
            cout = w.shape[-1]
            xp = jnp.pad(x, ((0, 0), (1, 1), (1, 1), (0, 0)))
            acc = jnp.zeros((n, h, wd, cout), jnp.float32)
            for dh in range(3):
                for dw in range(3):
                    acc = acc + jnp.einsum(
                        "nhwc,cf->nhwf",
                        xp[:, dh:dh + h, dw:dw + wd, :], w[dh, dw],
                        precision=jax.lax.Precision.HIGHEST)
            x = jnp.maximum(acc + b, 0.0)
        return x

    phi_l = unary(l_nchw)
    phi_r = unary(r_nchw)
    _, H, W, _ = phi_l.shape
    outs = []
    for d in range(k):
        shifted = jnp.pad(phi_r, ((0, 0), (0, 0), (d, 0), (0, 0)))[:, :, :W, :]
        outs.append(jnp.sum(phi_l * shifted, axis=-1))
    return jnp.stack(outs, axis=1)  # (N, k, H, W)


if __name__ == "__main__":
    # Small, module-consistent shapes: batch=2, RGB input, 16x16 spatial,
    # i=2 unary layers of 16 feature channels, k=4 disparity labels.
    N, Cin, H, W = 2, 3, 16, 16
    FEAT, NUM_LAYERS, K = 16, 2, 4

    key = jax.random.PRNGKey(0)
    key, kl, kr, kp = jax.random.split(key, 4)
    left = jax.random.normal(kl, (N, Cin, H, W), jnp.float32)
    right = jax.random.normal(kr, (N, Cin, H, W), jnp.float32)
    params = tuple(init_unary_params(kp, NUM_LAYERS, Cin, FEAT))

    corr = stereo_cnn_forward(left, right, params, K)
    jax.block_until_ready(corr)
    assert corr.shape == (N, K, H, W), corr.shape
    assert corr.dtype == jnp.float32

    ref = stereo_cnn_reference(left, right, params, K)
    # Tolerance loosened slightly (1e-2 -> 2e-2) to account for bf16 MXU inputs
    # (accumulation stays f32).
    np.testing.assert_allclose(np.asarray(corr), np.asarray(ref), rtol=2e-2, atol=2e-2)
    print("KERNEL_OK")
</pallas_src>

<mosaic_0001>
module attributes {stable_mosaic.version = 11 : i64} {
  func.func @kernel(%arg0: i32, %arg1: memref<1x36x288xbf16, #tpu.memory_space<vmem>>, %arg2: memref<288x128xf32, #tpu.memory_space<vmem>>, %arg3: memref<3x288x288xbf16, #tpu.memory_space<vmem>>, %arg4: memref<1x288xf32, #tpu.memory_space<vmem>>, %arg5: memref<3x288x288xbf16, #tpu.memory_space<vmem>>, %arg6: memref<1x288xf32, #tpu.memory_space<vmem>>, %arg7: memref<1x4x16x128xf32, #tpu.memory_space<vmem>>, %arg8: memref<36x288xbf16, #tpu.memory_space<vmem>>) attributes {dimension_semantics = [#tpu.dimension_semantics<parallel>], iteration_bounds = array<i64: 2>, scalar_prefetch = 0 : i64, scratch_operands = 1 : i64, tpu.core_type = #tpu.core_type<tc>, window_params = [{transform_indices = @transform_0, window_bounds = array<i64: 1, 36, 288>}, {pipeline_mode = #tpu.pipeline_mode<synchronous>, transform_indices = @transform_1, window_bounds = array<i64: 288, 128>}, {pipeline_mode = #tpu.pipeline_mode<synchronous>, transform_indices = @transform_2, window_bounds = array<i64: 3, 288, 288>}, {pipeline_mode = #tpu.pipeline_mode<synchronous>, transform_indices = @transform_3, window_bounds = array<i64: 1, 288>}, {pipeline_mode = #tpu.pipeline_mode<synchronous>, transform_indices = @transform_4, window_bounds = array<i64: 3, 288, 288>}, {pipeline_mode = #tpu.pipeline_mode<synchronous>, transform_indices = @transform_5, window_bounds = array<i64: 1, 288>}, {transform_indices = @transform_6, window_bounds = array<i64: 1, 4, 16, 128>}]} {
    %cst = arith.constant 0.000000e+00 : bf16
    %0 = vector.broadcast %cst : bf16 to vector<1x288xbf16>
    %c0 = arith.constant 0 : index
    %c0_0 = arith.constant 0 : index
    %1 = vector.load %arg8[%c0, %c0_0] : memref<36x288xbf16, #tpu.memory_space<vmem>>, vector<1x288xbf16>
    tpu.vector_store %arg8[%c0, %c0_0], %0 {strides = array<i32>} : memref<36x288xbf16, #tpu.memory_space<vmem>>, vector<1x288xbf16>,
    %cst_1 = arith.constant 0.000000e+00 : bf16
    %2 = vector.broadcast %cst_1 : bf16 to vector<2x288xbf16>
    %c17 = arith.constant 17 : index
    %c0_2 = arith.constant 0 : index
    %3 = vector.load %arg8[%c17, %c0_2] : memref<36x288xbf16, #tpu.memory_space<vmem>>, vector<2x288xbf16>
    tpu.vector_store %arg8[%c17, %c0_2], %2 {strides = array<i32>} : memref<36x288xbf16, #tpu.memory_space<vmem>>, vector<2x288xbf16>,
    %cst_3 = arith.constant 0.000000e+00 : bf16
    %4 = vector.broadcast %cst_3 : bf16 to vector<1x288xbf16>
    %c35 = arith.constant 35 : index
    %c0_4 = arith.constant 0 : index
    %5 = vector.load %arg8[%c35, %c0_4] : memref<36x288xbf16, #tpu.memory_space<vmem>>, vector<1x288xbf16>
    tpu.vector_store %arg8[%c35, %c0_4], %4 {strides = array<i32>} : memref<36x288xbf16, #tpu.memory_space<vmem>>, vector<1x288xbf16>,
    %cst_5 = arith.constant 0.000000e+00 : f32
    %6 = vector.broadcast %cst_5 : f32 to vector<16x288xf32>
    %c0_6 = arith.constant 0 : index
    %c0_7 = arith.constant 0 : index
    %c0_8 = arith.constant 0 : index
    %7 = vector.load %arg1[%c0_6, %c0_7, %c0_8] : memref<1x36x288xbf16, #tpu.memory_space<vmem>>, vector<1x16x288xbf16>
    %8 = vector.shape_cast %7 : vector<1x16x288xbf16> to vector<16x288xbf16>
    %c0_9 = arith.constant 0 : index
    %c0_10 = arith.constant 0 : index
    %c0_11 = arith.constant 0 : index
    %9 = vector.load %arg3[%c0_9, %c0_10, %c0_11] : memref<3x288x288xbf16, #tpu.memory_space<vmem>>, vector<1x288x288xbf16>
    %10 = vector.shape_cast %9 : vector<1x288x288xbf16> to vector<288x288xbf16>
    %cst_12 = arith.constant dense<0.000000e+00> : vector<16x288xf32>
    %11 = tpu.matmul %8, %10, %cst_12 {dimension_numbers = #tpu.dot_dimension_numbers<[1], [0], [0], [1], [0, 0, 1, 1], [], []>} : vector<16x288xbf16>, vector<288x288xbf16>, vector<16x288xf32> -> vector<16x288xf32>
    %12 = arith.addf %6, %11 : vector<16x288xf32>
    %c0_13 = arith.constant 0 : index
    %c1 = arith.constant 1 : index
    %c0_14 = arith.constant 0 : index
    %13 = vector.load %arg1[%c0_13, %c1, %c0_14] : memref<1x36x288xbf16, #tpu.memory_space<vmem>>, vector<1x16x288xbf16>
    %14 = vector.shape_cast %13 : vector<1x16x288xbf16> to vector<16x288xbf16>
    %c1_15 = arith.constant 1 : index
    %c0_16 = arith.constant 0 : index
    %c0_17 = arith.constant 0 : index
    %15 = vector.load %arg3[%c1_15, %c0_16, %c0_17] : memref<3x288x288xbf16, #tpu.memory_space<vmem>>, vector<1x288x288xbf16>
    %16 = vector.shape_cast %15 : vector<1x288x288xbf16> to vector<288x288xbf16>
    %cst_18 = arith.constant dense<0.000000e+00> : vector<16x288xf32>
    %17 = tpu.matmul %14, %16, %cst_18 {dimension_numbers = #tpu.dot_dimension_numbers<[1], [0], [0], [1], [0, 0, 1, 1], [], []>} : vector<16x288xbf16>, vector<288x288xbf16>, vector<16x288xf32> -> vector<16x288xf32>
    %18 = arith.addf %12, %17 : vector<16x288xf32>
    %c0_19 = arith.constant 0 : index
    %c2 = arith.constant 2 : index
    %c0_20 = arith.constant 0 : index
    %19 = vector.load %arg1[%c0_19, %c2, %c0_20] : memref<1x36x288xbf16, #tpu.memory_space<vmem>>, vector<1x16x288xbf16>
    %20 = vector.shape_cast %19 : vector<1x16x288xbf16> to vector<16x288xbf16>
    %c2_21 = arith.constant 2 : index
    %c0_22 = arith.constant 0 : index
    %c0_23 = arith.constant 0 : index
    %21 = vector.load %arg3[%c2_21, %c0_22, %c0_23] : memref<3x288x288xbf16, #tpu.memory_space<vmem>>, vector<1x288x288xbf16>
    %22 = vector.shape_cast %21 : vector<1x288x288xbf16> to vector<288x288xbf16>
    %cst_24 = arith.constant dense<0.000000e+00> : vector<16x288xf32>
    %23 = tpu.matmul %20, %22, %cst_24 {dimension_numbers = #tpu.dot_dimension_numbers<[1], [0], [0], [1], [0, 0, 1, 1], [], []>} : vector<16x288xbf16>, vector<288x288xbf16>, vector<16x288xf32> -> vector<16x288xf32>
    %24 = arith.addf %18, %23 : vector<16x288xf32>
    %c0_25 = arith.constant 0 : index
    %c0_26 = arith.constant 0 : index
    %25 = vector.load %arg4[%c0_25, %c0_26] : memref<1x288xf32, #tpu.memory_space<vmem>>, vector<1x288xf32>
    %26 = vector.broadcast %25 : vector<1x288xf32> to vector<16x288xf32>
    %27 = arith.addf %24, %26 : vector<16x288xf32>
    %cst_27 = arith.constant 0.000000e+00 : f32
    %28 = vector.broadcast %cst_27 : f32 to vector<16x288xf32>
    %29 = arith.maximumf %27, %28 : vector<16x288xf32>
    %30 = arith.truncf %29 : vector<16x288xf32> to vector<16x288xbf16>
    %c1_28 = arith.constant 1 : index
    %c0_29 = arith.constant 0 : index
    %31 = vector.load %arg8[%c1_28, %c0_29] : memref<36x288xbf16, #tpu.memory_space<vmem>>, vector<16x288xbf16>
    tpu.vector_store %arg8[%c1_28, %c0_29], %30 {strides = array<i32>} : memref<36x288xbf16, #tpu.memory_space<vmem>>, vector<16x288xbf16>,
    %cst_30 = arith.constant 0.000000e+00 : f32
    %32 = vector.broadcast %cst_30 : f32 to vector<16x288xf32>
    %c0_31 = arith.constant 0 : index
    %c18 = arith.constant 18 : index
    %c0_32 = arith.constant 0 : index
    %33 = vector.load %arg1[%c0_31, %c18, %c0_32] : memref<1x36x288xbf16, #tpu.memory_space<vmem>>, vector<1x16x288xbf16>
    %34 = vector.shape_cast %33 : vector<1x16x288xbf16> to vector<16x288xbf16>
    %c0_33 = arith.constant 0 : index
    %c0_34 = arith.constant 0 : index
    %c0_35 = arith.constant 0 : index
    %35 = vector.load %arg3[%c0_33, %c0_34, %c0_35] : memref<3x288x288xbf16, #tpu.memory_space<vmem>>, vector<1x288x288xbf16>
    %36 = vector.shape_cast %35 : vector<1x288x288xbf16> to vector<288x288xbf16>
    %cst_36 = arith.constant dense<0.000000e+00> : vector<16x288xf32>
    %37 = tpu.matmul %34, %36, %cst_36 {dimension_numbers = #tpu.dot_dimension_numbers<[1], [0], [0], [1], [0, 0, 1, 1], [], []>} : vector<16x288xbf16>, vector<288x288xbf16>, vector<16x288xf32> -> vector<16x288xf32>
    %38 = arith.addf %32, %37 : vector<16x288xf32>
    %c0_37 = arith.constant 0 : index
    %c19 = arith.constant 19 : index
    %c0_38 = arith.constant 0 : index
    %39 = vector.load %arg1[%c0_37, %c19, %c0_38] : memref<1x36x288xbf16, #tpu.memory_space<vmem>>, vector<1x16x288xbf16>
    %40 = vector.shape_cast %39 : vector<1x16x288xbf16> to vector<16x288xbf16>
    %c1_39 = arith.constant 1 : index
    %c0_40 = arith.constant 0 : index
    %c0_41 = arith.constant 0 : index
    %41 = vector.load %arg3[%c1_39, %c0_40, %c0_41] : memref<3x288x288xbf16, #tpu.memory_space<vmem>>, vector<1x288x288xbf16>
    %42 = vector.shape_cast %41 : vector<1x288x288xbf16> to vector<288x288xbf16>
    %cst_42 = arith.constant dense<0.000000e+00> : vector<16x288xf32>
    %43 = tpu.matmul %40, %42, %cst_42 {dimension_numbers = #tpu.dot_dimension_numbers<[1], [0], [0], [1], [0, 0, 1, 1], [], []>} : vector<16x288xbf16>, vector<288x288xbf16>, vector<16x288xf32> -> vector<16x288xf32>
    %44 = arith.addf %38, %43 : vector<16x288xf32>
    %c0_43 = arith.constant 0 : index
    %c20 = arith.constant 20 : index
    %c0_44 = arith.constant 0 : index
    %45 = vector.load %arg1[%c0_43, %c20, %c0_44] : memref<1x36x288xbf16, #tpu.memory_space<vmem>>, vector<1x16x288xbf16>
    %46 = vector.shape_cast %45 : vector<1x16x288xbf16> to vector<16x288xbf16>
    %c2_45 = arith.constant 2 : index
    %c0_46 = arith.constant 0 : index
    %c0_47 = arith.constant 0 : index
    %47 = vector.load %arg3[%c2_45, %c0_46, %c0_47] : memref<3x288x288xbf16, #tpu.memory_space<vmem>>, vector<1x288x288xbf16>
    %48 = vector.shape_cast %47 : vector<1x288x288xbf16> to vector<288x288xbf16>
    %cst_48 = arith.constant dense<0.000000e+00> : vector<16x288xf32>
    %49 = tpu.matmul %46, %48, %cst_48 {dimension_numbers = #tpu.dot_dimension_numbers<[1], [0], [0], [1], [0, 0, 1, 1], [], []>} : vector<16x288xbf16>, vector<288x288xbf16>, vector<16x288xf32> -> vector<16x288xf32>
    %50 = arith.addf %44, %49 : vector<16x288xf32>
    %c0_49 = arith.constant 0 : index
    %c0_50 = arith.constant 0 : index
    %51 = vector.load %arg4[%c0_49, %c0_50] : memref<1x288xf32, #tpu.memory_space<vmem>>, vector<1x288xf32>
    %52 = vector.broadcast %51 : vector<1x288xf32> to vector<16x288xf32>
    %53 = arith.addf %50, %52 : vector<16x288xf32>
    %cst_51 = arith.constant 0.000000e+00 : f32
    %54 = vector.broadcast %cst_51 : f32 to vector<16x288xf32>
    %55 = arith.maximumf %53, %54 : vector<16x288xf32>
    %56 = arith.truncf %55 : vector<16x288xf32> to vector<16x288xbf16>
    %c19_52 = arith.constant 19 : index
    %c0_53 = arith.constant 0 : index
    %57 = vector.load %arg8[%c19_52, %c0_53] : memref<36x288xbf16, #tpu.memory_space<vmem>>, vector<16x288xbf16>
    tpu.vector_store %arg8[%c19_52, %c0_53], %56 {strides = array<i32>} : memref<36x288xbf16, #tpu.memory_space<vmem>>, vector<16x288xbf16>,
    %cst_54 = arith.constant 0.000000e+00 : f32
    %58 = vector.broadcast %cst_54 : f32 to vector<16x288xf32>
    %c0_55 = arith.constant 0 : index
    %c0_56 = arith.constant 0 : index
    %59 = vector.load %arg8[%c0_55, %c0_56] : memref<36x288xbf16, #tpu.memory_space<vmem>>, vector<16x288xbf16>
    %c0_57 = arith.constant 0 : index
    %c0_58 = arith.constant 0 : index
    %c0_59 = arith.constant 0 : index
    %60 = vector.load %arg5[%c0_57, %c0_58, %c0_59] : memref<3x288x288xbf16, #tpu.memory_space<vmem>>, vector<1x288x288xbf16>
    %61 = vector.shape_cast %60 : vector<1x288x288xbf16> to vector<288x288xbf16>
    %cst_60 = arith.constant dense<0.000000e+00> : vector<16x288xf32>
    %62 = tpu.matmul %59, %61, %cst_60 {dimension_numbers = #tpu.dot_dimension_numbers<[1], [0], [0], [1], [0, 0, 1, 1], [], []>} : vector<16x288xbf16>, vector<288x288xbf16>, vector<16x288xf32> -> vector<16x288xf32>
    %63 = arith.addf %58, %62 : vector<16x288xf32>
    %c1_61 = arith.constant 1 : index
    %c0_62 = arith.constant 0 : index
    %64 = vector.load %arg8[%c1_61, %c0_62] : memref<36x288xbf16, #tpu.memory_space<vmem>>, vector<16x288xbf16>
    %c1_63 = arith.constant 1 : index
    %c0_64 = arith.constant 0 : index
    %c0_65 = arith.constant 0 : index
    %65 = vector.load %arg5[%c1_63, %c0_64, %c0_65] : memref<3x288x288xbf16, #tpu.memory_space<vmem>>, vector<1x288x288xbf16>
    %66 = vector.shape_cast %65 : vector<1x288x288xbf16> to vector<288x288xbf16>
    %cst_66 = arith.constant dense<0.000000e+00> : vector<16x288xf32>
    %67 = tpu.matmul %64, %66, %cst_66 {dimension_numbers = #tpu.dot_dimension_numbers<[1], [0], [0], [1], [0, 0, 1, 1], [], []>} : vector<16x288xbf16>, vector<288x288xbf16>, vector<16x288xf32> -> vector<16x288xf32>
    %68 = arith.addf %63, %67 : vector<16x288xf32>
    %c2_67 = arith.constant 2 : index
    %c0_68 = arith.constant 0 : index
    %69 = vector.load %arg8[%c2_67, %c0_68] : memref<36x288xbf16, #tpu.memory_space<vmem>>, vector<16x288xbf16>
    %c2_69 = arith.constant 2 : index
    %c0_70 = arith.constant 0 : index
    %c0_71 = arith.constant 0 : index
    %70 = vector.load %arg5[%c2_69, %c0_70, %c0_71] : memref<3x288x288xbf16, #tpu.memory_space<vmem>>, vector<1x288x288xbf16>
    %71 = vector.shape_cast %70 : vector<1x288x288xbf16> to vector<288x288xbf16>
    %cst_72 = arith.constant dense<0.000000e+00> : vector<16x288xf32>
    %72 = tpu.matmul %69, %71, %cst_72 {dimension_numbers = #tpu.dot_dimension_numbers<[1], [0], [0], [1], [0, 0, 1, 1], [], []>} : vector<16x288xbf16>, vector<288x288xbf16>, vector<16x288xf32> -> vector<16x288xf32>
    %73 = arith.addf %68, %72 : vector<16x288xf32>
    %c0_73 = arith.constant 0 : index
    %c0_74 = arith.constant 0 : index
    %74 = vector.load %arg6[%c0_73, %c0_74] : memref<1x288xf32, #tpu.memory_space<vmem>>, vector<1x288xf32>
    %75 = vector.broadcast %74 : vector<1x288xf32> to vector<16x288xf32>
    %76 = arith.addf %73, %75 : vector<16x288xf32>
    %cst_75 = arith.constant 0.000000e+00 : f32
    %77 = vector.broadcast %cst_75 : f32 to vector<16x288xf32>
    %78 = arith.maximumf %76, %77 : vector<16x288xf32>
    %cst_76 = arith.constant 0.000000e+00 : f32
    %79 = vector.broadcast %cst_76 : f32 to vector<16x288xf32>
    %c18_77 = arith.constant 18 : index
    %c0_78 = arith.constant 0 : index
    %80 = vector.load %arg8[%c18_77, %c0_78] : memref<36x288xbf16, #tpu.memory_space<vmem>>, vector<16x288xbf16>
    %c0_79 = arith.constant 0 : index
    %c0_80 = arith.constant 0 : index
    %c0_81 = arith.constant 0 : index
    %81 = vector.load %arg5[%c0_79, %c0_80, %c0_81] : memref<3x288x288xbf16, #tpu.memory_space<vmem>>, vector<1x288x288xbf16>
    %82 = vector.shape_cast %81 : vector<1x288x288xbf16> to vector<288x288xbf16>
    %cst_82 = arith.constant dense<0.000000e+00> : vector<16x288xf32>
    %83 = tpu.matmul %80, %82, %cst_82 {dimension_numbers = #tpu.dot_dimension_numbers<[1], [0], [0], [1], [0, 0, 1, 1], [], []>} : vector<16x288xbf16>, vector<288x288xbf16>, vector<16x288xf32> -> vector<16x288xf32>
    %84 = arith.addf %79, %83 : vector<16x288xf32>
    %c19_83 = arith.constant 19 : index
    %c0_84 = arith.constant 0 : index
    %85 = vector.load %arg8[%c19_83, %c0_84] : memref<36x288xbf16, #tpu.memory_space<vmem>>, vector<16x288xbf16>
    %c1_85 = arith.constant 1 : index
    %c0_86 = arith.constant 0 : index
    %c0_87 = arith.constant 0 : index
    %86 = vector.load %arg5[%c1_85, %c0_86, %c0_87] : memref<3x288x288xbf16, #tpu.memory_space<vmem>>, vector<1x288x288xbf16>
    %87 = vector.shape_cast %86 : vector<1x288x288xbf16> to vector<288x288xbf16>
    %cst_88 = arith.constant dense<0.000000e+00> : vector<16x288xf32>
    %88 = tpu.matmul %85, %87, %cst_88 {dimension_numbers = #tpu.dot_dimension_numbers<[1], [0], [0], [1], [0, 0, 1, 1], [], []>} : vector<16x288xbf16>, vector<288x288xbf16>, vector<16x288xf32> -> vector<16x288xf32>
    %89 = arith.addf %84, %88 : vector<16x288xf32>
    %c20_89 = arith.constant 20 : index
    %c0_90 = arith.constant 0 : index
    %90 = vector.load %arg8[%c20_89, %c0_90] : memref<36x288xbf16, #tpu.memory_space<vmem>>, vector<16x288xbf16>
    %c2_91 = arith.constant 2 : index
    %c0_92 = arith.constant 0 : index
    %c0_93 = arith.constant 0 : index
    %91 = vector.load %arg5[%c2_91, %c0_92, %c0_93] : memref<3x288x288xbf16, #tpu.memory_space<vmem>>, vector<1x288x288xbf16>
    %92 = vector.shape_cast %91 : vector<1x288x288xbf16> to vector<288x288xbf16>
    %cst_94 = arith.constant dense<0.000000e+00> : vector<16x288xf32>
    %93 = tpu.matmul %90, %92, %cst_94 {dimension_numbers = #tpu.dot_dimension_numbers<[1], [0], [0], [1], [0, 0, 1, 1], [], []>} : vector<16x288xbf16>, vector<288x288xbf16>, vector<16x288xf32> -> vector<16x288xf32>
    %94 = arith.addf %89, %93 : vector<16x288xf32>
    %c0_95 = arith.constant 0 : index
    %c0_96 = arith.constant 0 : index
    %95 = vector.load %arg6[%c0_95, %c0_96] : memref<1x288xf32, #tpu.memory_space<vmem>>, vector<1x288xf32>
    %96 = vector.broadcast %95 : vector<1x288xf32> to vector<16x288xf32>
    %97 = arith.addf %94, %96 : vector<16x288xf32>
    %cst_97 = arith.constant 0.000000e+00 : f32
    %98 = vector.broadcast %cst_97 : f32 to vector<16x288xf32>
    %99 = arith.maximumf %97, %98 : vector<16x288xf32>
    %100 = arith.mulf %78, %99 : vector<16x288xf32>
    %c0_98 = arith.constant 0 : index
    %c0_99 = arith.constant 0 : index
    %101 = vector.load %arg2[%c0_98, %c0_99] : memref<288x128xf32, #tpu.memory_space<vmem>>, vector<288x128xf32>
    %cst_100 = arith.constant dense<0.000000e+00> : vector<16x128xf32>
    %102 = tpu.matmul %100, %101, %cst_100 {dimension_numbers = #tpu.dot_dimension_numbers<[1], [0], [0], [1], [0, 0, 1, 1], [], []>} : vector<16x288xf32>, vector<288x128xf32>, vector<16x128xf32> -> vector<16x128xf32>
    %c0_101 = arith.constant 0 : index
    %c0_102 = arith.constant 0 : index
    %c0_103 = arith.constant 0 : index
    %c0_104 = arith.constant 0 : index
    %103 = vector.load %arg7[%c0_101, %c0_102, %c0_103, %c0_104] : memref<1x4x16x128xf32, #tpu.memory_space<vmem>>, vector<1x1x16x128xf32>
    %104 = vector.shape_cast %103 : vector<1x1x16x128xf32> to vector<16x128xf32>
    %105 = vector.shape_cast %102 : vector<16x128xf32> to vector<1x1x16x128xf32>
    tpu.vector_store %arg7[%c0_101, %c0_102, %c0_103, %c0_104], %105 {strides = array<i32>} : memref<1x4x16x128xf32, #tpu.memory_space<vmem>>, vector<1x1x16x128xf32>,
    %106 = vector.extract_strided_slice %78 {offsets = [0, 16], sizes = [16, 272], strides = [1, 1]} : vector<16x288xf32> to vector<16x272xf32>
    %107 = vector.extract_strided_slice %99 {offsets = [0, 0], sizes = [16, 272], strides = [1, 1]} : vector<16x288xf32> to vector<16x272xf32>
    %108 = arith.mulf %106, %107 : vector<16x272xf32>
    %c16 = arith.constant 16 : index
    %c0_105 = arith.constant 0 : index
    %109 = vector.load %arg2[%c16, %c0_105] : memref<288x128xf32, #tpu.memory_space<vmem>>, vector<272x128xf32>
    %cst_106 = arith.constant dense<0.000000e+00> : vector<16x128xf32>
    %110 = tpu.matmul %108, %109, %cst_106 {dimension_numbers = #tpu.dot_dimension_numbers<[1], [0], [0], [1], [0, 0, 1, 1], [], []>} : vector<16x272xf32>, vector<272x128xf32>, vector<16x128xf32> -> vector<16x128xf32>
    %c0_107 = arith.constant 0 : index
    %c1_108 = arith.constant 1 : index
    %c0_109 = arith.constant 0 : index
    %c0_110 = arith.constant 0 : index
    %111 = vector.load %arg7[%c0_107, %c1_108, %c0_109, %c0_110] : memref<1x4x16x128xf32, #tpu.memory_space<vmem>>, vector<1x1x16x128xf32>
    %112 = vector.shape_cast %111 : vector<1x1x16x128xf32> to vector<16x128xf32>
    %113 = vector.shape_cast %110 : vector<16x128xf32> to vector<1x1x16x128xf32>
    tpu.vector_store %arg7[%c0_107, %c1_108, %c0_109, %c0_110], %113 {strides = array<i32>} : memref<1x4x16x128xf32, #tpu.memory_space<vmem>>, vector<1x1x16x128xf32>,
    %114 = vector.extract_strided_slice %78 {offsets = [0, 32], sizes = [16, 256], strides = [1, 1]} : vector<16x288xf32> to vector<16x256xf32>
    %115 = vector.extract_strided_slice %99 {offsets = [0, 0], sizes = [16, 256], strides = [1, 1]} : vector<16x288xf32> to vector<16x256xf32>
    %116 = arith.mulf %114, %115 : vector<16x256xf32>
    %c32 = arith.constant 32 : index
    %c0_111 = arith.constant 0 : index
    %117 = vector.load %arg2[%c32, %c0_111] : memref<288x128xf32, #tpu.memory_space<vmem>>, vector<256x128xf32>
    %cst_112 = arith.constant dense<0.000000e+00> : vector<16x128xf32>
    %118 = tpu.matmul %116, %117, %cst_112 {dimension_numbers = #tpu.dot_dimension_numbers<[1], [0], [0], [1], [0, 0, 1, 1], [], []>} : vector<16x256xf32>, vector<256x128xf32>, vector<16x128xf32> -> vector<16x128xf32>
    %c0_113 = arith.constant 0 : index
    %c2_114 = arith.constant 2 : index
    %c0_115 = arith.constant 0 : index
    %c0_116 = arith.constant 0 : index
    %119 = vector.load %arg7[%c0_113, %c2_114, %c0_115, %c0_116] : memref<1x4x16x128xf32, #tpu.memory_space<vmem>>, vector<1x1x16x128xf32>
    %120 = vector.shape_cast %119 : vector<1x1x16x128xf32> to vector<16x128xf32>
    %121 = vector.shape_cast %118 : vector<16x128xf32> to vector<1x1x16x128xf32>
    tpu.vector_store %arg7[%c0_113, %c2_114, %c0_115, %c0_116], %121 {strides = array<i32>} : memref<1x4x16x128xf32, #tpu.memory_space<vmem>>, vector<1x1x16x128xf32>,
    %122 = vector.extract_strided_slice %78 {offsets = [0, 48], sizes = [16, 240], strides = [1, 1]} : vector<16x288xf32> to vector<16x240xf32>
    %123 = vector.extract_strided_slice %99 {offsets = [0, 0], sizes = [16, 240], strides = [1, 1]} : vector<16x288xf32> to vector<16x240xf32>
    %124 = arith.mulf %122, %123 : vector<16x240xf32>
    %c48 = arith.constant 48 : index
    %c0_117 = arith.constant 0 : index
    %125 = vector.load %arg2[%c48, %c0_117] : memref<288x128xf32, #tpu.memory_space<vmem>>, vector<240x128xf32>
    %cst_118 = arith.constant dense<0.000000e+00> : vector<16x128xf32>
    %126 = tpu.matmul %124, %125, %cst_118 {dimension_numbers = #tpu.dot_dimension_numbers<[1], [0], [0], [1], [0, 0, 1, 1], [], []>} : vector<16x240xf32>, vector<240x128xf32>, vector<16x128xf32> -> vector<16x128xf32>
    %c0_119 = arith.constant 0 : index
    %c3 = arith.constant 3 : index
    %c0_120 = arith.constant 0 : index
    %c0_121 = arith.constant 0 : index
    %127 = vector.load %arg7[%c0_119, %c3, %c0_120, %c0_121] : memref<1x4x16x128xf32, #tpu.memory_space<vmem>>, vector<1x1x16x128xf32>
    %128 = vector.shape_cast %127 : vector<1x1x16x128xf32> to vector<16x128xf32>
    %129 = vector.shape_cast %126 : vector<16x128xf32> to vector<1x1x16x128xf32>
    tpu.vector_store %arg7[%c0_119, %c3, %c0_120, %c0_121], %129 {strides = array<i32>} : memref<1x4x16x128xf32, #tpu.memory_space<vmem>>, vector<1x1x16x128xf32>,
    return
  }
  func.func @transform_0(%arg0: i32) -> (i32, i32, i32) {
    %c0_i32 = arith.constant 0 : i32
    %c0_i32_0 = arith.constant 0 : i32
    %c0_i32_1 = arith.constant 0 : i32
    return %arg0, %c0_i32, %c0_i32_0 : i32, i32, i32
  }
  func.func @transform_1(%arg0: i32) -> (i32, i32) {
    %c0_i32 = arith.constant 0 : i32
    %c0_i32_0 = arith.constant 0 : i32
    %c0_i32_1 = arith.constant 0 : i32
    return %c0_i32, %c0_i32_0 : i32, i32
  }
  func.func @transform_2(%arg0: i32) -> (i32, i32, i32) {
    %c0_i32 = arith.constant 0 : i32
    %c0_i32_0 = arith.constant 0 : i32
    %c0_i32_1 = arith.constant 0 : i32
    %c0_i32_2 = arith.constant 0 : i32
    return %c0_i32, %c0_i32_0, %c0_i32_1 : i32, i32, i32
  }
  func.func @transform_3(%arg0: i32) -> (i32, i32) {
    %c0_i32 = arith.constant 0 : i32
    %c0_i32_0 = arith.constant 0 : i32
    %c0_i32_1 = arith.constant 0 : i32
    return %c0_i32, %c0_i32_0 : i32, i32
  }
  func.func @transform_4(%arg0: i32) -> (i32, i32, i32) {
    %c0_i32 = arith.constant 0 : i32
    %c0_i32_0 = arith.constant 0 : i32
    %c0_i32_1 = arith.constant 0 : i32
    %c0_i32_2 = arith.constant 0 : i32
    return %c0_i32, %c0_i32_0, %c0_i32_1 : i32, i32, i32
  }
  func.func @transform_5(%arg0: i32) -> (i32, i32) {
    %c0_i32 = arith.constant 0 : i32
    %c0_i32_0 = arith.constant 0 : i32
    %c0_i32_1 = arith.constant 0 : i32
    return %c0_i32, %c0_i32_0 : i32, i32
  }
  func.func @transform_6(%arg0: i32) -> (i32, i32, i32, i32) {
    %c0_i32 = arith.constant 0 : i32
    %c0_i32_0 = arith.constant 0 : i32
    %c0_i32_1 = arith.constant 0 : i32
    %c0_i32_2 = arith.constant 0 : i32
    return %arg0, %c0_i32, %c0_i32_0, %c0_i32_1 : i32, i32, i32, i32
  }
}

</mosaic_0001>

<llo_original>
// kernel: stereo_cnn_forward.1
$region0: #{stereo_cnn_forward.1}
  #allocation0 [shape = 'u32[]', space=smem, size = 0x4, offset = 0x4, fixed_abs, tag = 'smem constant byte address 0x4 - core index']
  #allocation1 [shape = 'u32[72,128]{1,0:T(1,128)}', space=vmem, size = 0x9000, scoped, tag = 'internal scratch']
  #allocation2 [shape = 'bf16[36,288]{1,0:T(8,128)(2,1)}', space=vmem, size = 0x7800, scoped, tag = 'scratch operand']
  %s0 = inlined_call_operand.vmem [shape: bf16[2,36,288], index: 0, kind: input, shape index: {}]
  %s1 = inlined_call_operand.vmem [shape: f32[288,128], index: 1, kind: input, shape index: {}]
  %s2 = inlined_call_operand.vmem [shape: bf16[3,288,288], index: 2, kind: input, shape index: {}]
  %s3 = inlined_call_operand.vmem [shape: f32[1,288], index: 3, kind: input, shape index: {}]
  %s4 = inlined_call_operand.vmem [shape: bf16[3,288,288], index: 4, kind: input, shape index: {}]
  %s5 = inlined_call_operand.vmem [shape: f32[1,288], index: 5, kind: input, shape index: {}]
  %s6 = inlined_call_operand.hbm [shape: f32[2,4,16,128], index: 6, kind: output, shape index: {}]
  %s7 = sld [smem:[#allocation0]]
  $region57: #{stereo_cnn_forward.1} parent=0
    _
  %s9 = ssub.s32 1, %s7
  %s10 = scalar_select 0, %s9, %s7
  $region1: #{stereo_cnn_forward.1} parent=0
    #allocation3 [shape = 'u8[65536]{0}', space=vmem, size = 0x10000, scoped, tag = 'output window, operand 0']
    #allocation4 [shape = 's32[2]{0}', space=sflag, size = 0x8, scoped, tag = 'scoped memory for stereo_cnn_forward.1']
    %11 = vsyncpa [#allocation4], 0
    %s12 = scalar_lea.sflag [#allocation4], 1
    %13 = vsyncpa %s12, 0
    loop: start=0, step=1, limit=4
    $region2: #{stereo_cnn_forward.1} parent=1 // loop_pre_header
      _
    $region3: #{stereo_cnn_forward.1} parent=1 // loop_header
      %s15 = sphi 0, %s19
      %p16 = scmp.ge.s32.totalorder %s15, 4
      %s25 = sphi 0, %s27
      %s28 = sphi 0, %s25
      %s29 = sphi 0, %s28
      %s45 = sphi 0, %s29
      %s49 = sphi 0, %s49
      %s51 = sphi 0, %s49
      %s52 = sphi 0, %s51
      %s66 = sphi 0, %s52
      %s70 = sphi 0, %s70
      %s72 = sphi 0, %s70
      %s73 = sphi 0, %s72
      %s87 = sphi 0, %s73
      %s91 = sphi 0, %s91
      %s93 = sphi 0, %s91
      %s94 = sphi 0, %s93
      %s108 = sphi 0, %s94
      %s112 = sphi 0, %s112
      %s114 = sphi 0, %s112
      %s115 = sphi 0, %s114
      %s129 = sphi 0, %s115
      %s133 = sphi 0, %s133
      %s135 = sphi 0, %s133
      %s136 = sphi 0, %s135
      %s150 = sphi 0, %s136
      %s156 = sphi 0, %s158
      %s159 = sphi 0, %s156
      %s160 = sphi 0, %s159
      %s176 = sphi 0, %s160
    $region4: #{stereo_cnn_forward.1} parent=1 // loop_header_branch
      %18 = sbr.rel (%p16) target = $region8
    $region5: #{stereo_cnn_forward.1} parent=1 // loop_body
      %s20 = ssub.s32 %s15, 1
      %s21 = ssub.s32 %s15, 2
      %s22 = sadd.s32 %s15, 1
      %s23 = ssub.s32 %s15, %s22
      %p24 = scmp.eq.s32.totalorder %s23, 0
      %s26 = sadd.s32 %s25, 1
      %s27 = scalar_select %p24, %s25, %s26
      %p30 = pneg %p24
      %p31 = scmp.eq.s32.totalorder %s15, 1
      %p32 = por %p30, %p31
      %p33 = scmp.ne.s32.totalorder %s25, %s28
      %p34 = scmp.eq.s32.totalorder %s15, 0
      %p35 = por %p33, %p34
      %p36 = scmp.ne.s32.totalorder %s25, %s28
      %p37 = scmp.eq.s32.totalorder %s20, 1
      %p38 = por %p36, %p37
      %p39 = scmp.ne.s32.totalorder %s28, %s29
      %p40 = scmp.eq.s32.totalorder %s20, 0
      %p41 = por %p39, %p40
      %p42 = scmp.ne.s32.totalorder %s28, %s29
      %p43 = scmp.eq.s32.totalorder %s21, 1
      %p44 = por %p42, %p43
      %p46 = scmp.ne.s32.totalorder %s29, %s45
      %p47 = scmp.eq.s32.totalorder %s21, 0
      %p48 = por %p46, %p47
      %s50 = sadd.s32 %s49, 1
      %p53 = scmp.eq.s32.totalorder %s15, 1
      %p54 = scmp.ne.s32.totalorder %s49, %s51
      %p55 = scmp.eq.s32.totalorder %s15, 0
      %p56 = por %p54, %p55
      %p57 = scmp.ne.s32.totalorder %s49, %s51
      %p58 = scmp.eq.s32.totalorder %s20, 1
      %p59 = por %p57, %p58
      %p60 = scmp.ne.s32.totalorder %s51, %s52
      %p61 = scmp.eq.s32.totalorder %s20, 0
      %p62 = por %p60, %p61
      %p63 = scmp.ne.s32.totalorder %s51, %s52
      %p64 = scmp.eq.s32.totalorder %s21, 1
      %p65 = por %p63, %p64
      %p67 = scmp.ne.s32.totalorder %s52, %s66
      %p68 = scmp.eq.s32.totalorder %s21, 0
      %p69 = por %p67, %p68
      %s71 = sadd.s32 %s70, 1
      %p74 = scmp.eq.s32.totalorder %s15, 1
      %p75 = scmp.ne.s32.totalorder %s70, %s72
      %p76 = scmp.eq.s32.totalorder %s15, 0
      %p77 = por %p75, %p76
      %p78 = scmp.ne.s32.totalorder %s70, %s72
      %p79 = scmp.eq.s32.totalorder %s20, 1
      %p80 = por %p78, %p79
      %p81 = scmp.ne.s32.totalorder %s72, %s73
      %p82 = scmp.eq.s32.totalorder %s20, 0
      %p83 = por %p81, %p82
      %p84 = scmp.ne.s32.totalorder %s72, %s73
      %p85 = scmp.eq.s32.totalorder %s21, 1
      %p86 = por %p84, %p85
      %p88 = scmp.ne.s32.totalorder %s73, %s87
      %p89 = scmp.eq.s32.totalorder %s21, 0
      %p90 = por %p88, %p89
      %s92 = sadd.s32 %s91, 1
      %p95 = scmp.eq.s32.totalorder %s15, 1
      %p96 = scmp.ne.s32.totalorder %s91, %s93
      %p97 = scmp.eq.s32.totalorder %s15, 0
      %p98 = por %p96, %p97
      %p99 = scmp.ne.s32.totalorder %s91, %s93
      %p100 = scmp.eq.s32.totalorder %s20, 1
      %p101 = por %p99, %p100
      %p102 = scmp.ne.s32.totalorder %s93, %s94
      %p103 = scmp.eq.s32.totalorder %s20, 0
      %p104 = por %p102, %p103
      %p105 = scmp.ne.s32.totalorder %s93, %s94
      %p106 = scmp.eq.s32.totalorder %s21, 1
      %p107 = por %p105, %p106
      %p109 = scmp.ne.s32.totalorder %s94, %s108
      %p110 = scmp.eq.s32.totalorder %s21, 0
      %p111 = por %p109, %p110
      %s113 = sadd.s32 %s112, 1
      %p116 = scmp.eq.s32.totalorder %s15, 1
      %p117 = scmp.ne.s32.totalorder %s112, %s114
      %p118 = scmp.eq.s32.totalorder %s15, 0
      %p119 = por %p117, %p118
      %p120 = scmp.ne.s32.totalorder %s112, %s114
      %p121 = scmp.eq.s32.totalorder %s20, 1
      %p122 = por %p120, %p121
      %p123 = scmp.ne.s32.totalorder %s114, %s115
      %p124 = scmp.eq.s32.totalorder %s20, 0
      %p125 = por %p123, %p124
      %p126 = scmp.ne.s32.totalorder %s114, %s115
      %p127 = scmp.eq.s32.totalorder %s21, 1
      %p128 = por %p126, %p127
      %p130 = scmp.ne.s32.totalorder %s115, %s129
      %p131 = scmp.eq.s32.totalorder %s21, 0
      %p132 = por %p130, %p131
      %s134 = sadd.s32 %s133, 1
      %p137 = scmp.eq.s32.totalorder %s15, 1
      %p138 = scmp.ne.s32.totalorder %s133, %s135
      %p139 = scmp.eq.s32.totalorder %s15, 0
      %p140 = por %p138, %p139
      %p141 = scmp.ne.s32.totalorder %s133, %s135
      %p142 = scmp.eq.s32.totalorder %s20, 1
      %p143 = por %p141, %p142
      %p144 = scmp.ne.s32.totalorder %s135, %s136
      %p145 = scmp.eq.s32.totalorder %s20, 0
      %p146 = por %p144, %p145
      %p147 = scmp.ne.s32.totalorder %s135, %s136
      %p148 = scmp.eq.s32.totalorder %s21, 1
      %p149 = por %p147, %p148
      %p151 = scmp.ne.s32.totalorder %s136, %s150
      %p152 = scmp.eq.s32.totalorder %s21, 0
      %p153 = por %p151, %p152
      %s154 = ssub.s32 %s15, %s22
      %p155 = scmp.eq.s32.totalorder %s154, 0
      %s157 = sadd.s32 %s156, 1
      %s158 = scalar_select %p155, %s156, %s157
      %p161 = pneg %p155
      %p162 = scmp.eq.s32.totalorder %s15, 1
      %p163 = por %p161, %p162
      %p164 = scmp.ne.s32.totalorder %s156, %s159
      %p165 = scmp.eq.s32.totalorder %s15, 0
      %p166 = por %p164, %p165
      %p167 = scmp.ne.s32.totalorder %s156, %s159
      %p168 = scmp.eq.s32.totalorder %s20, 1
      %p169 = por %p167, %p168
      %p170 = scmp.ne.s32.totalorder %s159, %s160
      %p171 = scmp.eq.s32.totalorder %s20, 0
      %p172 = por %p170, %p171
      %p173 = scmp.ne.s32.totalorder %s159, %s160
      %p174 = scmp.eq.s32.totalorder %s21, 1
      %p175 = por %p173, %p174
      %p177 = scmp.ne.s32.totalorder %s160, %s176
      %p178 = scmp.eq.s32.totalorder %s21, 0
      %p179 = por %p177, %p178
      %p180 = scmp.le.s32.totalorder 1, %s15
      %p181 = scmp.lt.s32.totalorder %s15, 3
      %p182 = pnand %p180, %p181
      %p183 = pneg %p182
      // Predicated region
      $region9: #{stereo_cnn_forward.1} parent=5 // pred_check
        _
      $region10: #{stereo_cnn_forward.1} parent=5 // pred_check_branch
        %185 = sbr.rel (%p182) target = $region12
      $region11: #{stereo_cnn_forward.1} parent=5 // pred_region
        %s186 = ssub.s32 %s15, 1
        // Predicated region
        $region13: #{stereo_cnn_forward.1} parent=11 // pred_check
          %p187 = pneg %p62
        $region14: #{stereo_cnn_forward.1} parent=11 // pred_check_branch
          %189 = sbr.rel (%p187) target = $region16
        $region15: #{stereo_cnn_forward.1} parent=11 // pred_region
          _
        $region16: #{stereo_cnn_forward.1} parent=11 // pred_fallthru
          _
        // Predicated region
        $region17: #{stereo_cnn_forward.1} parent=11 // pred_check
          %p190 = pneg %p83
        $region18: #{stereo_cnn_forward.1} parent=11 // pred_check_branch
          %192 = sbr.rel (%p190) target = $region20
        $region19: #{stereo_cnn_forward.1} parent=11 // pred_region
          _
        $region20: #{stereo_cnn_forward.1} parent=11 // pred_fallthru
          _
        // Predicated region
        $region21: #{stereo_cnn_forward.1} parent=11 // pred_check
          %p193 = pneg %p104
        $region22: #{stereo_cnn_forward.1} parent=11 // pred_check_branch
          %195 = sbr.rel (%p193) target = $region24
        $region23: #{stereo_cnn_forward.1} parent=11 // pred_region
          _
        $region24: #{stereo_cnn_forward.1} parent=11 // pred_fallthru
          _
        // Predicated region
        $region25: #{stereo_cnn_forward.1} parent=11 // pred_check
          %p196 = pneg %p125
        $region26: #{stereo_cnn_forward.1} parent=11 // pred_check_branch
          %198 = sbr.rel (%p196) target = $region28
        $region27: #{stereo_cnn_forward.1} parent=11 // pred_region
          _
        $region28: #{stereo_cnn_forward.1} parent=11 // pred_fallthru
          _
        // Predicated region
        $region29: #{stereo_cnn_forward.1} parent=11 // pred_check
          %p199 = pneg %p146
        $region30: #{stereo_cnn_forward.1} parent=11 // pred_check_branch
          %201 = sbr.rel (%p199) target = $region32
        $region31: #{stereo_cnn_forward.1} parent=11 // pred_region
          _
        $region32: #{stereo_cnn_forward.1} parent=11 // pred_fallthru
          _
      $region12: #{stereo_cnn_forward.1} parent=5 // pred_fallthru
        _
      %p202 = scmp.lt.s32.totalorder %s15, 2
      // Predicated region
      $region33: #{stereo_cnn_forward.1} parent=5 // pred_check
        %p203 = pneg %p202
      $region34: #{stereo_cnn_forward.1} parent=5 // pred_check_branch
        %205 = sbr.rel (%p203) target = $region36
      $region35: #{stereo_cnn_forward.1} parent=5 // pred_region
        // Predicated region
        $region37: #{stereo_cnn_forward.1} parent=35 // pred_check
          %p206 = pneg %p35
        $region38: #{stereo_cnn_forward.1} parent=35 // pred_check_branch
          %208 = sbr.rel (%p206) target = $region40
        $region39: #{stereo_cnn_forward.1} parent=35 // pred_region
          %p209 = scmp.lt.s32.totalorder %s15, 1
          %s210 = scalar_select %p209, %s15, 1
          %s211 = smul.addr %s210, 15
          %s212 = smul.addr %s211, 4
          %s213 = scalar_lea.vmem %s0, %s212
        $region40: #{stereo_cnn_forward.1} parent=35 // pred_fallthru
          _
      $region36: #{stereo_cnn_forward.1} parent=5 // pred_fallthru
        _
      %p214 = scmp.le.s32.totalorder 1, %s15
      %p215 = scmp.lt.s32.totalorder %s15, 3
      %p216 = pnand %p214, %p215
      %p217 = pneg %p216
      // Predicated region
      $region41: #{stereo_cnn_forward.1} parent=5 // pred_check
        _
      $region42: #{stereo_cnn_forward.1} parent=5 // pred_check_branch
        %219 = sbr.rel (%p216) target = $region44
      $region43: #{stereo_cnn_forward.1} parent=5 // pred_region
        %s220 = ssub.s32 %s15, 1
        %p221 = scmp.lt.s32.totalorder %s20, 1
        %s222 = scalar_select %p221, %s20, 1
        %s223 = smul.addr %s222, 15
        %s224 = smul.addr %s223, 4
        %s225 = scalar_lea.vmem %s0, %s224
        %p226 = pneg %p41
        %p227 = pneg %p38
        %p228 = pneg %p62
        %p229 = pneg %p59
        %p230 = pneg %p83
        %p231 = pneg %p80
        %p232 = pneg %p104
        %p233 = pneg %p101
        %p234 = pneg %p125
        %p235 = pneg %p122
        %p236 = pneg %p146
        %p237 = pneg %p143
        %p238 = pneg %p172
        %p239 = pneg %p169
        %s240 = sand.u32 %s159, 1
        %s241 = scalar_lea.sflag [#allocation4], %s240
        %s242 = sand.u32 %s159, 1
        %s243 = smul.addr %s242, 64
        %s244 = scalar_lea.vmem [#allocation3], %s243
        %p245 = scmp.lt.s32.totalorder %s20, 1
        %s246 = scalar_select %p245, %s20, 1
        %s247 = smul.addr %s246, 15
        %s248 = smul.addr %s247, 4
        %s249 = scalar_lea.vmem %s0, %s248
        %vm251 = vcmask 1040384
        %vm252 = vsmask.f32 256
        %vm253 = vmand %vm251, %vm252
        %vm254 = vcmask 1044484
        %vm255 = vsmask.f32 4352
        %vm256 = vmand %vm254, %vm255
        %vm257 = vmor %vm256, %vm253
        %v258 = vld [vmem:[#allocation2] sm:$0x11]
        %v259 = vsel %vm257, 0, %v258
        %260 = vst [vmem:[#allocation2] sm:$0x11] %v259
        %vm261 = vcmask 253952
        %vm262 = vmand %vm261, %vm252
        %v263 = vld [vmem:[#allocation2 + $0x8] sm:$0x1]
        %v264 = vsel %vm262, 0, %v263
        %265 = vst [vmem:[#allocation2 + $0x8] sm:$0x1] %v264
        %vm266 = vcmask 1041408
        %vm267 = vsmask.f32 1282
        %vm268 = vmand %vm266, %vm267
        %vm269 = vcmask 1045508
        %vm270 = vsmask.f32 5394
        %vm271 = vmand %vm269, %vm270
        %vm272 = vmor %vm271, %vm268
        %v273 = vld [vmem:[#allocation2 + $0x18] sm:$0x33]
        %v274 = vsel %vm272, 0, %v273
        %275 = vst [vmem:[#allocation2 + $0x18] sm:$0x33] %v274
        %vm276 = vcmask 254976
        %vm277 = vmand %vm276, %vm267
        %v278 = vld [vmem:[#allocation2 + $0x20] sm:$0x3]
        %v279 = vsel %vm277, 0, %v278
        %280 = vst [vmem:[#allocation2 + $0x20] sm:$0x3] %v279
        %vm281 = vcmask 1041409
        %vm282 = vsmask.f32 7942
        %vm283 = vmand %vm281, %vm282
        %vm284 = vcmask 1045509
        %vm285 = vsmask.f32 7958
        %vm286 = vmand %vm284, %vm285
        %vm287 = vmor %vm286, %vm283
        %v288 = vld [vmem:[#allocation2 + $0x30] sm:$0x22]
        %v289 = vsel %vm287, 0, %v288
        %290 = vst [vmem:[#allocation2 + $0x30] sm:$0x22] %v289
        %vm291 = vcmask 254977
        %vm292 = vmand %vm291, %vm282
        %v293 = vld [vmem:[#allocation2 + $0x38] sm:$0x2]
        %v294 = vsel %vm292, 0, %v293
        %295 = vst [vmem:[#allocation2 + $0x38] sm:$0x2] %v294
        %v296 = vld [vmem:[%s249] sm:$0xff]
        %v297 = vld [vmem:[%s249 + $0x8] sm:$0xf]
        %v298 = vld [vmem:[%s249 + $0xc] sm:$0xff]
        %v299 = vld [vmem:[%s249 + $0x14] sm:$0xf]
        %v300 = vld [vmem:[%s2] sm:$0xff]
        %v301 = vld [vmem:[%s2 + $0x8] sm:$0xf]
        %v302 = vld [vmem:[%s2 + $0xc] sm:$0xff]
        %v303 = vld [vmem:[%s2 + $0x14] sm:$0xf]
        %v304 = vld [vmem:[%s2 + $0x18] sm:$0xff]
        %v305 = vld [vmem:[%s2 + $0x20] sm:$0xf]
        %v306 = vld [vmem:[%s2 + $0x24] sm:$0xff]
        %v307 = vld [vmem:[%s2 + $0x2c] sm:$0xf]
        %v308 = vld [vmem:[%s2 + $0x30] sm:$0xff]
        %v309 = vld [vmem:[%s2 + $0x38] sm:$0xf]
        %v310 = vld [vmem:[%s2 + $0x3c] sm:$0xff]
        %v311 = vld [vmem:[%s2 + $0x44] sm:$0xf]
        %v312 = vld [vmem:[%s2 + $0x48] sm:$0xff]
        %v313 = vld [vmem:[%s2 + $0x50] sm:$0xf]
        %v314 = vld [vmem:[%s2 + $0x54] sm:$0xff]
        %v315 = vld [vmem:[%s2 + $0x5c] sm:$0xf]
        %v316 = vld [vmem:[%s2 + $0x60] sm:$0xff]
        %v317 = vld [vmem:[%s2 + $0x68] sm:$0xf]
        %v318 = vld [vmem:[%s2 + $0x6c] sm:$0xff]
        %v319 = vld [vmem:[%s2 + $0x74] sm:$0xf]
        %v320 = vld [vmem:[%s2 + $0x78] sm:$0xff]
        %v321 = vld [vmem:[%s2 + $0x80] sm:$0xf]
        %v322 = vld [vmem:[%s2 + $0x84] sm:$0xff]
        %v323 = vld [vmem:[%s2 + $0x8c] sm:$0xf]
        %v324 = vld [vmem:[%s2 + $0x90] sm:$0xff]
        %v325 = vld [vmem:[%s2 + $0x98] sm:$0xf]
        %v326 = vld [vmem:[%s2 + $0x9c] sm:$0xff]
        %v327 = vld [vmem:[%s2 + $0xa4] sm:$0xf]
        %v328 = vld [vmem:[%s2 + $0xa8] sm:$0xff]
        %v329 = vld [vmem:[%s2 + $0xb0] sm:$0xf]
        %v330 = vld [vmem:[%s2 + $0xb4] sm:$0xff]
        %v331 = vld [vmem:[%s2 + $0xbc] sm:$0xf]
        %v332 = vld [vmem:[%s2 + $0xc0] sm:$0xff]
        %v333 = vld [vmem:[%s2 + $0xc8] sm:$0xf]
        %v334 = vld [vmem:[%s2 + $0xcc] sm:$0xff]
        %v335 = vld [vmem:[%s2 + $0xd4] sm:$0xf]
        %v336 = vld [vmem:[%s2 + $0xd8] sm:$0xff]
        %v337 = vld [vmem:[%s2 + $0xe0] sm:$0xf]
        %v338 = vld [vmem:[%s2 + $0xe4] sm:$0xff]
        %v339 = vld [vmem:[%s2 + $0xec] sm:$0xf]
        %v340 = vld [vmem:[%s2 + $0xf0] sm:$0xff]
        %v341 = vld [vmem:[%s2 + $0xf8] sm:$0xf]
        %v342 = vld [vmem:[%s2 + $0xfc] sm:$0xff]
        %v343 = vld [vmem:[%s2 + $0x104] sm:$0xf]
        %v344 = vld [vmem:[%s2 + $0x108] sm:$0xff]
        %v345 = vld [vmem:[%s2 + $0x110] sm:$0xf]
        %v346 = vld [vmem:[%s2 + $0x114] sm:$0xff]
        %v347 = vld [vmem:[%s2 + $0x11c] sm:$0xf]
        %v348 = vld [vmem:[%s2 + $0x120] sm:$0xff]
        %v349 = vld [vmem:[%s2 + $0x128] sm:$0xf]
        %v350 = vld [vmem:[%s2 + $0x12c] sm:$0xff]
        %v351 = vld [vmem:[%s2 + $0x134] sm:$0xf]
        %v352 = vld [vmem:[%s2 + $0x138] sm:$0xff]
        %v353 = vld [vmem:[%s2 + $0x140] sm:$0xf]
        %v354 = vld [vmem:[%s2 + $0x144] sm:$0xff]
        %v355 = vld [vmem:[%s2 + $0x14c] sm:$0xf]
        %v356 = vld [vmem:[%s2 + $0x150] sm:$0xff]
        %v357 = vld [vmem:[%s2 + $0x158] sm:$0xf]
        %v358 = vld [vmem:[%s2 + $0x15c] sm:$0xff]
        %v359 = vld [vmem:[%s2 + $0x164] sm:$0xf]
        %v360 = vld [vmem:[%s2 + $0x168] sm:$0xff]
        %v361 = vld [vmem:[%s2 + $0x170] sm:$0xf]
        %v362 = vld [vmem:[%s2 + $0x174] sm:$0xff]
        %v363 = vld [vmem:[%s2 + $0x17c] sm:$0xf]
        %v364 = vld [vmem:[%s2 + $0x180] sm:$0xff]
        %v365 = vld [vmem:[%s2 + $0x188] sm:$0xf]
        %v366 = vld [vmem:[%s2 + $0x18c] sm:$0xff]
        %v367 = vld [vmem:[%s2 + $0x194] sm:$0xf]
        %v368 = vld [vmem:[%s2 + $0x198] sm:$0xff]
        %v369 = vld [vmem:[%s2 + $0x1a0] sm:$0xf]
        %v370 = vld [vmem:[%s2 + $0x1a4] sm:$0xff]
        %v371 = vld [vmem:[%s2 + $0x1ac] sm:$0xf]
        %v372 = vld [vmem:[%s249 + $0x18] sm:$0x11]
        %v373 = vld [vmem:[%s249 + $0x20] sm:$0x1]
        %s374 = scalar_lea.vmem %s2, 432
        %v375 = vld [vmem:[%s374] sm:$0xff]
        %v376 = vld [vmem:[%s374 + $0x8] sm:$0xf]
        %v377 = vld [vmem:[%s374 + $0xc] sm:$0xff]
        %v378 = vld [vmem:[%s374 + $0x14] sm:$0xf]
        %v379 = vld [vmem:[%s374 + $0x18] sm:$0xff]
        %v380 = vld [vmem:[%s374 + $0x20] sm:$0xf]
        %v381 = vld [vmem:[%s374 + $0x24] sm:$0xff]
        %v382 = vld [vmem:[%s374 + $0x2c] sm:$0xf]
        %v383 = vld [vmem:[%s374 + $0x30] sm:$0xff]
        %v384 = vld [vmem:[%s374 + $0x38] sm:$0xf]
        %v385 = vld [vmem:[%s374 + $0x3c] sm:$0xff]
        %v386 = vld [vmem:[%s374 + $0x44] sm:$0xf]
        %v387 = vld [vmem:[%s374 + $0x48] sm:$0xff]
        %v388 = vld [vmem:[%s374 + $0x50] sm:$0xf]
        %v389 = vld [vmem:[%s374 + $0x54] sm:$0xff]
        %v390 = vld [vmem:[%s374 + $0x5c] sm:$0xf]
        %v391 = vld [vmem:[%s374 + $0x60] sm:$0xff]
        %v392 = vld [vmem:[%s374 + $0x68] sm:$0xf]
        %v393 = vld [vmem:[%s374 + $0x6c] sm:$0xff]
        %v394 = vld [vmem:[%s374 + $0x74] sm:$0xf]
        %v395 = vld [vmem:[%s374 + $0x78] sm:$0xff]
        %v396 = vld [vmem:[%s374 + $0x80] sm:$0xf]
        %v397 = vld [vmem:[%s374 + $0x84] sm:$0xff]
        %v398 = vld [vmem:[%s374 + $0x8c] sm:$0xf]
        %v399 = vld [vmem:[%s374 + $0x90] sm:$0xff]
        %v400 = vld [vmem:[%s374 + $0x98] sm:$0xf]
        %v401 = vld [vmem:[%s374 + $0x9c] sm:$0xff]
        %v402 = vld [vmem:[%s374 + $0xa4] sm:$0xf]
        %v403 = vld [vmem:[%s374 + $0xa8] sm:$0xff]
        %v404 = vld [vmem:[%s374 + $0xb0] sm:$0xf]
        %v405 = vld [vmem:[%s374 + $0xb4] sm:$0xff]
        %v406 = vld [vmem:[%s374 + $0xbc] sm:$0xf]
        %v407 = vld [vmem:[%s374 + $0xc0] sm:$0xff]
        %v408 = vld [vmem:[%s374 + $0xc8] sm:$0xf]
        %v409 = vld [vmem:[%s374 + $0xcc] sm:$0xff]
        %v410 = vld [vmem:[%s374 + $0xd4] sm:$0xf]
        %v411 = vld [vmem:[%s374 + $0xd8] sm:$0xff]
        %v412 = vld [vmem:[%s374 + $0xe0] sm:$0xf]
        %v413 = vld [vmem:[%s374 + $0xe4] sm:$0xff]
        %v414 = vld [vmem:[%s374 + $0xec] sm:$0xf]
        %v415 = vld [vmem:[%s374 + $0xf0] sm:$0xff]
        %v416 = vld [vmem:[%s374 + $0xf8] sm:$0xf]
        %v417 = vld [vmem:[%s374 + $0xfc] sm:$0xff]
        %v418 = vld [vmem:[%s374 + $0x104] sm:$0xf]
        %v419 = vld [vmem:[%s374 + $0x108] sm:$0xff]
        %v420 = vld [vmem:[%s374 + $0x110] sm:$0xf]
        %v421 = vld [vmem:[%s374 + $0x114] sm:$0xff]
        %v422 = vld [vmem:[%s374 + $0x11c] sm:$0xf]
        %v423 = vld [vmem:[%s374 + $0x120] sm:$0xff]
        %v424 = vld [vmem:[%s374 + $0x128] sm:$0xf]
        %v425 = vld [vmem:[%s374 + $0x12c] sm:$0xff]
        %v426 = vld [vmem:[%s374 + $0x134] sm:$0xf]
        %v427 = vld [vmem:[%s374 + $0x138] sm:$0xff]
        %v428 = vld [vmem:[%s374 + $0x140] sm:$0xf]
        %v429 = vld [vmem:[%s374 + $0x144] sm:$0xff]
        %v430 = vld [vmem:[%s374 + $0x14c] sm:$0xf]
        %v431 = vld [vmem:[%s374 + $0x150] sm:$0xff]
        %v432 = vld [vmem:[%s374 + $0x158] sm:$0xf]
        %v433 = vld [vmem:[%s374 + $0x15c] sm:$0xff]
        %v434 = vld [vmem:[%s374 + $0x164] sm:$0xf]
        %v435 = vld [vmem:[%s374 + $0x168] sm:$0xff]
        %v436 = vld [vmem:[%s374 + $0x170] sm:$0xf]
        %v437 = vld [vmem:[%s374 + $0x174] sm:$0xff]
        %v438 = vld [vmem:[%s374 + $0x17c] sm:$0xf]
        %v439 = vld [vmem:[%s374 + $0x180] sm:$0xff]
        %v440 = vld [vmem:[%s374 + $0x188] sm:$0xf]
        %v441 = vld [vmem:[%s374 + $0x18c] sm:$0xff]
        %v442 = vld [vmem:[%s374 + $0x194] sm:$0xf]
        %v443 = vld [vmem:[%s374 + $0x198] sm:$0xff]
        %v444 = vld [vmem:[%s374 + $0x1a0] sm:$0xf]
        %v445 = vld [vmem:[%s374 + $0x1a4] sm:$0xff]
        %v446 = vld [vmem:[%s374 + $0x1ac] sm:$0xf]
        %v453 = vunpack.c.l.b16 %v296
        %v454 = vunpack.c.h.b16 %v296
        %v455 = vunpack.c.l.b16 %v297
        %v456 = vunpack.c.l.b16 %v298
        %v457 = vunpack.c.h.b16 %v298
        %v458 = vunpack.c.l.b16 %v299
        %v459 = vunpack.c.l.b16 %v372
        %v460 = vunpack.c.h.b16 %v372
        %v461 = vunpack.c.l.b16 %v373
        %v462 = vpack.c.b16 %v456, %v453
        %v463 = vpack.c.b16 %v457, %v454
        %v464 = vpack.c.b16 %v458, %v455
        %v465 = vpack.c.b16 %v459, %v459
        %v466 = vpack.c.b16 %v460, %v460
        %v467 = vpack.c.b16 %v461, %v461
        %vm468 = vsmask.f32 7424
        %v470 = vshrl.u32 %v462, 16
        %v472 = vshll.u32 %v462, 16
        %v474 = vrot.slane %v472, 1
        %v475 = vor.u32 %v470, %v474
        %v477 = vshll.u32 %v465, 16
        %v479 = vrot.slane %v477, 1
        %v480 = vsel %vm468, %v475, %v479
        %v482 = vshrl.u32 %v463, 16
        %v484 = vshll.u32 %v463, 16
        %v486 = vrot.slane %v484, 1
        %v487 = vor.u32 %v482, %v486
        %v489 = vshll.u32 %v466, 16
        %v491 = vrot.slane %v489, 1
        %v492 = vsel %vm468, %v487, %v491
        %v494 = vshrl.u32 %v464, 16
        %v496 = vshll.u32 %v464, 16
        %v498 = vrot.slane %v496, 1
        %v499 = vor.u32 %v494, %v498
        %v501 = vshll.u32 %v467, 16
        %v503 = vrot.slane %v501, 1
        %v504 = vsel %vm468, %v499, %v503
        %v579 = vunpack.c.l.b16 %v375
        %v580 = vunpack.c.h.b16 %v375
        %v581 = vunpack.c.l.b16 %v376
        %v582 = vunpack.c.l.b16 %v377
        %v583 = vunpack.c.h.b16 %v377
        %v584 = vunpack.c.l.b16 %v378
        %v585 = vunpack.c.l.b16 %v379
        %v586 = vunpack.c.h.b16 %v379
        %v587 = vunpack.c.l.b16 %v380
        %v588 = vunpack.c.l.b16 %v381
        %v589 = vunpack.c.h.b16 %v381
        %v590 = vunpack.c.l.b16 %v382
        %v591 = vunpack.c.l.b16 %v383
        %v592 = vunpack.c.h.b16 %v383
        %v593 = vunpack.c.l.b16 %v384
        %v594 = vunpack.c.l.b16 %v385
        %v595 = vunpack.c.h.b16 %v385
        %v596 = vunpack.c.l.b16 %v386
        %v597 = vunpack.c.l.b16 %v387
        %v598 = vunpack.c.h.b16 %v387
        %v599 = vunpack.c.l.b16 %v388
        %v600 = vunpack.c.l.b16 %v389
        %v601 = vunpack.c.h.b16 %v389
        %v602 = vunpack.c.l.b16 %v390
        %v603 = vunpack.c.l.b16 %v391
        %v604 = vunpack.c.h.b16 %v391
        %v605 = vunpack.c.l.b16 %v392
        %v606 = vunpack.c.l.b16 %v393
        %v607 = vunpack.c.h.b16 %v393
        %v608 = vunpack.c.l.b16 %v394
        %v609 = vunpack.c.l.b16 %v395
        %v610 = vunpack.c.h.b16 %v395
        %v611 = vunpack.c.l.b16 %v396
        %v612 = vunpack.c.l.b16 %v397
        %v613 = vunpack.c.h.b16 %v397
        %v614 = vunpack.c.l.b16 %v398
        %v615 = vunpack.c.l.b16 %v399
        %v616 = vunpack.c.h.b16 %v399
        %v617 = vunpack.c.l.b16 %v400
        %v618 = vunpack.c.l.b16 %v401
        %v619 = vunpack.c.h.b16 %v401
        %v620 = vunpack.c.l.b16 %v402
        %v621 = vunpack.c.l.b16 %v403
        %v622 = vunpack.c.h.b16 %v403
        %v623 = vunpack.c.l.b16 %v404
        %v624 = vunpack.c.l.b16 %v405
        %v625 = vunpack.c.h.b16 %v405
        %v626 = vunpack.c.l.b16 %v406
        %v627 = vunpack.c.l.b16 %v407
        %v628 = vunpack.c.h.b16 %v407
        %v629 = vunpack.c.l.b16 %v408
        %v630 = vunpack.c.l.b16 %v409
        %v631 = vunpack.c.h.b16 %v409
        %v632 = vunpack.c.l.b16 %v410
        %v633 = vunpack.c.l.b16 %v411
        %v634 = vunpack.c.h.b16 %v411
        %v635 = vunpack.c.l.b16 %v412
        %v636 = vunpack.c.l.b16 %v413
        %v637 = vunpack.c.h.b16 %v413
        %v638 = vunpack.c.l.b16 %v414
        %v639 = vunpack.c.l.b16 %v415
        %v640 = vunpack.c.h.b16 %v415
        %v641 = vunpack.c.l.b16 %v416
        %v642 = vunpack.c.l.b16 %v417
        %v643 = vunpack.c.h.b16 %v417
        %v644 = vunpack.c.l.b16 %v418
        %v645 = vunpack.c.l.b16 %v419
        %v646 = vunpack.c.h.b16 %v419
        %v647 = vunpack.c.l.b16 %v420
        %v648 = vunpack.c.l.b16 %v421
        %v649 = vunpack.c.h.b16 %v421
        %v650 = vunpack.c.l.b16 %v422
        %v651 = vunpack.c.l.b16 %v423
        %v652 = vunpack.c.h.b16 %v423
        %v653 = vunpack.c.l.b16 %v424
        %v654 = vunpack.c.l.b16 %v425
        %v655 = vunpack.c.h.b16 %v425
        %v656 = vunpack.c.l.b16 %v426
        %v657 = vunpack.c.l.b16 %v427
        %v658 = vunpack.c.h.b16 %v427
        %v659 = vunpack.c.l.b16 %v428
        %v660 = vunpack.c.l.b16 %v429
        %v661 = vunpack.c.h.b16 %v429
        %v662 = vunpack.c.l.b16 %v430
        %v663 = vunpack.c.l.b16 %v431
        %v664 = vunpack.c.h.b16 %v431
        %v665 = vunpack.c.l.b16 %v432
        %v666 = vunpack.c.l.b16 %v433
        %v667 = vunpack.c.h.b16 %v433
        %v668 = vunpack.c.l.b16 %v434
        %v669 = vunpack.c.l.b16 %v435
        %v670 = vunpack.c.h.b16 %v435
        %v671 = vunpack.c.l.b16 %v436
        %v672 = vunpack.c.l.b16 %v437
        %v673 = vunpack.c.h.b16 %v437
        %v674 = vunpack.c.l.b16 %v438
        %v675 = vunpack.c.l.b16 %v439
        %v676 = vunpack.c.h.b16 %v439
        %v677 = vunpack.c.l.b16 %v440
        %v678 = vunpack.c.l.b16 %v441
        %v679 = vunpack.c.h.b16 %v441
        %v680 = vunpack.c.l.b16 %v442
        %v681 = vunpack.c.l.b16 %v443
        %v682 = vunpack.c.h.b16 %v443
        %v683 = vunpack.c.l.b16 %v444
        %v684 = vunpack.c.l.b16 %v445
        %v685 = vunpack.c.h.b16 %v445
        %v686 = vunpack.c.l.b16 %v446
        %v687 = vpack.c.b16 %v582, %v579
        %v688 = vpack.c.b16 %v583, %v580
        %v689 = vpack.c.b16 %v584, %v581
        %v690 = vpack.c.b16 %v588, %v585
        %v691 = vpack.c.b16 %v589, %v586
        %v692 = vpack.c.b16 %v590, %v587
        %v693 = vpack.c.b16 %v594, %v591
        %v694 = vpack.c.b16 %v595, %v592
        %v695 = vpack.c.b16 %v596, %v593
        %v696 = vpack.c.b16 %v600, %v597
        %v697 = vpack.c.b16 %v601, %v598
        %v698 = vpack.c.b16 %v602, %v599
        %v699 = vpack.c.b16 %v606, %v603
        %v700 = vpack.c.b16 %v607, %v604
        %v701 = vpack.c.b16 %v608, %v605
        %v702 = vpack.c.b16 %v612, %v609
        %v703 = vpack.c.b16 %v613, %v610
        %v704 = vpack.c.b16 %v614, %v611
        %v705 = vpack.c.b16 %v618, %v615
        %v706 = vpack.c.b16 %v619, %v616
        %v707 = vpack.c.b16 %v620, %v617
        %v708 = vpack.c.b16 %v624, %v621
        %v709 = vpack.c.b16 %v625, %v622
        %v710 = vpack.c.b16 %v626, %v623
        %v711 = vpack.c.b16 %v630, %v627
        %v712 = vpack.c.b16 %v631, %v628
        %v713 = vpack.c.b16 %v632, %v629
        %v714 = vpack.c.b16 %v636, %v633
        %v715 = vpack.c.b16 %v637, %v634
        %v716 = vpack.c.b16 %v638, %v635
        %v717 = vpack.c.b16 %v642, %v639
        %v718 = vpack.c.b16 %v643, %v640
        %v719 = vpack.c.b16 %v644, %v641
        %v720 = vpack.c.b16 %v648, %v645
        %v721 = vpack.c.b16 %v649, %v646
        %v722 = vpack.c.b16 %v650, %v647
        %v723 = vpack.c.b16 %v654, %v651
        %v724 = vpack.c.b16 %v655, %v652
        %v725 = vpack.c.b16 %v656, %v653
        %v726 = vpack.c.b16 %v660, %v657
        %v727 = vpack.c.b16 %v661, %v658
        %v728 = vpack.c.b16 %v662, %v659
        %v729 = vpack.c.b16 %v666, %v663
        %v730 = vpack.c.b16 %v667, %v664
        %v731 = vpack.c.b16 %v668, %v665
        %v732 = vpack.c.b16 %v672, %v669
        %v733 = vpack.c.b16 %v673, %v670
        %v734 = vpack.c.b16 %v674, %v671
        %v735 = vpack.c.b16 %v678, %v675
        %v736 = vpack.c.b16 %v679, %v676
        %v737 = vpack.c.b16 %v680, %v677
        %v738 = vpack.c.b16 %v684, %v681
        %v739 = vpack.c.b16 %v685, %v682
        %v740 = vpack.c.b16 %v686, %v683
        %vm795 = vcmask 261120
        %v797 = vsel %vm795, %v504, 0
        %799 = vmatpush.bf16.msra.mxu0 %v708
        %800 = vmatpush.bf16.msra.mxu0 %v705
        %801 = vmatpush.bf16.msra.mxu0 %v702
        %802 = vmatpush.bf16.msra.mxu0 %v699
        %803 = vmatpush.bf16.msra.mxu0 %v696
        %804 = vmatpush.bf16.msra.mxu0 %v693
        %805 = vmatpush.bf16.msra.mxu0 %v690
        %806 = vmatpush.bf16.msra.mxu0 %v687
        %807 = vmatmul.bf16.gmra.mxu0 %v480
        %v808 = vpop.f32.mrf.mxu0
        %v809 = vadd.f32 0.0, %v808
        %v810 = vpop.f32.mrf.mxu0
        %v811 = vadd.f32 0.0, %v810
        %812 = vdwg.mxu0
        %813 = vmatpush.bf16.msra.mxu0 %v732
        %814 = vmatpush.bf16.msra.mxu0 %v729
        %815 = vmatpush.bf16.msra.mxu0 %v726
        %816 = vmatpush.bf16.msra.mxu0 %v723
        %817 = vmatpush.bf16.msra.mxu0 %v720
        %818 = vmatpush.bf16.msra.mxu0 %v717
        %819 = vmatpush.bf16.msra.mxu0 %v714
        %820 = vmatpush.bf16.msra.mxu0 %v711
        %821 = vmatmul.bf16.gmra.mxu0 %v492
        %v822 = vpop.f32.mrf.mxu0
        %v823 = vadd.f32 %v809, %v822
        %v824 = vpop.f32.mrf.mxu0
        %v825 = vadd.f32 %v811, %v824
        %826 = vdwg.mxu0
        %827 = vmatpush.bf16.msra.mxu0 0
        %828 = vmatpush.bf16.msra.mxu0 0
        %829 = vmatpush.bf16.msra.mxu0 0
        %830 = vmatpush.bf16.msra.mxu0 0
        %831 = vmatpush.bf16.msra.mxu0 0
        %832 = vmatpush.bf16.msra.mxu0 0
        %833 = vmatpush.bf16.msra.mxu0 %v738
        %834 = vmatpush.bf16.msra.mxu0 %v735
        %835 = vmatmul.bf16.gmra.mxu0 %v797
        %v836 = vpop.f32.mrf.mxu0
        %v837 = vadd.f32 %v823, %v836
        %v838 = vpop.f32.mrf.mxu0
        %v839 = vadd.f32 %v825, %v838
        %840 = vdwg.mxu0
        %841 = vmatpush.bf16.msra.mxu0 %v709
        %842 = vmatpush.bf16.msra.mxu0 %v706
        %843 = vmatpush.bf16.msra.mxu0 %v703
        %844 = vmatpush.bf16.msra.mxu0 %v700
        %845 = vmatpush.bf16.msra.mxu0 %v697
        %846 = vmatpush.bf16.msra.mxu0 %v694
        %847 = vmatpush.bf16.msra.mxu0 %v691
        %848 = vmatpush.bf16.msra.mxu0 %v688
        %849 = vmatmul.bf16.gmra.mxu0 %v480
        %v850 = vpop.f32.mrf.mxu0
        %v851 = vadd.f32 0.0, %v850
        %v852 = vpop.f32.mrf.mxu0
        %v853 = vadd.f32 0.0, %v852
        %854 = vdwg.mxu0
        %855 = vmatpush.bf16.msra.mxu0 %v733
        %856 = vmatpush.bf16.msra.mxu0 %v730
        %857 = vmatpush.bf16.msra.mxu0 %v727
        %858 = vmatpush.bf16.msra.mxu0 %v724
        %859 = vmatpush.bf16.msra.mxu0 %v721
        %860 = vmatpush.bf16.msra.mxu0 %v718
        %861 = vmatpush.bf16.msra.mxu0 %v715
        %862 = vmatpush.bf16.msra.mxu0 %v712
        %863 = vmatmul.bf16.gmra.mxu0 %v492
        %v864 = vpop.f32.mrf.mxu0
        %v865 = vadd.f32 %v851, %v864
        %v866 = vpop.f32.mrf.mxu0
        %v867 = vadd.f32 %v853, %v866
        %868 = vdwg.mxu0
        %869 = vmatpush.bf16.msra.mxu0 0
        %870 = vmatpush.bf16.msra.mxu0 0
        %871 = vmatpush.bf16.msra.mxu0 0
        %872 = vmatpush.bf16.msra.mxu0 0
        %873 = vmatpush.bf16.msra.mxu0 0
        %874 = vmatpush.bf16.msra.mxu0 0
        %875 = vmatpush.bf16.msra.mxu0 %v739
        %876 = vmatpush.bf16.msra.mxu0 %v736
        %877 = vmatmul.bf16.gmra.mxu0 %v797
        %v878 = vpop.f32.mrf.mxu0
        %v879 = vadd.f32 %v865, %v878
        %v880 = vpop.f32.mrf.mxu0
        %v881 = vadd.f32 %v867, %v880
        %882 = vdwg.mxu0
        %883 = vmatpush.bf16.msra.mxu0 %v710
        %884 = vmatpush.bf16.msra.mxu0 %v707
        %885 = vmatpush.bf16.msra.mxu0 %v704
        %886 = vmatpush.bf16.msra.mxu0 %v701
        %887 = vmatpush.bf16.msra.mxu0 %v698
        %888 = vmatpush.bf16.msra.mxu0 %v695
        %889 = vmatpush.bf16.msra.mxu0 %v692
        %890 = vmatpush.bf16.msra.mxu0 %v689
        %891 = vmatmul.bf16.gmra.mxu0 %v480
        %v892 = vpop.f32.mrf.mxu0
        %v893 = vadd.f32 0.0, %v892
        %v894 = vpop.f32.mrf.mxu0
        %v895 = vadd.f32 0.0, %v894
        %896 = vdwg.mxu0
        %897 = vmatpush.bf16.msra.mxu0 %v734
        %898 = vmatpush.bf16.msra.mxu0 %v731
        %899 = vmatpush.bf16.msra.mxu0 %v728
        %900 = vmatpush.bf16.msra.mxu0 %v725
        %901 = vmatpush.bf16.msra.mxu0 %v722
        %902 = vmatpush.bf16.msra.mxu0 %v719
        %903 = vmatpush.bf16.msra.mxu0 %v716
        %904 = vmatpush.bf16.msra.mxu0 %v713
        %905 = vmatmul.bf16.gmra.mxu0 %v492
        %v906 = vpop.f32.mrf.mxu0
        %v907 = vadd.f32 %v893, %v906
        %v908 = vpop.f32.mrf.mxu0
        %v909 = vadd.f32 %v895, %v908
        %910 = vdwg.mxu0
        %911 = vmatpush.bf16.msra.mxu0 0
        %912 = vmatpush.bf16.msra.mxu0 0
        %913 = vmatpush.bf16.msra.mxu0 0
        %914 = vmatpush.bf16.msra.mxu0 0
        %915 = vmatpush.bf16.msra.mxu0 0
        %916 = vmatpush.bf16.msra.mxu0 0
        %917 = vmatpush.bf16.msra.mxu0 %v740
        %918 = vmatpush.bf16.msra.mxu0 %v737
        %919 = vmatmul.bf16.gmra.mxu0 %v797
        %v920 = vpop.f32.mrf.mxu0
        %v921 = vadd.f32 %v907, %v920
        %v922 = vpop.f32.mrf.mxu0
        %v923 = vadd.f32 %v909, %v922
        %924 = vdwg.mxu0
        %v999 = vunpack.c.l.b16 %v300
        %v1000 = vunpack.c.h.b16 %v300
        %v1001 = vunpack.c.l.b16 %v301
        %v1002 = vunpack.c.l.b16 %v302
        %v1003 = vunpack.c.h.b16 %v302
        %v1004 = vunpack.c.l.b16 %v303
        %v1005 = vunpack.c.l.b16 %v304
        %v1006 = vunpack.c.h.b16 %v304
        %v1007 = vunpack.c.l.b16 %v305
        %v1008 = vunpack.c.l.b16 %v306
        %v1009 = vunpack.c.h.b16 %v306
        %v1010 = vunpack.c.l.b16 %v307
        %v1011 = vunpack.c.l.b16 %v308
        %v1012 = vunpack.c.h.b16 %v308
        %v1013 = vunpack.c.l.b16 %v309
        %v1014 = vunpack.c.l.b16 %v310
        %v1015 = vunpack.c.h.b16 %v310
        %v1016 = vunpack.c.l.b16 %v311
        %v1017 = vunpack.c.l.b16 %v312
        %v1018 = vunpack.c.h.b16 %v312
        %v1019 = vunpack.c.l.b16 %v313
        %v1020 = vunpack.c.l.b16 %v314
        %v1021 = vunpack.c.h.b16 %v314
        %v1022 = vunpack.c.l.b16 %v315
        %v1023 = vunpack.c.l.b16 %v316
        %v1024 = vunpack.c.h.b16 %v316
        %v1025 = vunpack.c.l.b16 %v317
        %v1026 = vunpack.c.l.b16 %v318
        %v1027 = vunpack.c.h.b16 %v318
        %v1028 = vunpack.c.l.b16 %v319
        %v1029 = vunpack.c.l.b16 %v320
        %v1030 = vunpack.c.h.b16 %v320
        %v1031 = vunpack.c.l.b16 %v321
        %v1032 = vunpack.c.l.b16 %v322
        %v1033 = vunpack.c.h.b16 %v322
        %v1034 = vunpack.c.l.b16 %v323
        %v1035 = vunpack.c.l.b16 %v324
        %v1036 = vunpack.c.h.b16 %v324
        %v1037 = vunpack.c.l.b16 %v325
        %v1038 = vunpack.c.l.b16 %v326
        %v1039 = vunpack.c.h.b16 %v326
        %v1040 = vunpack.c.l.b16 %v327
        %v1041 = vunpack.c.l.b16 %v328
        %v1042 = vunpack.c.h.b16 %v328
        %v1043 = vunpack.c.l.b16 %v329
        %v1044 = vunpack.c.l.b16 %v330
        %v1045 = vunpack.c.h.b16 %v330
        %v1046 = vunpack.c.l.b16 %v331
        %v1047 = vunpack.c.l.b16 %v332
        %v1048 = vunpack.c.h.b16 %v332
        %v1049 = vunpack.c.l.b16 %v333
        %v1050 = vunpack.c.l.b16 %v334
        %v1051 = vunpack.c.h.b16 %v334
        %v1052 = vunpack.c.l.b16 %v335
        %v1053 = vunpack.c.l.b16 %v336
        %v1054 = vunpack.c.h.b16 %v336
        %v1055 = vunpack.c.l.b16 %v337
        %v1056 = vunpack.c.l.b16 %v338
        %v1057 = vunpack.c.h.b16 %v338
        %v1058 = vunpack.c.l.b16 %v339
        %v1059 = vunpack.c.l.b16 %v340
        %v1060 = vunpack.c.h.b16 %v340
        %v1061 = vunpack.c.l.b16 %v341
        %v1062 = vunpack.c.l.b16 %v342
        %v1063 = vunpack.c.h.b16 %v342
        %v1064 = vunpack.c.l.b16 %v343
        %v1065 = vunpack.c.l.b16 %v344
        %v1066 = vunpack.c.h.b16 %v344
        %v1067 = vunpack.c.l.b16 %v345
        %v1068 = vunpack.c.l.b16 %v346
        %v1069 = vunpack.c.h.b16 %v346
        %v1070 = vunpack.c.l.b16 %v347
        %v1071 = vunpack.c.l.b16 %v348
        %v1072 = vunpack.c.h.b16 %v348
        %v1073 = vunpack.c.l.b16 %v349
        %v1074 = vunpack.c.l.b16 %v350
        %v1075 = vunpack.c.h.b16 %v350
        %v1076 = vunpack.c.l.b16 %v351
        %v1077 = vunpack.c.l.b16 %v352
        %v1078 = vunpack.c.h.b16 %v352
        %v1079 = vunpack.c.l.b16 %v353
        %v1080 = vunpack.c.l.b16 %v354
        %v1081 = vunpack.c.h.b16 %v354
        %v1082 = vunpack.c.l.b16 %v355
        %v1083 = vunpack.c.l.b16 %v356
        %v1084 = vunpack.c.h.b16 %v356
        %v1085 = vunpack.c.l.b16 %v357
        %v1086 = vunpack.c.l.b16 %v358
        %v1087 = vunpack.c.h.b16 %v358
        %v1088 = vunpack.c.l.b16 %v359
        %v1089 = vunpack.c.l.b16 %v360
        %v1090 = vunpack.c.h.b16 %v360
        %v1091 = vunpack.c.l.b16 %v361
        %v1092 = vunpack.c.l.b16 %v362
        %v1093 = vunpack.c.h.b16 %v362
        %v1094 = vunpack.c.l.b16 %v363
        %v1095 = vunpack.c.l.b16 %v364
        %v1096 = vunpack.c.h.b16 %v364
        %v1097 = vunpack.c.l.b16 %v365
        %v1098 = vunpack.c.l.b16 %v366
        %v1099 = vunpack.c.h.b16 %v366
        %v1100 = vunpack.c.l.b16 %v367
        %v1101 = vunpack.c.l.b16 %v368
        %v1102 = vunpack.c.h.b16 %v368
        %v1103 = vunpack.c.l.b16 %v369
        %v1104 = vunpack.c.l.b16 %v370
        %v1105 = vunpack.c.h.b16 %v370
        %v1106 = vunpack.c.l.b16 %v371
        %v1107 = vpack.c.b16 %v1002, %v999
        %v1108 = vpack.c.b16 %v1003, %v1000
        %v1109 = vpack.c.b16 %v1004, %v1001
        %v1110 = vpack.c.b16 %v1008, %v1005
        %v1111 = vpack.c.b16 %v1009, %v1006
        %v1112 = vpack.c.b16 %v1010, %v1007
        %v1113 = vpack.c.b16 %v1014, %v1011
        %v1114 = vpack.c.b16 %v1015, %v1012
        %v1115 = vpack.c.b16 %v1016, %v1013
        %v1116 = vpack.c.b16 %v1020, %v1017
        %v1117 = vpack.c.b16 %v1021, %v1018
        %v1118 = vpack.c.b16 %v1022, %v1019
        %v1119 = vpack.c.b16 %v1026, %v1023
        %v1120 = vpack.c.b16 %v1027, %v1024
        %v1121 = vpack.c.b16 %v1028, %v1025
        %v1122 = vpack.c.b16 %v1032, %v1029
        %v1123 = vpack.c.b16 %v1033, %v1030
        %v1124 = vpack.c.b16 %v1034, %v1031
        %v1125 = vpack.c.b16 %v1038, %v1035
        %v1126 = vpack.c.b16 %v1039, %v1036
        %v1127 = vpack.c.b16 %v1040, %v1037
        %v1128 = vpack.c.b16 %v1044, %v1041
        %v1129 = vpack.c.b16 %v1045, %v1042
        %v1130 = vpack.c.b16 %v1046, %v1043
        %v1131 = vpack.c.b16 %v1050, %v1047
        %v1132 = vpack.c.b16 %v1051, %v1048
        %v1133 = vpack.c.b16 %v1052, %v1049
        %v1134 = vpack.c.b16 %v1056, %v1053
        %v1135 = vpack.c.b16 %v1057, %v1054
        %v1136 = vpack.c.b16 %v1058, %v1055
        %v1137 = vpack.c.b16 %v1062, %v1059
        %v1138 = vpack.c.b16 %v1063, %v1060
        %v1139 = vpack.c.b16 %v1064, %v1061
        %v1140 = vpack.c.b16 %v1068, %v1065
        %v1141 = vpack.c.b16 %v1069, %v1066
        %v1142 = vpack.c.b16 %v1070, %v1067
        %v1143 = vpack.c.b16 %v1074, %v1071
        %v1144 = vpack.c.b16 %v1075, %v1072
        %v1145 = vpack.c.b16 %v1076, %v1073
        %v1146 = vpack.c.b16 %v1080, %v1077
        %v1147 = vpack.c.b16 %v1081, %v1078
        %v1148 = vpack.c.b16 %v1082, %v1079
        %v1149 = vpack.c.b16 %v1086, %v1083
        %v1150 = vpack.c.b16 %v1087, %v1084
        %v1151 = vpack.c.b16 %v1088, %v1085
        %v1152 = vpack.c.b16 %v1092, %v1089
        %v1153 = vpack.c.b16 %v1093, %v1090
        %v1154 = vpack.c.b16 %v1094, %v1091
        %v1155 = vpack.c.b16 %v1098, %v1095
        %v1156 = vpack.c.b16 %v1099, %v1096
        %v1157 = vpack.c.b16 %v1100, %v1097
        %v1158 = vpack.c.b16 %v1104, %v1101
        %v1159 = vpack.c.b16 %v1105, %v1102
        %v1160 = vpack.c.b16 %v1106, %v1103
        %v1215 = vsel %vm795, %v464, 0
        %1217 = vmatpush.bf16.msra.mxu0 %v1128
        %1218 = vmatpush.bf16.msra.mxu0 %v1125
        %1219 = vmatpush.bf16.msra.mxu0 %v1122
        %1220 = vmatpush.bf16.msra.mxu0 %v1119
        %1221 = vmatpush.bf16.msra.mxu0 %v1116
        %1222 = vmatpush.bf16.msra.mxu0 %v1113
        %1223 = vmatpush.bf16.msra.mxu0 %v1110
        %1224 = vmatpush.bf16.msra.mxu0 %v1107
        %1225 = vmatmul.bf16.gmra.mxu0 %v462
        %v1226 = vpop.f32.mrf.mxu0
        %v1227 = vadd.f32 %v837, %v1226
        %v1228 = vpop.f32.mrf.mxu0
        %v1229 = vadd.f32 %v839, %v1228
        %1230 = vdwg.mxu0
        %1231 = vmatpush.bf16.msra.mxu0 %v1152
        %1232 = vmatpush.bf16.msra.mxu0 %v1149
        %1233 = vmatpush.bf16.msra.mxu0 %v1146
        %1234 = vmatpush.bf16.msra.mxu0 %v1143
        %1235 = vmatpush.bf16.msra.mxu0 %v1140
        %1236 = vmatpush.bf16.msra.mxu0 %v1137
        %1237 = vmatpush.bf16.msra.mxu0 %v1134
        %1238 = vmatpush.bf16.msra.mxu0 %v1131
        %1239 = vmatmul.bf16.gmra.mxu0 %v463
        %v1240 = vpop.f32.mrf.mxu0
        %v1241 = vadd.f32 %v1227, %v1240
        %v1242 = vpop.f32.mrf.mxu0
        %v1243 = vadd.f32 %v1229, %v1242
        %1244 = vdwg.mxu0
        %1245 = vmatpush.bf16.msra.mxu0 0
        %1246 = vmatpush.bf16.msra.mxu0 0
        %1247 = vmatpush.bf16.msra.mxu0 0
        %1248 = vmatpush.bf16.msra.mxu0 0
        %1249 = vmatpush.bf16.msra.mxu0 0
        %1250 = vmatpush.bf16.msra.mxu0 0
        %1251 = vmatpush.bf16.msra.mxu0 %v1158
        %1252 = vmatpush.bf16.msra.mxu0 %v1155
        %1253 = vmatmul.bf16.gmra.mxu0 %v1215
        %v1254 = vpop.f32.mrf.mxu0
        %v1255 = vadd.f32 %v1241, %v1254
        %v1256 = vpop.f32.mrf.mxu0
        %v1257 = vadd.f32 %v1243, %v1256
        %1258 = vdwg.mxu0
        %1259 = vmatpush.bf16.msra.mxu0 %v1129
        %1260 = vmatpush.bf16.msra.mxu0 %v1126
        %1261 = vmatpush.bf16.msra.mxu0 %v1123
        %1262 = vmatpush.bf16.msra.mxu0 %v1120
        %1263 = vmatpush.bf16.msra.mxu0 %v1117
        %1264 = vmatpush.bf16.msra.mxu0 %v1114
        %1265 = vmatpush.bf16.msra.mxu0 %v1111
        %1266 = vmatpush.bf16.msra.mxu0 %v1108
        %1267 = vmatmul.bf16.gmra.mxu0 %v462
        %v1268 = vpop.f32.mrf.mxu0
        %v1269 = vadd.f32 %v879, %v1268
        %v1270 = vpop.f32.mrf.mxu0
        %v1271 = vadd.f32 %v881, %v1270
        %1272 = vdwg.mxu0
        %1273 = vmatpush.bf16.msra.mxu0 %v1153
        %1274 = vmatpush.bf16.msra.mxu0 %v1150
        %1275 = vmatpush.bf16.msra.mxu0 %v1147
        %1276 = vmatpush.bf16.msra.mxu0 %v1144
        %1277 = vmatpush.bf16.msra.mxu0 %v1141
        %1278 = vmatpush.bf16.msra.mxu0 %v1138
        %1279 = vmatpush.bf16.msra.mxu0 %v1135
        %1280 = vmatpush.bf16.msra.mxu0 %v1132
        %1281 = vmatmul.bf16.gmra.mxu0 %v463
        %v1282 = vpop.f32.mrf.mxu0
        %v1283 = vadd.f32 %v1269, %v1282
        %v1284 = vpop.f32.mrf.mxu0
        %v1285 = vadd.f32 %v1271, %v1284
        %1286 = vdwg.mxu0
        %1287 = vmatpush.bf16.msra.mxu0 0
        %1288 = vmatpush.bf16.msra.mxu0 0
        %1289 = vmatpush.bf16.msra.mxu0 0
        %1290 = vmatpush.bf16.msra.mxu0 0
        %1291 = vmatpush.bf16.msra.mxu0 0
        %1292 = vmatpush.bf16.msra.mxu0 0
        %1293 = vmatpush.bf16.msra.mxu0 %v1159
        %1294 = vmatpush.bf16.msra.mxu0 %v1156
        %1295 = vmatmul.bf16.gmra.mxu0 %v1215
        %v1296 = vpop.f32.mrf.mxu0
        %v1297 = vadd.f32 %v1283, %v1296
        %v1298 = vpop.f32.mrf.mxu0
        %v1299 = vadd.f32 %v1285, %v1298
        %1300 = vdwg.mxu0
        %1301 = vmatpush.bf16.msra.mxu0 %v1130
        %1302 = vmatpush.bf16.msra.mxu0 %v1127
        %1303 = vmatpush.bf16.msra.mxu0 %v1124
        %1304 = vmatpush.bf16.msra.mxu0 %v1121
        %1305 = vmatpush.bf16.msra.mxu0 %v1118
        %1306 = vmatpush.bf16.msra.mxu0 %v1115
        %1307 = vmatpush.bf16.msra.mxu0 %v1112
        %1308 = vmatpush.bf16.msra.mxu0 %v1109
        %1309 = vmatmul.bf16.gmra.mxu0 %v462
        %v1310 = vpop.f32.mrf.mxu0
        %v1311 = vadd.f32 %v921, %v1310
        %v1312 = vpop.f32.mrf.mxu0
        %v1313 = vadd.f32 %v923, %v1312
        %1314 = vdwg.mxu0
        %1315 = vmatpush.bf16.msra.mxu0 %v1154
        %1316 = vmatpush.bf16.msra.mxu0 %v1151
        %1317 = vmatpush.bf16.msra.mxu0 %v1148
        %1318 = vmatpush.bf16.msra.mxu0 %v1145
        %1319 = vmatpush.bf16.msra.mxu0 %v1142
        %1320 = vmatpush.bf16.msra.mxu0 %v1139
        %1321 = vmatpush.bf16.msra.mxu0 %v1136
        %1322 = vmatpush.bf16.msra.mxu0 %v1133
        %1323 = vmatmul.bf16.gmra.mxu0 %v463
        %v1324 = vpop.f32.mrf.mxu0
        %v1325 = vadd.f32 %v1311, %v1324
        %v1326 = vpop.f32.mrf.mxu0
        %v1327 = vadd.f32 %v1313, %v1326
        %1328 = vdwg.mxu0
        %1329 = vmatpush.bf16.msra.mxu0 0
        %1330 = vmatpush.bf16.msra.mxu0 0
        %1331 = vmatpush.bf16.msra.mxu0 0
        %1332 = vmatpush.bf16.msra.mxu0 0
        %1333 = vmatpush.bf16.msra.mxu0 0
        %1334 = vmatpush.bf16.msra.mxu0 0
        %1335 = vmatpush.bf16.msra.mxu0 %v1160
        %1336 = vmatpush.bf16.msra.mxu0 %v1157
        %1337 = vmatmul.bf16.gmra.mxu0 %v1215
        %v1338 = vpop.f32.mrf.mxu0
        %v1339 = vadd.f32 %v1325, %v1338
        %v1340 = vpop.f32.mrf.mxu0
        %v1341 = vadd.f32 %v1327, %v1340
        %1342 = vdwg.mxu0
        %v1343 = vld [vmem:[%s249] sm:$0xee]
        %v1344 = vld [vmem:[%s249 + $0x8] sm:$0xe]
        %s1345 = scalar_lea.vmem %s2, 864
        %v1346 = vld [vmem:[%s1345] sm:$0xff]
        %v1347 = vld [vmem:[%s1345 + $0x8] sm:$0xf]
        %v1348 = vld [vmem:[%s1345 + $0xc] sm:$0xff]
        %v1349 = vld [vmem:[%s1345 + $0x14] sm:$0xf]
        %v1350 = vld [vmem:[%s1345 + $0x18] sm:$0xff]
        %v1351 = vld [vmem:[%s1345 + $0x20] sm:$0xf]
        %v1352 = vld [vmem:[%s1345 + $0x24] sm:$0xff]
        %v1353 = vld [vmem:[%s1345 + $0x2c] sm:$0xf]
        %v1354 = vld [vmem:[%s1345 + $0x30] sm:$0xff]
        %v1355 = vld [vmem:[%s1345 + $0x38] sm:$0xf]
        %v1356 = vld [vmem:[%s1345 + $0x3c] sm:$0xff]
        %v1357 = vld [vmem:[%s1345 + $0x44] sm:$0xf]
        %v1358 = vld [vmem:[%s1345 + $0x48] sm:$0xff]
        %v1359 = vld [vmem:[%s1345 + $0x50] sm:$0xf]
        %v1360 = vld [vmem:[%s1345 + $0x54] sm:$0xff]
        %v1361 = vld [vmem:[%s1345 + $0x5c] sm:$0xf]
        %v1362 = vld [vmem:[%s1345 + $0x60] sm:$0xff]
        %v1363 = vld [vmem:[%s1345 + $0x68] sm:$0xf]
        %v1364 = vld [vmem:[%s1345 + $0x6c] sm:$0xff]
        %v1365 = vld [vmem:[%s1345 + $0x74] sm:$0xf]
        %v1366 = vld [vmem:[%s1345 + $0x78] sm:$0xff]
        %v1367 = vld [vmem:[%s1345 + $0x80] sm:$0xf]
        %v1368 = vld [vmem:[%s1345 + $0x84] sm:$0xff]
        %v1369 = vld [vmem:[%s1345 + $0x8c] sm:$0xf]
        %v1370 = vld [vmem:[%s1345 + $0x90] sm:$0xff]
        %v1371 = vld [vmem:[%s1345 + $0x98] sm:$0xf]
        %v1372 = vld [vmem:[%s1345 + $0x9c] sm:$0xff]
        %v1373 = vld [vmem:[%s1345 + $0xa4] sm:$0xf]
        %v1374 = vld [vmem:[%s1345 + $0xa8] sm:$0xff]
        %v1375 = vld [vmem:[%s1345 + $0xb0] sm:$0xf]
        %v1376 = vld [vmem:[%s1345 + $0xb4] sm:$0xff]
        %v1377 = vld [vmem:[%s1345 + $0xbc] sm:$0xf]
        %v1378 = vld [vmem:[%s1345 + $0xc0] sm:$0xff]
        %v1379 = vld [vmem:[%s1345 + $0xc8] sm:$0xf]
        %v1380 = vld [vmem:[%s1345 + $0xcc] sm:$0xff]
        %v1381 = vld [vmem:[%s1345 + $0xd4] sm:$0xf]
        %v1382 = vld [vmem:[%s1345 + $0xd8] sm:$0xff]
        %v1383 = vld [vmem:[%s1345 + $0xe0] sm:$0xf]
        %v1384 = vld [vmem:[%s1345 + $0xe4] sm:$0xff]
        %v1385 = vld [vmem:[%s1345 + $0xec] sm:$0xf]
        %v1386 = vld [vmem:[%s1345 + $0xf0] sm:$0xff]
        %v1387 = vld [vmem:[%s1345 + $0xf8] sm:$0xf]
        %v1388 = vld [vmem:[%s1345 + $0xfc] sm:$0xff]
        %v1389 = vld [vmem:[%s1345 + $0x104] sm:$0xf]
        %v1390 = vld [vmem:[%s1345 + $0x108] sm:$0xff]
        %v1391 = vld [vmem:[%s1345 + $0x110] sm:$0xf]
        %v1392 = vld [vmem:[%s1345 + $0x114] sm:$0xff]
        %v1393 = vld [vmem:[%s1345 + $0x11c] sm:$0xf]
        %v1394 = vld [vmem:[%s1345 + $0x120] sm:$0xff]
        %v1395 = vld [vmem:[%s1345 + $0x128] sm:$0xf]
        %v1396 = vld [vmem:[%s1345 + $0x12c] sm:$0xff]
        %v1397 = vld [vmem:[%s1345 + $0x134] sm:$0xf]
        %v1398 = vld [vmem:[%s1345 + $0x138] sm:$0xff]
        %v1399 = vld [vmem:[%s1345 + $0x140] sm:$0xf]
        %v1400 = vld [vmem:[%s1345 + $0x144] sm:$0xff]
        %v1401 = vld [vmem:[%s1345 + $0x14c] sm:$0xf]
        %v1402 = vld [vmem:[%s1345 + $0x150] sm:$0xff]
        %v1403 = vld [vmem:[%s1345 + $0x158] sm:$0xf]
        %v1404 = vld [vmem:[%s1345 + $0x15c] sm:$0xff]
        %v1405 = vld [vmem:[%s1345 + $0x164] sm:$0xf]
        %v1406 = vld [vmem:[%s1345 + $0x168] sm:$0xff]
        %v1407 = vld [vmem:[%s1345 + $0x170] sm:$0xf]
        %v1408 = vld [vmem:[%s1345 + $0x174] sm:$0xff]
        %v1409 = vld [vmem:[%s1345 + $0x17c] sm:$0xf]
        %v1410 = vld [vmem:[%s1345 + $0x180] sm:$0xff]
        %v1411 = vld [vmem:[%s1345 + $0x188] sm:$0xf]
        %v1412 = vld [vmem:[%s1345 + $0x18c] sm:$0xff]
        %v1413 = vld [vmem:[%s1345 + $0x194] sm:$0xf]
        %v1414 = vld [vmem:[%s1345 + $0x198] sm:$0xff]
        %v1415 = vld [vmem:[%s1345 + $0x1a0] sm:$0xf]
        %v1416 = vld [vmem:[%s1345 + $0x1a4] sm:$0xff]
        %v1417 = vld [vmem:[%s1345 + $0x1ac] sm:$0xf]
        %v1420 = vunpack.c.l.b16 %v1343
        %v1421 = vunpack.c.h.b16 %v1343
        %v1422 = vunpack.c.l.b16 %v1344
        %v1423 = vpack.c.b16 %v456, %v1420
        %v1424 = vpack.c.b16 %v457, %v1421
        %v1425 = vpack.c.b16 %v458, %v1422
        %vm1426 = vcmask 1046528
        %v1427 = vrot.slane %v1423, 1
        %v1428 = vrot.slane %v465, 1
        %v1429 = vsel %vm1426, %v1427, %v1428
        %v1430 = vrot.slane %v1424, 1
        %v1431 = vrot.slane %v466, 1
        %v1432 = vsel %vm1426, %v1430, %v1431
        %v1433 = vrot.slane %v1425, 1
        %v1434 = vrot.slane %v467, 1
        %v1435 = vsel %vm1426, %v1433, %v1434
        %v1510 = vunpack.c.l.b16 %v1346
        %v1511 = vunpack.c.h.b16 %v1346
        %v1512 = vunpack.c.l.b16 %v1347
        %v1513 = vunpack.c.l.b16 %v1348
        %v1514 = vunpack.c.h.b16 %v1348
        %v1515 = vunpack.c.l.b16 %v1349
        %v1516 = vunpack.c.l.b16 %v1350
        %v1517 = vunpack.c.h.b16 %v1350
        %v1518 = vunpack.c.l.b16 %v1351
        %v1519 = vunpack.c.l.b16 %v1352
        %v1520 = vunpack.c.h.b16 %v1352
        %v1521 = vunpack.c.l.b16 %v1353
        %v1522 = vunpack.c.l.b16 %v1354
        %v1523 = vunpack.c.h.b16 %v1354
        %v1524 = vunpack.c.l.b16 %v1355
        %v1525 = vunpack.c.l.b16 %v1356
        %v1526 = vunpack.c.h.b16 %v1356
        %v1527 = vunpack.c.l.b16 %v1357
        %v1528 = vunpack.c.l.b16 %v1358
        %v1529 = vunpack.c.h.b16 %v1358
        %v1530 = vunpack.c.l.b16 %v1359
        %v1531 = vunpack.c.l.b16 %v1360
        %v1532 = vunpack.c.h.b16 %v1360
        %v1533 = vunpack.c.l.b16 %v1361
        %v1534 = vunpack.c.l.b16 %v1362
        %v1535 = vunpack.c.h.b16 %v1362
        %v1536 = vunpack.c.l.b16 %v1363
        %v1537 = vunpack.c.l.b16 %v1364
        %v1538 = vunpack.c.h.b16 %v1364
        %v1539 = vunpack.c.l.b16 %v1365
        %v1540 = vunpack.c.l.b16 %v1366
        %v1541 = vunpack.c.h.b16 %v1366
        %v1542 = vunpack.c.l.b16 %v1367
        %v1543 = vunpack.c.l.b16 %v1368
        %v1544 = vunpack.c.h.b16 %v1368
        %v1545 = vunpack.c.l.b16 %v1369
        %v1546 = vunpack.c.l.b16 %v1370
        %v1547 = vunpack.c.h.b16 %v1370
        %v1548 = vunpack.c.l.b16 %v1371
        %v1549 = vunpack.c.l.b16 %v1372
        %v1550 = vunpack.c.h.b16 %v1372
        %v1551 = vunpack.c.l.b16 %v1373
        %v1552 = vunpack.c.l.b16 %v1374
        %v1553 = vunpack.c.h.b16 %v1374
        %v1554 = vunpack.c.l.b16 %v1375
        %v1555 = vunpack.c.l.b16 %v1376
        %v1556 = vunpack.c.h.b16 %v1376
        %v1557 = vunpack.c.l.b16 %v1377
        %v1558 = vunpack.c.l.b16 %v1378
        %v1559 = vunpack.c.h.b16 %v1378
        %v1560 = vunpack.c.l.b16 %v1379
        %v1561 = vunpack.c.l.b16 %v1380
        %v1562 = vunpack.c.h.b16 %v1380
        %v1563 = vunpack.c.l.b16 %v1381
        %v1564 = vunpack.c.l.b16 %v1382
        %v1565 = vunpack.c.h.b16 %v1382
        %v1566 = vunpack.c.l.b16 %v1383
        %v1567 = vunpack.c.l.b16 %v1384
        %v1568 = vunpack.c.h.b16 %v1384
        %v1569 = vunpack.c.l.b16 %v1385
        %v1570 = vunpack.c.l.b16 %v1386
        %v1571 = vunpack.c.h.b16 %v1386
        %v1572 = vunpack.c.l.b16 %v1387
        %v1573 = vunpack.c.l.b16 %v1388
        %v1574 = vunpack.c.h.b16 %v1388
        %v1575 = vunpack.c.l.b16 %v1389
        %v1576 = vunpack.c.l.b16 %v1390
        %v1577 = vunpack.c.h.b16 %v1390
        %v1578 = vunpack.c.l.b16 %v1391
        %v1579 = vunpack.c.l.b16 %v1392
        %v1580 = vunpack.c.h.b16 %v1392
        %v1581 = vunpack.c.l.b16 %v1393
        %v1582 = vunpack.c.l.b16 %v1394
        %v1583 = vunpack.c.h.b16 %v1394
        %v1584 = vunpack.c.l.b16 %v1395
        %v1585 = vunpack.c.l.b16 %v1396
        %v1586 = vunpack.c.h.b16 %v1396
        %v1587 = vunpack.c.l.b16 %v1397
        %v1588 = vunpack.c.l.b16 %v1398
        %v1589 = vunpack.c.h.b16 %v1398
        %v1590 = vunpack.c.l.b16 %v1399
        %v1591 = vunpack.c.l.b16 %v1400
        %v1592 = vunpack.c.h.b16 %v1400
        %v1593 = vunpack.c.l.b16 %v1401
        %v1594 = vunpack.c.l.b16 %v1402
        %v1595 = vunpack.c.h.b16 %v1402
        %v1596 = vunpack.c.l.b16 %v1403
        %v1597 = vunpack.c.l.b16 %v1404
        %v1598 = vunpack.c.h.b16 %v1404
        %v1599 = vunpack.c.l.b16 %v1405
        %v1600 = vunpack.c.l.b16 %v1406
        %v1601 = vunpack.c.h.b16 %v1406
        %v1602 = vunpack.c.l.b16 %v1407
        %v1603 = vunpack.c.l.b16 %v1408
        %v1604 = vunpack.c.h.b16 %v1408
        %v1605 = vunpack.c.l.b16 %v1409
        %v1606 = vunpack.c.l.b16 %v1410
        %v1607 = vunpack.c.h.b16 %v1410
        %v1608 = vunpack.c.l.b16 %v1411
        %v1609 = vunpack.c.l.b16 %v1412
        %v1610 = vunpack.c.h.b16 %v1412
        %v1611 = vunpack.c.l.b16 %v1413
        %v1612 = vunpack.c.l.b16 %v1414
        %v1613 = vunpack.c.h.b16 %v1414
        %v1614 = vunpack.c.l.b16 %v1415
        %v1615 = vunpack.c.l.b16 %v1416
        %v1616 = vunpack.c.h.b16 %v1416
        %v1617 = vunpack.c.l.b16 %v1417
        %v1618 = vpack.c.b16 %v1513, %v1510
        %v1619 = vpack.c.b16 %v1514, %v1511
        %v1620 = vpack.c.b16 %v1515, %v1512
        %v1621 = vpack.c.b16 %v1519, %v1516
        %v1622 = vpack.c.b16 %v1520, %v1517
        %v1623 = vpack.c.b16 %v1521, %v1518
        %v1624 = vpack.c.b16 %v1525, %v1522
        %v1625 = vpack.c.b16 %v1526, %v1523
        %v1626 = vpack.c.b16 %v1527, %v1524
        %v1627 = vpack.c.b16 %v1531, %v1528
        %v1628 = vpack.c.b16 %v1532, %v1529
        %v1629 = vpack.c.b16 %v1533, %v1530
        %v1630 = vpack.c.b16 %v1537, %v1534
        %v1631 = vpack.c.b16 %v1538, %v1535
        %v1632 = vpack.c.b16 %v1539, %v1536
        %v1633 = vpack.c.b16 %v1543, %v1540
        %v1634 = vpack.c.b16 %v1544, %v1541
        %v1635 = vpack.c.b16 %v1545, %v1542
        %v1636 = vpack.c.b16 %v1549, %v1546
        %v1637 = vpack.c.b16 %v1550, %v1547
        %v1638 = vpack.c.b16 %v1551, %v1548
        %v1639 = vpack.c.b16 %v1555, %v1552
        %v1640 = vpack.c.b16 %v1556, %v1553
        %v1641 = vpack.c.b16 %v1557, %v1554
        %v1642 = vpack.c.b16 %v1561, %v1558
        %v1643 = vpack.c.b16 %v1562, %v1559
        %v1644 = vpack.c.b16 %v1563, %v1560
        %v1645 = vpack.c.b16 %v1567, %v1564
        %v1646 = vpack.c.b16 %v1568, %v1565
        %v1647 = vpack.c.b16 %v1569, %v1566
        %v1648 = vpack.c.b16 %v1573, %v1570
        %v1649 = vpack.c.b16 %v1574, %v1571
        %v1650 = vpack.c.b16 %v1575, %v1572
        %v1651 = vpack.c.b16 %v1579, %v1576
        %v1652 = vpack.c.b16 %v1580, %v1577
        %v1653 = vpack.c.b16 %v1581, %v1578
        %v1654 = vpack.c.b16 %v1585, %v1582
        %v1655 = vpack.c.b16 %v1586, %v1583
        %v1656 = vpack.c.b16 %v1587, %v1584
        %v1657 = vpack.c.b16 %v1591, %v1588
        %v1658 = vpack.c.b16 %v1592, %v1589
        %v1659 = vpack.c.b16 %v1593, %v1590
        %v1660 = vpack.c.b16 %v1597, %v1594
        %v1661 = vpack.c.b16 %v1598, %v1595
        %v1662 = vpack.c.b16 %v1599, %v1596
        %v1663 = vpack.c.b16 %v1603, %v1600
        %v1664 = vpack.c.b16 %v1604, %v1601
        %v1665 = vpack.c.b16 %v1605, %v1602
        %v1666 = vpack.c.b16 %v1609, %v1606
        %v1667 = vpack.c.b16 %v1610, %v1607
        %v1668 = vpack.c.b16 %v1611, %v1608
        %v1669 = vpack.c.b16 %v1615, %v1612
        %v1670 = vpack.c.b16 %v1616, %v1613
        %v1671 = vpack.c.b16 %v1617, %v1614
        %v1727 = vsel %vm795, %v1435, 0
        %1729 = vmatpush.bf16.msra.mxu0 %v1639
        %1730 = vmatpush.bf16.msra.mxu0 %v1636
        %1731 = vmatpush.bf16.msra.mxu0 %v1633
        %1732 = vmatpush.bf16.msra.mxu0 %v1630
        %1733 = vmatpush.bf16.msra.mxu0 %v1627
        %1734 = vmatpush.bf16.msra.mxu0 %v1624
        %1735 = vmatpush.bf16.msra.mxu0 %v1621
        %1736 = vmatpush.bf16.msra.mxu0 %v1618
        %1737 = vmatmul.bf16.gmra.mxu0 %v1429
        %v1738 = vpop.f32.mrf.mxu0
        %v1739 = vadd.f32 0.0, %v1738
        %v1740 = vpop.f32.mrf.mxu0
        %v1741 = vadd.f32 0.0, %v1740
        %1742 = vdwg.mxu0
        %1743 = vmatpush.bf16.msra.mxu0 %v1663
        %1744 = vmatpush.bf16.msra.mxu0 %v1660
        %1745 = vmatpush.bf16.msra.mxu0 %v1657
        %1746 = vmatpush.bf16.msra.mxu0 %v1654
        %1747 = vmatpush.bf16.msra.mxu0 %v1651
        %1748 = vmatpush.bf16.msra.mxu0 %v1648
        %1749 = vmatpush.bf16.msra.mxu0 %v1645
        %1750 = vmatpush.bf16.msra.mxu0 %v1642
        %1751 = vmatmul.bf16.gmra.mxu0 %v1432
        %v1752 = vpop.f32.mrf.mxu0
        %v1753 = vadd.f32 %v1739, %v1752
        %v1754 = vpop.f32.mrf.mxu0
        %v1755 = vadd.f32 %v1741, %v1754
        %1756 = vdwg.mxu0
        %1757 = vmatpush.bf16.msra.mxu0 0
        %1758 = vmatpush.bf16.msra.mxu0 0
        %1759 = vmatpush.bf16.msra.mxu0 0
        %1760 = vmatpush.bf16.msra.mxu0 0
        %1761 = vmatpush.bf16.msra.mxu0 0
        %1762 = vmatpush.bf16.msra.mxu0 0
        %1763 = vmatpush.bf16.msra.mxu0 %v1669
        %1764 = vmatpush.bf16.msra.mxu0 %v1666
        %1765 = vmatmul.bf16.gmra.mxu0 %v1727
        %v1766 = vpop.f32.mrf.mxu0
        %v1767 = vadd.f32 %v1753, %v1766
        %v1768 = vpop.f32.mrf.mxu0
        %v1769 = vadd.f32 %v1755, %v1768
        %1770 = vdwg.mxu0
        %1771 = vmatpush.bf16.msra.mxu0 %v1640
        %1772 = vmatpush.bf16.msra.mxu0 %v1637
        %1773 = vmatpush.bf16.msra.mxu0 %v1634
        %1774 = vmatpush.bf16.msra.mxu0 %v1631
        %1775 = vmatpush.bf16.msra.mxu0 %v1628
        %1776 = vmatpush.bf16.msra.mxu0 %v1625
        %1777 = vmatpush.bf16.msra.mxu0 %v1622
        %1778 = vmatpush.bf16.msra.mxu0 %v1619
        %1779 = vmatmul.bf16.gmra.mxu0 %v1429
        %v1780 = vpop.f32.mrf.mxu0
        %v1781 = vadd.f32 0.0, %v1780
        %v1782 = vpop.f32.mrf.mxu0
        %v1783 = vadd.f32 0.0, %v1782
        %1784 = vdwg.mxu0
        %1785 = vmatpush.bf16.msra.mxu0 %v1664
        %1786 = vmatpush.bf16.msra.mxu0 %v1661
        %1787 = vmatpush.bf16.msra.mxu0 %v1658
        %1788 = vmatpush.bf16.msra.mxu0 %v1655
        %1789 = vmatpush.bf16.msra.mxu0 %v1652
        %1790 = vmatpush.bf16.msra.mxu0 %v1649
        %1791 = vmatpush.bf16.msra.mxu0 %v1646
        %1792 = vmatpush.bf16.msra.mxu0 %v1643
        %1793 = vmatmul.bf16.gmra.mxu0 %v1432
        %v1794 = vpop.f32.mrf.mxu0
        %v1795 = vadd.f32 %v1781, %v1794
        %v1796 = vpop.f32.mrf.mxu0
        %v1797 = vadd.f32 %v1783, %v1796
        %1798 = vdwg.mxu0
        %1799 = vmatpush.bf16.msra.mxu0 0
        %1800 = vmatpush.bf16.msra.mxu0 0
        %1801 = vmatpush.bf16.msra.mxu0 0
        %1802 = vmatpush.bf16.msra.mxu0 0
        %1803 = vmatpush.bf16.msra.mxu0 0
        %1804 = vmatpush.bf16.msra.mxu0 0
        %1805 = vmatpush.bf16.msra.mxu0 %v1670
        %1806 = vmatpush.bf16.msra.mxu0 %v1667
        %1807 = vmatmul.bf16.gmra.mxu0 %v1727
        %v1808 = vpop.f32.mrf.mxu0
        %v1809 = vadd.f32 %v1795, %v1808
        %v1810 = vpop.f32.mrf.mxu0
        %v1811 = vadd.f32 %v1797, %v1810
        %1812 = vdwg.mxu0
        %1813 = vmatpush.bf16.msra.mxu0 %v1641
        %1814 = vmatpush.bf16.msra.mxu0 %v1638
        %1815 = vmatpush.bf16.msra.mxu0 %v1635
        %1816 = vmatpush.bf16.msra.mxu0 %v1632
        %1817 = vmatpush.bf16.msra.mxu0 %v1629
        %1818 = vmatpush.bf16.msra.mxu0 %v1626
        %1819 = vmatpush.bf16.msra.mxu0 %v1623
        %1820 = vmatpush.bf16.msra.mxu0 %v1620
        %1821 = vmatmul.bf16.gmra.mxu0 %v1429
        %v1822 = vpop.f32.mrf.mxu0
        %v1823 = vadd.f32 0.0, %v1822
        %v1824 = vpop.f32.mrf.mxu0
        %v1825 = vadd.f32 0.0, %v1824
        %1826 = vdwg.mxu0
        %1827 = vmatpush.bf16.msra.mxu0 %v1665
        %1828 = vmatpush.bf16.msra.mxu0 %v1662
        %1829 = vmatpush.bf16.msra.mxu0 %v1659
        %1830 = vmatpush.bf16.msra.mxu0 %v1656
        %1831 = vmatpush.bf16.msra.mxu0 %v1653
        %1832 = vmatpush.bf16.msra.mxu0 %v1650
        %1833 = vmatpush.bf16.msra.mxu0 %v1647
        %1834 = vmatpush.bf16.msra.mxu0 %v1644
        %1835 = vmatmul.bf16.gmra.mxu0 %v1432
        %v1836 = vpop.f32.mrf.mxu0
        %v1837 = vadd.f32 %v1823, %v1836
        %v1838 = vpop.f32.mrf.mxu0
        %v1839 = vadd.f32 %v1825, %v1838
        %1840 = vdwg.mxu0
        %1841 = vmatpush.bf16.msra.mxu0 0
        %1842 = vmatpush.bf16.msra.mxu0 0
        %1843 = vmatpush.bf16.msra.mxu0 0
        %1844 = vmatpush.bf16.msra.mxu0 0
        %1845 = vmatpush.bf16.msra.mxu0 0
        %1846 = vmatpush.bf16.msra.mxu0 0
        %1847 = vmatpush.bf16.msra.mxu0 %v1671
        %1848 = vmatpush.bf16.msra.mxu0 %v1668
        %1849 = vmatmul.bf16.gmra.mxu0 %v1727
        %v1850 = vpop.f32.mrf.mxu0
        %v1851 = vadd.f32 %v1837, %v1850
        %v1852 = vpop.f32.mrf.mxu0
        %v1853 = vadd.f32 %v1839, %v1852
        %1854 = vdwg.mxu0
        %v1855 = vadd.f32 %v1255, %v1767
        %v1856 = vadd.f32 %v1297, %v1809
        %v1857 = vadd.f32 %v1339, %v1851
        %v1858 = vadd.f32 %v1257, %v1769
        %v1859 = vadd.f32 %v1299, %v1811
        %v1860 = vadd.f32 %v1341, %v1853
        %v1861 = vld [vmem:[%s3] sm:$0x7]
        %v1863 = vperm.slane %v1861, 0
        %v1864 = vperm.slane %v1861, 1
        %v1865 = vperm.slane %v1861, 2
        %v1869 = vadd.f32 %v1855, %v1863
        %v1870 = vadd.f32 %v1856, %v1864
        %v1871 = vadd.f32 %v1857, %v1865
        %v1872 = vadd.f32 %v1858, %v1863
        %v1873 = vadd.f32 %v1859, %v1864
        %v1874 = vadd.f32 %v1860, %v1865
        %v1875 = vmax.f32 %v1869, 0.0
        %v1876 = vmax.f32 %v1870, 0.0
        %v1877 = vmax.f32 %v1871, 0.0
        %v1878 = vmax.f32 %v1872, 0.0
        %v1879 = vmax.f32 %v1873, 0.0
        %v1880 = vmax.f32 %v1874, 0.0
        %v1881 = vpack.c.bf16 %v1876, %v1875
        %v1882 = vpack.c.bf16 %v1877, %v1877
        %v1883 = vpack.c.bf16 %v1879, %v1878
        %v1884 = vpack.c.bf16 %v1880, %v1880
        %vm1885 = vsmask.f32 4368
        %vm1886 = vmor %vm252, %vm1885
        %v1888 = vshrl.u32 %v1881, 16
        %v1890 = vrot.slane %v1888, 7
        %v1891 = vshll.u32 %v1881, 16
        %v1893 = vor.u32 %v1890, %v1891
        %v1895 = vshrl.u32 %v1882, 16
        %v1897 = vrot.slane %v1895, 7
        %v1898 = vshll.u32 %v1882, 16
        %v1900 = vor.u32 %v1897, %v1898
        %v1901 = vrot.slane %v1890, 4
        %v1903 = vshrl.u32 %v1883, 16
        %v1905 = vrot.slane %v1903, 7
        %v1906 = vshll.u32 %v1883, 16
        %v1908 = vor.u32 %v1905, %v1906
        %v1909 = vsel %vm1886, %v1901, %v1908
        %v1910 = vrot.slane %v1897, 4
        %v1912 = vshrl.u32 %v1884, 16
        %v1914 = vrot.slane %v1912, 7
        %v1915 = vshll.u32 %v1884, 16
        %v1917 = vor.u32 %v1914, %v1915
        %v1918 = vsel %vm1886, %v1910, %v1917
        %v1919 = vrot.slane %v1905, 4
        %v1920 = vrot.slane %v1914, 4
        %vm1927 = vcmask 1043456
        %vm1928 = vsmask.f32 7938
        %vm1929 = vmand %vm1927, %vm1928
        %vm1930 = vcmask 1047556
        %vm1931 = vsmask.f32 7954
        %vm1932 = vmand %vm1930, %vm1931
        %vm1933 = vmor %vm1932, %vm1929
        %v1934 = vld [vmem:[#allocation2] sm:$0xff]
        %v1935 = vsel %vm1933, %v1893, %v1934
        %1936 = vst [vmem:[#allocation2] sm:$0xff] %v1935
        %vm1937 = vcmask 257024
        %vm1938 = vmand %vm1937, %vm1928
        %v1939 = vld [vmem:[#allocation2 + $0x8] sm:$0xf]
        %v1940 = vsel %vm1938, %v1900, %v1939
        %1941 = vst [vmem:[#allocation2 + $0x8] sm:$0xf] %v1940
        %1942 = vst [vmem:[#allocation2 + $0xc] sm:$0xff] %v1909
        %vm1943 = vcmask 257024
        %1944 = vst.msk [vmem:[#allocation2 + $0x14] sm:$0xf] %vm1943, %v1918
        %v1945 = vld [vmem:[#allocation2 + $0x18] sm:$0x11]
        %v1946 = vsel %vm257, %v1919, %v1945
        %1947 = vst [vmem:[#allocation2 + $0x18] sm:$0x11] %v1946
        %v1948 = vld [vmem:[#allocation2 + $0x20] sm:$0x1]
        %v1949 = vsel %vm262, %v1920, %v1948
        %1950 = vst [vmem:[#allocation2 + $0x20] sm:$0x1] %v1949
        %v1951 = vld [vmem:[%s249 + $0x18] sm:$0xee]
        %v1952 = vld [vmem:[%s249 + $0x20] sm:$0xe]
        %v1953 = vld [vmem:[%s249 + $0x24] sm:$0xff]
        %v1954 = vld [vmem:[%s249 + $0x2c] sm:$0xf]
        %v1955 = vld [vmem:[%s249 + $0x30] sm:$0x11]
        %v1956 = vld [vmem:[%s249 + $0x38] sm:$0x1]
        %v1957 = vld [vmem:[%s2] sm:$0xff]
        %v1958 = vld [vmem:[%s2 + $0x8] sm:$0xf]
        %v1959 = vld [vmem:[%s2 + $0xc] sm:$0xff]
        %v1960 = vld [vmem:[%s2 + $0x14] sm:$0xf]
        %v1961 = vld [vmem:[%s2 + $0x18] sm:$0xff]
        %v1962 = vld [vmem:[%s2 + $0x20] sm:$0xf]
        %v1963 = vld [vmem:[%s2 + $0x24] sm:$0xff]
        %v1964 = vld [vmem:[%s2 + $0x2c] sm:$0xf]
        %v1965 = vld [vmem:[%s2 + $0x30] sm:$0xff]
        %v1966 = vld [vmem:[%s2 + $0x38] sm:$0xf]
        %v1967 = vld [vmem:[%s2 + $0x3c] sm:$0xff]
        %v1968 = vld [vmem:[%s2 + $0x44] sm:$0xf]
        %v1969 = vld [vmem:[%s2 + $0x48] sm:$0xff]
        %v1970 = vld [vmem:[%s2 + $0x50] sm:$0xf]
        %v1971 = vld [vmem:[%s2 + $0x54] sm:$0xff]
        %v1972 = vld [vmem:[%s2 + $0x5c] sm:$0xf]
        %v1973 = vld [vmem:[%s2 + $0x60] sm:$0xff]
        %v1974 = vld [vmem:[%s2 + $0x68] sm:$0xf]
        %v1975 = vld [vmem:[%s2 + $0x6c] sm:$0xff]
        %v1976 = vld [vmem:[%s2 + $0x74] sm:$0xf]
        %v1977 = vld [vmem:[%s2 + $0x78] sm:$0xff]
        %v1978 = vld [vmem:[%s2 + $0x80] sm:$0xf]
        %v1979 = vld [vmem:[%s2 + $0x84] sm:$0xff]
        %v1980 = vld [vmem:[%s2 + $0x8c] sm:$0xf]
        %v1981 = vld [vmem:[%s2 + $0x90] sm:$0xff]
        %v1982 = vld [vmem:[%s2 + $0x98] sm:$0xf]
        %v1983 = vld [vmem:[%s2 + $0x9c] sm:$0xff]
        %v1984 = vld [vmem:[%s2 + $0xa4] sm:$0xf]
        %v1985 = vld [vmem:[%s2 + $0xa8] sm:$0xff]
        %v1986 = vld [vmem:[%s2 + $0xb0] sm:$0xf]
        %v1987 = vld [vmem:[%s2 + $0xb4] sm:$0xff]
        %v1988 = vld [vmem:[%s2 + $0xbc] sm:$0xf]
        %v1989 = vld [vmem:[%s2 + $0xc0] sm:$0xff]
        %v1990 = vld [vmem:[%s2 + $0xc8] sm:$0xf]
        %v1991 = vld [vmem:[%s2 + $0xcc] sm:$0xff]
        %v1992 = vld [vmem:[%s2 + $0xd4] sm:$0xf]
        %v1993 = vld [vmem:[%s2 + $0xd8] sm:$0xff]
        %v1994 = vld [vmem:[%s2 + $0xe0] sm:$0xf]
        %v1995 = vld [vmem:[%s2 + $0xe4] sm:$0xff]
        %v1996 = vld [vmem:[%s2 + $0xec] sm:$0xf]
        %v1997 = vld [vmem:[%s2 + $0xf0] sm:$0xff]
        %v1998 = vld [vmem:[%s2 + $0xf8] sm:$0xf]
        %v1999 = vld [vmem:[%s2 + $0xfc] sm:$0xff]
        %v2000 = vld [vmem:[%s2 + $0x104] sm:$0xf]
        %v2001 = vld [vmem:[%s2 + $0x108] sm:$0xff]
        %v2002 = vld [vmem:[%s2 + $0x110] sm:$0xf]
        %v2003 = vld [vmem:[%s2 + $0x114] sm:$0xff]
        %v2004 = vld [vmem:[%s2 + $0x11c] sm:$0xf]
        %v2005 = vld [vmem:[%s2 + $0x120] sm:$0xff]
        %v2006 = vld [vmem:[%s2 + $0x128] sm:$0xf]
        %v2007 = vld [vmem:[%s2 + $0x12c] sm:$0xff]
        %v2008 = vld [vmem:[%s2 + $0x134] sm:$0xf]
        %v2009 = vld [vmem:[%s2 + $0x138] sm:$0xff]
        %v2010 = vld [vmem:[%s2 + $0x140] sm:$0xf]
        %v2011 = vld [vmem:[%s2 + $0x144] sm:$0xff]
        %v2012 = vld [vmem:[%s2 + $0x14c] sm:$0xf]
        %v2013 = vld [vmem:[%s2 + $0x150] sm:$0xff]
        %v2014 = vld [vmem:[%s2 + $0x158] sm:$0xf]
        %v2015 = vld [vmem:[%s2 + $0x15c] sm:$0xff]
        %v2016 = vld [vmem:[%s2 + $0x164] sm:$0xf]
        %v2017 = vld [vmem:[%s2 + $0x168] sm:$0xff]
        %v2018 = vld [vmem:[%s2 + $0x170] sm:$0xf]
        %v2019 = vld [vmem:[%s2 + $0x174] sm:$0xff]
        %v2020 = vld [vmem:[%s2 + $0x17c] sm:$0xf]
        %v2021 = vld [vmem:[%s2 + $0x180] sm:$0xff]
        %v2022 = vld [vmem:[%s2 + $0x188] sm:$0xf]
        %v2023 = vld [vmem:[%s2 + $0x18c] sm:$0xff]
        %v2024 = vld [vmem:[%s2 + $0x194] sm:$0xf]
        %v2025 = vld [vmem:[%s2 + $0x198] sm:$0xff]
        %v2026 = vld [vmem:[%s2 + $0x1a0] sm:$0xf]
        %v2027 = vld [vmem:[%s2 + $0x1a4] sm:$0xff]
        %v2028 = vld [vmem:[%s2 + $0x1ac] sm:$0xf]
        %v2029 = vld [vmem:[%s249 + $0x30] sm:$0x33]
        %v2030 = vld [vmem:[%s249 + $0x38] sm:$0x3]
        %v2031 = vld [vmem:[%s374] sm:$0xff]
        %v2032 = vld [vmem:[%s374 + $0x8] sm:$0xf]
        %v2033 = vld [vmem:[%s374 + $0xc] sm:$0xff]
        %v2034 = vld [vmem:[%s374 + $0x14] sm:$0xf]
        %v2035 = vld [vmem:[%s374 + $0x18] sm:$0xff]
        %v2036 = vld [vmem:[%s374 + $0x20] sm:$0xf]
        %v2037 = vld [vmem:[%s374 + $0x24] sm:$0xff]
        %v2038 = vld [vmem:[%s374 + $0x2c] sm:$0xf]
        %v2039 = vld [vmem:[%s374 + $0x30] sm:$0xff]
        %v2040 = vld [vmem:[%s374 + $0x38] sm:$0xf]
        %v2041 = vld [vmem:[%s374 + $0x3c] sm:$0xff]
        %v2042 = vld [vmem:[%s374 + $0x44] sm:$0xf]
        %v2043 = vld [vmem:[%s374 + $0x48] sm:$0xff]
        %v2044 = vld [vmem:[%s374 + $0x50] sm:$0xf]
        %v2045 = vld [vmem:[%s374 + $0x54] sm:$0xff]
        %v2046 = vld [vmem:[%s374 + $0x5c] sm:$0xf]
        %v2047 = vld [vmem:[%s374 + $0x60] sm:$0xff]
        %v2048 = vld [vmem:[%s374 + $0x68] sm:$0xf]
        %v2049 = vld [vmem:[%s374 + $0x6c] sm:$0xff]
        %v2050 = vld [vmem:[%s374 + $0x74] sm:$0xf]
        %v2051 = vld [vmem:[%s374 + $0x78] sm:$0xff]
        %v2052 = vld [vmem:[%s374 + $0x80] sm:$0xf]
        %v2053 = vld [vmem:[%s374 + $0x84] sm:$0xff]
        %v2054 = vld [vmem:[%s374 + $0x8c] sm:$0xf]
        %v2055 = vld [vmem:[%s374 + $0x90] sm:$0xff]
        %v2056 = vld [vmem:[%s374 + $0x98] sm:$0xf]
        %v2057 = vld [vmem:[%s374 + $0x9c] sm:$0xff]
        %v2058 = vld [vmem:[%s374 + $0xa4] sm:$0xf]
        %v2059 = vld [vmem:[%s374 + $0xa8] sm:$0xff]
        %v2060 = vld [vmem:[%s374 + $0xb0] sm:$0xf]
        %v2061 = vld [vmem:[%s374 + $0xb4] sm:$0xff]
        %v2062 = vld [vmem:[%s374 + $0xbc] sm:$0xf]
        %v2063 = vld [vmem:[%s374 + $0xc0] sm:$0xff]
        %v2064 = vld [vmem:[%s374 + $0xc8] sm:$0xf]
        %v2065 = vld [vmem:[%s374 + $0xcc] sm:$0xff]
        %v2066 = vld [vmem:[%s374 + $0xd4] sm:$0xf]
        %v2067 = vld [vmem:[%s374 + $0xd8] sm:$0xff]
        %v2068 = vld [vmem:[%s374 + $0xe0] sm:$0xf]
        %v2069 = vld [vmem:[%s374 + $0xe4] sm:$0xff]
        %v2070 = vld [vmem:[%s374 + $0xec] sm:$0xf]
        %v2071 = vld [vmem:[%s374 + $0xf0] sm:$0xff]
        %v2072 = vld [vmem:[%s374 + $0xf8] sm:$0xf]
        %v2073 = vld [vmem:[%s374 + $0xfc] sm:$0xff]
        %v2074 = vld [vmem:[%s374 + $0x104] sm:$0xf]
        %v2075 = vld [vmem:[%s374 + $0x108] sm:$0xff]
        %v2076 = vld [vmem:[%s374 + $0x110] sm:$0xf]
        %v2077 = vld [vmem:[%s374 + $0x114] sm:$0xff]
        %v2078 = vld [vmem:[%s374 + $0x11c] sm:$0xf]
        %v2079 = vld [vmem:[%s374 + $0x120] sm:$0xff]
        %v2080 = vld [vmem:[%s374 + $0x128] sm:$0xf]
        %v2081 = vld [vmem:[%s374 + $0x12c] sm:$0xff]
        %v2082 = vld [vmem:[%s374 + $0x134] sm:$0xf]
        %v2083 = vld [vmem:[%s374 + $0x138] sm:$0xff]
        %v2084 = vld [vmem:[%s374 + $0x140] sm:$0xf]
        %v2085 = vld [vmem:[%s374 + $0x144] sm:$0xff]
        %v2086 = vld [vmem:[%s374 + $0x14c] sm:$0xf]
        %v2087 = vld [vmem:[%s374 + $0x150] sm:$0xff]
        %v2088 = vld [vmem:[%s374 + $0x158] sm:$0xf]
        %v2089 = vld [vmem:[%s374 + $0x15c] sm:$0xff]
        %v2090 = vld [vmem:[%s374 + $0x164] sm:$0xf]
        %v2091 = vld [vmem:[%s374 + $0x168] sm:$0xff]
        %v2092 = vld [vmem:[%s374 + $0x170] sm:$0xf]
        %v2093 = vld [vmem:[%s374 + $0x174] sm:$0xff]
        %v2094 = vld [vmem:[%s374 + $0x17c] sm:$0xf]
        %v2095 = vld [vmem:[%s374 + $0x180] sm:$0xff]
        %v2096 = vld [vmem:[%s374 + $0x188] sm:$0xf]
        %v2097 = vld [vmem:[%s374 + $0x18c] sm:$0xff]
        %v2098 = vld [vmem:[%s374 + $0x194] sm:$0xf]
        %v2099 = vld [vmem:[%s374 + $0x198] sm:$0xff]
        %v2100 = vld [vmem:[%s374 + $0x1a0] sm:$0xf]
        %v2101 = vld [vmem:[%s374 + $0x1a4] sm:$0xff]
        %v2102 = vld [vmem:[%s374 + $0x1ac] sm:$0xf]
        %v2109 = vunpack.c.l.b16 %v1951
        %v2110 = vunpack.c.h.b16 %v1951
        %v2111 = vunpack.c.l.b16 %v1952
        %v2112 = vunpack.c.l.b16 %v1953
        %v2113 = vunpack.c.h.b16 %v1953
        %v2114 = vunpack.c.l.b16 %v1954
        %v2115 = vunpack.c.l.b16 %v2029
        %v2116 = vunpack.c.h.b16 %v2029
        %v2117 = vunpack.c.l.b16 %v2030
        %v2118 = vpack.c.b16 %v2112, %v2109
        %v2119 = vpack.c.b16 %v2113, %v2110
        %v2120 = vpack.c.b16 %v2114, %v2111
        %v2121 = vpack.c.b16 %v2115, %v2115
        %v2122 = vpack.c.b16 %v2116, %v2116
        %v2123 = vpack.c.b16 %v2117, %v2117
        %vm2124 = vsmask.f32 6400
        %v2126 = vshrl.u32 %v2118, 16
        %v2128 = vrot.slane %v2126, 1
        %v2129 = vshll.u32 %v2118, 16
        %v2131 = vrot.slane %v2129, 2
        %v2132 = vor.u32 %v2128, %v2131
        %v2134 = vshrl.u32 %v2121, 16
        %v2136 = vrot.slane %v2134, 1
        %v2137 = vshll.u32 %v2121, 16
        %v2139 = vrot.slane %v2137, 2
        %v2140 = vor.u32 %v2136, %v2139
        %v2141 = vsel %vm2124, %v2132, %v2140
        %v2143 = vshrl.u32 %v2119, 16
        %v2145 = vrot.slane %v2143, 1
        %v2146 = vshll.u32 %v2119, 16
        %v2148 = vrot.slane %v2146, 2
        %v2149 = vor.u32 %v2145, %v2148
        %v2151 = vshrl.u32 %v2122, 16
        %v2153 = vrot.slane %v2151, 1
        %v2154 = vshll.u32 %v2122, 16
        %v2156 = vrot.slane %v2154, 2
        %v2157 = vor.u32 %v2153, %v2156
        %v2158 = vsel %vm2124, %v2149, %v2157
        %v2160 = vshrl.u32 %v2120, 16
        %v2162 = vrot.slane %v2160, 1
        %v2163 = vshll.u32 %v2120, 16
        %v2165 = vrot.slane %v2163, 2
        %v2166 = vor.u32 %v2162, %v2165
        %v2168 = vshrl.u32 %v2123, 16
        %v2170 = vrot.slane %v2168, 1
        %v2171 = vshll.u32 %v2123, 16
        %v2173 = vrot.slane %v2171, 2
        %v2174 = vor.u32 %v2170, %v2173
        %v2175 = vsel %vm2124, %v2166, %v2174
        %v2250 = vunpack.c.l.b16 %v2031
        %v2251 = vunpack.c.h.b16 %v2031
        %v2252 = vunpack.c.l.b16 %v2032
        %v2253 = vunpack.c.l.b16 %v2033
        %v2254 = vunpack.c.h.b16 %v2033
        %v2255 = vunpack.c.l.b16 %v2034
        %v2256 = vunpack.c.l.b16 %v2035
        %v2257 = vunpack.c.h.b16 %v2035
        %v2258 = vunpack.c.l.b16 %v2036
        %v2259 = vunpack.c.l.b16 %v2037
        %v2260 = vunpack.c.h.b16 %v2037
        %v2261 = vunpack.c.l.b16 %v2038
        %v2262 = vunpack.c.l.b16 %v2039
        %v2263 = vunpack.c.h.b16 %v2039
        %v2264 = vunpack.c.l.b16 %v2040
        %v2265 = vunpack.c.l.b16 %v2041
        %v2266 = vunpack.c.h.b16 %v2041
        %v2267 = vunpack.c.l.b16 %v2042
        %v2268 = vunpack.c.l.b16 %v2043
        %v2269 = vunpack.c.h.b16 %v2043
        %v2270 = vunpack.c.l.b16 %v2044
        %v2271 = vunpack.c.l.b16 %v2045
        %v2272 = vunpack.c.h.b16 %v2045
        %v2273 = vunpack.c.l.b16 %v2046
        %v2274 = vunpack.c.l.b16 %v2047
        %v2275 = vunpack.c.h.b16 %v2047
        %v2276 = vunpack.c.l.b16 %v2048
        %v2277 = vunpack.c.l.b16 %v2049
        %v2278 = vunpack.c.h.b16 %v2049
        %v2279 = vunpack.c.l.b16 %v2050
        %v2280 = vunpack.c.l.b16 %v2051
        %v2281 = vunpack.c.h.b16 %v2051
        %v2282 = vunpack.c.l.b16 %v2052
        %v2283 = vunpack.c.l.b16 %v2053
        %v2284 = vunpack.c.h.b16 %v2053
        %v2285 = vunpack.c.l.b16 %v2054
        %v2286 = vunpack.c.l.b16 %v2055
        %v2287 = vunpack.c.h.b16 %v2055
        %v2288 = vunpack.c.l.b16 %v2056
        %v2289 = vunpack.c.l.b16 %v2057
        %v2290 = vunpack.c.h.b16 %v2057
        %v2291 = vunpack.c.l.b16 %v2058
        %v2292 = vunpack.c.l.b16 %v2059
        %v2293 = vunpack.c.h.b16 %v2059
        %v2294 = vunpack.c.l.b16 %v2060
        %v2295 = vunpack.c.l.b16 %v2061
        %v2296 = vunpack.c.h.b16 %v2061
        %v2297 = vunpack.c.l.b16 %v2062
        %v2298 = vunpack.c.l.b16 %v2063
        %v2299 = vunpack.c.h.b16 %v2063
        %v2300 = vunpack.c.l.b16 %v2064
        %v2301 = vunpack.c.l.b16 %v2065
        %v2302 = vunpack.c.h.b16 %v2065
        %v2303 = vunpack.c.l.b16 %v2066
        %v2304 = vunpack.c.l.b16 %v2067
        %v2305 = vunpack.c.h.b16 %v2067
        %v2306 = vunpack.c.l.b16 %v2068
        %v2307 = vunpack.c.l.b16 %v2069
        %v2308 = vunpack.c.h.b16 %v2069
        %v2309 = vunpack.c.l.b16 %v2070
        %v2310 = vunpack.c.l.b16 %v2071
        %v2311 = vunpack.c.h.b16 %v2071
        %v2312 = vunpack.c.l.b16 %v2072
        %v2313 = vunpack.c.l.b16 %v2073
        %v2314 = vunpack.c.h.b16 %v2073
        %v2315 = vunpack.c.l.b16 %v2074
        %v2316 = vunpack.c.l.b16 %v2075
        %v2317 = vunpack.c.h.b16 %v2075
        %v2318 = vunpack.c.l.b16 %v2076
        %v2319 = vunpack.c.l.b16 %v2077
        %v2320 = vunpack.c.h.b16 %v2077
        %v2321 = vunpack.c.l.b16 %v2078
        %v2322 = vunpack.c.l.b16 %v2079
        %v2323 = vunpack.c.h.b16 %v2079
        %v2324 = vunpack.c.l.b16 %v2080
        %v2325 = vunpack.c.l.b16 %v2081
        %v2326 = vunpack.c.h.b16 %v2081
        %v2327 = vunpack.c.l.b16 %v2082
        %v2328 = vunpack.c.l.b16 %v2083
        %v2329 = vunpack.c.h.b16 %v2083
        %v2330 = vunpack.c.l.b16 %v2084
        %v2331 = vunpack.c.l.b16 %v2085
        %v2332 = vunpack.c.h.b16 %v2085
        %v2333 = vunpack.c.l.b16 %v2086
        %v2334 = vunpack.c.l.b16 %v2087
        %v2335 = vunpack.c.h.b16 %v2087
        %v2336 = vunpack.c.l.b16 %v2088
        %v2337 = vunpack.c.l.b16 %v2089
        %v2338 = vunpack.c.h.b16 %v2089
        %v2339 = vunpack.c.l.b16 %v2090
        %v2340 = vunpack.c.l.b16 %v2091
        %v2341 = vunpack.c.h.b16 %v2091
        %v2342 = vunpack.c.l.b16 %v2092
        %v2343 = vunpack.c.l.b16 %v2093
        %v2344 = vunpack.c.h.b16 %v2093
        %v2345 = vunpack.c.l.b16 %v2094
        %v2346 = vunpack.c.l.b16 %v2095
        %v2347 = vunpack.c.h.b16 %v2095
        %v2348 = vunpack.c.l.b16 %v2096
        %v2349 = vunpack.c.l.b16 %v2097
        %v2350 = vunpack.c.h.b16 %v2097
        %v2351 = vunpack.c.l.b16 %v2098
        %v2352 = vunpack.c.l.b16 %v2099
        %v2353 = vunpack.c.h.b16 %v2099
        %v2354 = vunpack.c.l.b16 %v2100
        %v2355 = vunpack.c.l.b16 %v2101
        %v2356 = vunpack.c.h.b16 %v2101
        %v2357 = vunpack.c.l.b16 %v2102
        %v2358 = vpack.c.b16 %v2253, %v2250
        %v2359 = vpack.c.b16 %v2254, %v2251
        %v2360 = vpack.c.b16 %v2255, %v2252
        %v2361 = vpack.c.b16 %v2259, %v2256
        %v2362 = vpack.c.b16 %v2260, %v2257
        %v2363 = vpack.c.b16 %v2261, %v2258
        %v2364 = vpack.c.b16 %v2265, %v2262
        %v2365 = vpack.c.b16 %v2266, %v2263
        %v2366 = vpack.c.b16 %v2267, %v2264
        %v2367 = vpack.c.b16 %v2271, %v2268
        %v2368 = vpack.c.b16 %v2272, %v2269
        %v2369 = vpack.c.b16 %v2273, %v2270
        %v2370 = vpack.c.b16 %v2277, %v2274
        %v2371 = vpack.c.b16 %v2278, %v2275
        %v2372 = vpack.c.b16 %v2279, %v2276
        %v2373 = vpack.c.b16 %v2283, %v2280
        %v2374 = vpack.c.b16 %v2284, %v2281
        %v2375 = vpack.c.b16 %v2285, %v2282
        %v2376 = vpack.c.b16 %v2289, %v2286
        %v2377 = vpack.c.b16 %v2290, %v2287
        %v2378 = vpack.c.b16 %v2291, %v2288
        %v2379 = vpack.c.b16 %v2295, %v2292
        %v2380 = vpack.c.b16 %v2296, %v2293
        %v2381 = vpack.c.b16 %v2297, %v2294
        %v2382 = vpack.c.b16 %v2301, %v2298
        %v2383 = vpack.c.b16 %v2302, %v2299
        %v2384 = vpack.c.b16 %v2303, %v2300
        %v2385 = vpack.c.b16 %v2307, %v2304
        %v2386 = vpack.c.b16 %v2308, %v2305
        %v2387 = vpack.c.b16 %v2309, %v2306
        %v2388 = vpack.c.b16 %v2313, %v2310
        %v2389 = vpack.c.b16 %v2314, %v2311
        %v2390 = vpack.c.b16 %v2315, %v2312
        %v2391 = vpack.c.b16 %v2319, %v2316
        %v2392 = vpack.c.b16 %v2320, %v2317
        %v2393 = vpack.c.b16 %v2321, %v2318
        %v2394 = vpack.c.b16 %v2325, %v2322
        %v2395 = vpack.c.b16 %v2326, %v2323
        %v2396 = vpack.c.b16 %v2327, %v2324
        %v2397 = vpack.c.b16 %v2331, %v2328
        %v2398 = vpack.c.b16 %v2332, %v2329
        %v2399 = vpack.c.b16 %v2333, %v2330
        %v2400 = vpack.c.b16 %v2337, %v2334
        %v2401 = vpack.c.b16 %v2338, %v2335
        %v2402 = vpack.c.b16 %v2339, %v2336
        %v2403 = vpack.c.b16 %v2343, %v2340
        %v2404 = vpack.c.b16 %v2344, %v2341
        %v2405 = vpack.c.b16 %v2345, %v2342
        %v2406 = vpack.c.b16 %v2349, %v2346
        %v2407 = vpack.c.b16 %v2350, %v2347
        %v2408 = vpack.c.b16 %v2351, %v2348
        %v2409 = vpack.c.b16 %v2355, %v2352
        %v2410 = vpack.c.b16 %v2356, %v2353
        %v2411 = vpack.c.b16 %v2357, %v2354
        %v2467 = vsel %vm795, %v2175, 0
        %2469 = vmatpush.bf16.msra.mxu0 %v2379
        %2470 = vmatpush.bf16.msra.mxu0 %v2376
        %2471 = vmatpush.bf16.msra.mxu0 %v2373
        %2472 = vmatpush.bf16.msra.mxu0 %v2370
        %2473 = vmatpush.bf16.msra.mxu0 %v2367
        %2474 = vmatpush.bf16.msra.mxu0 %v2364
        %2475 = vmatpush.bf16.msra.mxu0 %v2361
        %2476 = vmatpush.bf16.msra.mxu0 %v2358
        %2477 = vmatmul.bf16.gmra.mxu0 %v2141
        %v2478 = vpop.f32.mrf.mxu0
        %v2479 = vadd.f32 0.0, %v2478
        %v2480 = vpop.f32.mrf.mxu0
        %v2481 = vadd.f32 0.0, %v2480
        %2482 = vdwg.mxu0
        %2483 = vmatpush.bf16.msra.mxu0 %v2403
        %2484 = vmatpush.bf16.msra.mxu0 %v2400
        %2485 = vmatpush.bf16.msra.mxu0 %v2397
        %2486 = vmatpush.bf16.msra.mxu0 %v2394
        %2487 = vmatpush.bf16.msra.mxu0 %v2391
        %2488 = vmatpush.bf16.msra.mxu0 %v2388
        %2489 = vmatpush.bf16.msra.mxu0 %v2385
        %2490 = vmatpush.bf16.msra.mxu0 %v2382
        %2491 = vmatmul.bf16.gmra.mxu0 %v2158
        %v2492 = vpop.f32.mrf.mxu0
        %v2493 = vadd.f32 %v2479, %v2492
        %v2494 = vpop.f32.mrf.mxu0
        %v2495 = vadd.f32 %v2481, %v2494
        %2496 = vdwg.mxu0
        %2497 = vmatpush.bf16.msra.mxu0 0
        %2498 = vmatpush.bf16.msra.mxu0 0
        %2499 = vmatpush.bf16.msra.mxu0 0
        %2500 = vmatpush.bf16.msra.mxu0 0
        %2501 = vmatpush.bf16.msra.mxu0 0
        %2502 = vmatpush.bf16.msra.mxu0 0
        %2503 = vmatpush.bf16.msra.mxu0 %v2409
        %2504 = vmatpush.bf16.msra.mxu0 %v2406
        %2505 = vmatmul.bf16.gmra.mxu0 %v2467
        %v2506 = vpop.f32.mrf.mxu0
        %v2507 = vadd.f32 %v2493, %v2506
        %v2508 = vpop.f32.mrf.mxu0
        %v2509 = vadd.f32 %v2495, %v2508
        %2510 = vdwg.mxu0
        %2511 = vmatpush.bf16.msra.mxu0 %v2380
        %2512 = vmatpush.bf16.msra.mxu0 %v2377
        %2513 = vmatpush.bf16.msra.mxu0 %v2374
        %2514 = vmatpush.bf16.msra.mxu0 %v2371
        %2515 = vmatpush.bf16.msra.mxu0 %v2368
        %2516 = vmatpush.bf16.msra.mxu0 %v2365
        %2517 = vmatpush.bf16.msra.mxu0 %v2362
        %2518 = vmatpush.bf16.msra.mxu0 %v2359
        %2519 = vmatmul.bf16.gmra.mxu0 %v2141
        %v2520 = vpop.f32.mrf.mxu0
        %v2521 = vadd.f32 0.0, %v2520
        %v2522 = vpop.f32.mrf.mxu0
        %v2523 = vadd.f32 0.0, %v2522
        %2524 = vdwg.mxu0
        %2525 = vmatpush.bf16.msra.mxu0 %v2404
        %2526 = vmatpush.bf16.msra.mxu0 %v2401
        %2527 = vmatpush.bf16.msra.mxu0 %v2398
        %2528 = vmatpush.bf16.msra.mxu0 %v2395
        %2529 = vmatpush.bf16.msra.mxu0 %v2392
        %2530 = vmatpush.bf16.msra.mxu0 %v2389
        %2531 = vmatpush.bf16.msra.mxu0 %v2386
        %2532 = vmatpush.bf16.msra.mxu0 %v2383
        %2533 = vmatmul.bf16.gmra.mxu0 %v2158
        %v2534 = vpop.f32.mrf.mxu0
        %v2535 = vadd.f32 %v2521, %v2534
        %v2536 = vpop.f32.mrf.mxu0
        %v2537 = vadd.f32 %v2523, %v2536
        %2538 = vdwg.mxu0
        %2539 = vmatpush.bf16.msra.mxu0 0
        %2540 = vmatpush.bf16.msra.mxu0 0
        %2541 = vmatpush.bf16.msra.mxu0 0
        %2542 = vmatpush.bf16.msra.mxu0 0
        %2543 = vmatpush.bf16.msra.mxu0 0
        %2544 = vmatpush.bf16.msra.mxu0 0
        %2545 = vmatpush.bf16.msra.mxu0 %v2410
        %2546 = vmatpush.bf16.msra.mxu0 %v2407
        %2547 = vmatmul.bf16.gmra.mxu0 %v2467
        %v2548 = vpop.f32.mrf.mxu0
        %v2549 = vadd.f32 %v2535, %v2548
        %v2550 = vpop.f32.mrf.mxu0
        %v2551 = vadd.f32 %v2537, %v2550
        %2552 = vdwg.mxu0
        %2553 = vmatpush.bf16.msra.mxu0 %v2381
        %2554 = vmatpush.bf16.msra.mxu0 %v2378
        %2555 = vmatpush.bf16.msra.mxu0 %v2375
        %2556 = vmatpush.bf16.msra.mxu0 %v2372
        %2557 = vmatpush.bf16.msra.mxu0 %v2369
        %2558 = vmatpush.bf16.msra.mxu0 %v2366
        %2559 = vmatpush.bf16.msra.mxu0 %v2363
        %2560 = vmatpush.bf16.msra.mxu0 %v2360
        %2561 = vmatmul.bf16.gmra.mxu0 %v2141
        %v2562 = vpop.f32.mrf.mxu0
        %v2563 = vadd.f32 0.0, %v2562
        %v2564 = vpop.f32.mrf.mxu0
        %v2565 = vadd.f32 0.0, %v2564
        %2566 = vdwg.mxu0
        %2567 = vmatpush.bf16.msra.mxu0 %v2405
        %2568 = vmatpush.bf16.msra.mxu0 %v2402
        %2569 = vmatpush.bf16.msra.mxu0 %v2399
        %2570 = vmatpush.bf16.msra.mxu0 %v2396
        %2571 = vmatpush.bf16.msra.mxu0 %v2393
        %2572 = vmatpush.bf16.msra.mxu0 %v2390
        %2573 = vmatpush.bf16.msra.mxu0 %v2387
        %2574 = vmatpush.bf16.msra.mxu0 %v2384
        %2575 = vmatmul.bf16.gmra.mxu0 %v2158
        %v2576 = vpop.f32.mrf.mxu0
        %v2577 = vadd.f32 %v2563, %v2576
        %v2578 = vpop.f32.mrf.mxu0
        %v2579 = vadd.f32 %v2565, %v2578
        %2580 = vdwg.mxu0
        %2581 = vmatpush.bf16.msra.mxu0 0
        %2582 = vmatpush.bf16.msra.mxu0 0
        %2583 = vmatpush.bf16.msra.mxu0 0
        %2584 = vmatpush.bf16.msra.mxu0 0
        %2585 = vmatpush.bf16.msra.mxu0 0
        %2586 = vmatpush.bf16.msra.mxu0 0
        %2587 = vmatpush.bf16.msra.mxu0 %v2411
        %2588 = vmatpush.bf16.msra.mxu0 %v2408
        %2589 = vmatmul.bf16.gmra.mxu0 %v2467
        %v2590 = vpop.f32.mrf.mxu0
        %v2591 = vadd.f32 %v2577, %v2590
        %v2592 = vpop.f32.mrf.mxu0
        %v2593 = vadd.f32 %v2579, %v2592
        %2594 = vdwg.mxu0
        %v2597 = vunpack.c.l.b16 %v1955
        %v2598 = vunpack.c.h.b16 %v1955
        %v2599 = vunpack.c.l.b16 %v1956
        %v2600 = vpack.c.b16 %v2597, %v2597
        %v2601 = vpack.c.b16 %v2598, %v2598
        %v2602 = vpack.c.b16 %v2599, %v2599
        %v2603 = vrot.slane %v2118, 1
        %v2604 = vrot.slane %v2600, 1
        %v2605 = vsel %vm1426, %v2603, %v2604
        %v2606 = vrot.slane %v2119, 1
        %v2607 = vrot.slane %v2601, 1
        %v2608 = vsel %vm1426, %v2606, %v2607
        %v2609 = vrot.slane %v2120, 1
        %v2610 = vrot.slane %v2602, 1
        %v2611 = vsel %vm1426, %v2609, %v2610
        %v2686 = vunpack.c.l.b16 %v1957
        %v2687 = vunpack.c.h.b16 %v1957
        %v2688 = vunpack.c.l.b16 %v1958
        %v2689 = vunpack.c.l.b16 %v1959
        %v2690 = vunpack.c.h.b16 %v1959
        %v2691 = vunpack.c.l.b16 %v1960
        %v2692 = vunpack.c.l.b16 %v1961
        %v2693 = vunpack.c.h.b16 %v1961
        %v2694 = vunpack.c.l.b16 %v1962
        %v2695 = vunpack.c.l.b16 %v1963
        %v2696 = vunpack.c.h.b16 %v1963
        %v2697 = vunpack.c.l.b16 %v1964
        %v2698 = vunpack.c.l.b16 %v1965
        %v2699 = vunpack.c.h.b16 %v1965
        %v2700 = vunpack.c.l.b16 %v1966
        %v2701 = vunpack.c.l.b16 %v1967
        %v2702 = vunpack.c.h.b16 %v1967
        %v2703 = vunpack.c.l.b16 %v1968
        %v2704 = vunpack.c.l.b16 %v1969
        %v2705 = vunpack.c.h.b16 %v1969
        %v2706 = vunpack.c.l.b16 %v1970
        %v2707 = vunpack.c.l.b16 %v1971
        %v2708 = vunpack.c.h.b16 %v1971
        %v2709 = vunpack.c.l.b16 %v1972
        %v2710 = vunpack.c.l.b16 %v1973
        %v2711 = vunpack.c.h.b16 %v1973
        %v2712 = vunpack.c.l.b16 %v1974
        %v2713 = vunpack.c.l.b16 %v1975
        %v2714 = vunpack.c.h.b16 %v1975
        %v2715 = vunpack.c.l.b16 %v1976
        %v2716 = vunpack.c.l.b16 %v1977
        %v2717 = vunpack.c.h.b16 %v1977
        %v2718 = vunpack.c.l.b16 %v1978
        %v2719 = vunpack.c.l.b16 %v1979
        %v2720 = vunpack.c.h.b16 %v1979
        %v2721 = vunpack.c.l.b16 %v1980
        %v2722 = vunpack.c.l.b16 %v1981
        %v2723 = vunpack.c.h.b16 %v1981
        %v2724 = vunpack.c.l.b16 %v1982
        %v2725 = vunpack.c.l.b16 %v1983
        %v2726 = vunpack.c.h.b16 %v1983
        %v2727 = vunpack.c.l.b16 %v1984
        %v2728 = vunpack.c.l.b16 %v1985
        %v2729 = vunpack.c.h.b16 %v1985
        %v2730 = vunpack.c.l.b16 %v1986
        %v2731 = vunpack.c.l.b16 %v1987
        %v2732 = vunpack.c.h.b16 %v1987
        %v2733 = vunpack.c.l.b16 %v1988
        %v2734 = vunpack.c.l.b16 %v1989
        %v2735 = vunpack.c.h.b16 %v1989
        %v2736 = vunpack.c.l.b16 %v1990
        %v2737 = vunpack.c.l.b16 %v1991
        %v2738 = vunpack.c.h.b16 %v1991
        %v2739 = vunpack.c.l.b16 %v1992
        %v2740 = vunpack.c.l.b16 %v1993
        %v2741 = vunpack.c.h.b16 %v1993
        %v2742 = vunpack.c.l.b16 %v1994
        %v2743 = vunpack.c.l.b16 %v1995
        %v2744 = vunpack.c.h.b16 %v1995
        %v2745 = vunpack.c.l.b16 %v1996
        %v2746 = vunpack.c.l.b16 %v1997
        %v2747 = vunpack.c.h.b16 %v1997
        %v2748 = vunpack.c.l.b16 %v1998
        %v2749 = vunpack.c.l.b16 %v1999
        %v2750 = vunpack.c.h.b16 %v1999
        %v2751 = vunpack.c.l.b16 %v2000
        %v2752 = vunpack.c.l.b16 %v2001
        %v2753 = vunpack.c.h.b16 %v2001
        %v2754 = vunpack.c.l.b16 %v2002
        %v2755 = vunpack.c.l.b16 %v2003
        %v2756 = vunpack.c.h.b16 %v2003
        %v2757 = vunpack.c.l.b16 %v2004
        %v2758 = vunpack.c.l.b16 %v2005
        %v2759 = vunpack.c.h.b16 %v2005
        %v2760 = vunpack.c.l.b16 %v2006
        %v2761 = vunpack.c.l.b16 %v2007
        %v2762 = vunpack.c.h.b16 %v2007
        %v2763 = vunpack.c.l.b16 %v2008
        %v2764 = vunpack.c.l.b16 %v2009
        %v2765 = vunpack.c.h.b16 %v2009
        %v2766 = vunpack.c.l.b16 %v2010
        %v2767 = vunpack.c.l.b16 %v2011
        %v2768 = vunpack.c.h.b16 %v2011
        %v2769 = vunpack.c.l.b16 %v2012
        %v2770 = vunpack.c.l.b16 %v2013
        %v2771 = vunpack.c.h.b16 %v2013
        %v2772 = vunpack.c.l.b16 %v2014
        %v2773 = vunpack.c.l.b16 %v2015
        %v2774 = vunpack.c.h.b16 %v2015
        %v2775 = vunpack.c.l.b16 %v2016
        %v2776 = vunpack.c.l.b16 %v2017
        %v2777 = vunpack.c.h.b16 %v2017
        %v2778 = vunpack.c.l.b16 %v2018
        %v2779 = vunpack.c.l.b16 %v2019
        %v2780 = vunpack.c.h.b16 %v2019
        %v2781 = vunpack.c.l.b16 %v2020
        %v2782 = vunpack.c.l.b16 %v2021
        %v2783 = vunpack.c.h.b16 %v2021
        %v2784 = vunpack.c.l.b16 %v2022
        %v2785 = vunpack.c.l.b16 %v2023
        %v2786 = vunpack.c.h.b16 %v2023
        %v2787 = vunpack.c.l.b16 %v2024
        %v2788 = vunpack.c.l.b16 %v2025
        %v2789 = vunpack.c.h.b16 %v2025
        %v2790 = vunpack.c.l.b16 %v2026
        %v2791 = vunpack.c.l.b16 %v2027
        %v2792 = vunpack.c.h.b16 %v2027
        %v2793 = vunpack.c.l.b16 %v2028
        %v2794 = vpack.c.b16 %v2689, %v2686
        %v2795 = vpack.c.b16 %v2690, %v2687
        %v2796 = vpack.c.b16 %v2691, %v2688
        %v2797 = vpack.c.b16 %v2695, %v2692
        %v2798 = vpack.c.b16 %v2696, %v2693
        %v2799 = vpack.c.b16 %v2697, %v2694
        %v2800 = vpack.c.b16 %v2701, %v2698
        %v2801 = vpack.c.b16 %v2702, %v2699
        %v2802 = vpack.c.b16 %v2703, %v2700
        %v2803 = vpack.c.b16 %v2707, %v2704
        %v2804 = vpack.c.b16 %v2708, %v2705
        %v2805 = vpack.c.b16 %v2709, %v2706
        %v2806 = vpack.c.b16 %v2713, %v2710
        %v2807 = vpack.c.b16 %v2714, %v2711
        %v2808 = vpack.c.b16 %v2715, %v2712
        %v2809 = vpack.c.b16 %v2719, %v2716
        %v2810 = vpack.c.b16 %v2720, %v2717
        %v2811 = vpack.c.b16 %v2721, %v2718
        %v2812 = vpack.c.b16 %v2725, %v2722
        %v2813 = vpack.c.b16 %v2726, %v2723
        %v2814 = vpack.c.b16 %v2727, %v2724
        %v2815 = vpack.c.b16 %v2731, %v2728
        %v2816 = vpack.c.b16 %v2732, %v2729
        %v2817 = vpack.c.b16 %v2733, %v2730
        %v2818 = vpack.c.b16 %v2737, %v2734
        %v2819 = vpack.c.b16 %v2738, %v2735
        %v2820 = vpack.c.b16 %v2739, %v2736
        %v2821 = vpack.c.b16 %v2743, %v2740
        %v2822 = vpack.c.b16 %v2744, %v2741
        %v2823 = vpack.c.b16 %v2745, %v2742
        %v2824 = vpack.c.b16 %v2749, %v2746
        %v2825 = vpack.c.b16 %v2750, %v2747
        %v2826 = vpack.c.b16 %v2751, %v2748
        %v2827 = vpack.c.b16 %v2755, %v2752
        %v2828 = vpack.c.b16 %v2756, %v2753
        %v2829 = vpack.c.b16 %v2757, %v2754
        %v2830 = vpack.c.b16 %v2761, %v2758
        %v2831 = vpack.c.b16 %v2762, %v2759
        %v2832 = vpack.c.b16 %v2763, %v2760
        %v2833 = vpack.c.b16 %v2767, %v2764
        %v2834 = vpack.c.b16 %v2768, %v2765
        %v2835 = vpack.c.b16 %v2769, %v2766
        %v2836 = vpack.c.b16 %v2773, %v2770
        %v2837 = vpack.c.b16 %v2774, %v2771
        %v2838 = vpack.c.b16 %v2775, %v2772
        %v2839 = vpack.c.b16 %v2779, %v2776
        %v2840 = vpack.c.b16 %v2780, %v2777
        %v2841 = vpack.c.b16 %v2781, %v2778
        %v2842 = vpack.c.b16 %v2785, %v2782
        %v2843 = vpack.c.b16 %v2786, %v2783
        %v2844 = vpack.c.b16 %v2787, %v2784
        %v2845 = vpack.c.b16 %v2791, %v2788
        %v2846 = vpack.c.b16 %v2792, %v2789
        %v2847 = vpack.c.b16 %v2793, %v2790
        %v2903 = vsel %vm795, %v2611, 0
        %2905 = vmatpush.bf16.msra.mxu0 %v2815
        %2906 = vmatpush.bf16.msra.mxu0 %v2812
        %2907 = vmatpush.bf16.msra.mxu0 %v2809
        %2908 = vmatpush.bf16.msra.mxu0 %v2806
        %2909 = vmatpush.bf16.msra.mxu0 %v2803
        %2910 = vmatpush.bf16.msra.mxu0 %v2800
        %2911 = vmatpush.bf16.msra.mxu0 %v2797
        %2912 = vmatpush.bf16.msra.mxu0 %v2794
        %2913 = vmatmul.bf16.gmra.mxu0 %v2605
        %v2914 = vpop.f32.mrf.mxu0
        %v2915 = vadd.f32 %v2507, %v2914
        %v2916 = vpop.f32.mrf.mxu0
        %v2917 = vadd.f32 %v2509, %v2916
        %2918 = vdwg.mxu0
        %2919 = vmatpush.bf16.msra.mxu0 %v2839
        %2920 = vmatpush.bf16.msra.mxu0 %v2836
        %2921 = vmatpush.bf16.msra.mxu0 %v2833
        %2922 = vmatpush.bf16.msra.mxu0 %v2830
        %2923 = vmatpush.bf16.msra.mxu0 %v2827
        %2924 = vmatpush.bf16.msra.mxu0 %v2824
        %2925 = vmatpush.bf16.msra.mxu0 %v2821
        %2926 = vmatpush.bf16.msra.mxu0 %v2818
        %2927 = vmatmul.bf16.gmra.mxu0 %v2608
        %v2928 = vpop.f32.mrf.mxu0
        %v2929 = vadd.f32 %v2915, %v2928
        %v2930 = vpop.f32.mrf.mxu0
        %v2931 = vadd.f32 %v2917, %v2930
        %2932 = vdwg.mxu0
        %2933 = vmatpush.bf16.msra.mxu0 0
        %2934 = vmatpush.bf16.msra.mxu0 0
        %2935 = vmatpush.bf16.msra.mxu0 0
        %2936 = vmatpush.bf16.msra.mxu0 0
        %2937 = vmatpush.bf16.msra.mxu0 0
        %2938 = vmatpush.bf16.msra.mxu0 0
        %2939 = vmatpush.bf16.msra.mxu0 %v2845
        %2940 = vmatpush.bf16.msra.mxu0 %v2842
        %2941 = vmatmul.bf16.gmra.mxu0 %v2903
        %v2942 = vpop.f32.mrf.mxu0
        %v2943 = vadd.f32 %v2929, %v2942
        %v2944 = vpop.f32.mrf.mxu0
        %v2945 = vadd.f32 %v2931, %v2944
        %2946 = vdwg.mxu0
        %2947 = vmatpush.bf16.msra.mxu0 %v2816
        %2948 = vmatpush.bf16.msra.mxu0 %v2813
        %2949 = vmatpush.bf16.msra.mxu0 %v2810
        %2950 = vmatpush.bf16.msra.mxu0 %v2807
        %2951 = vmatpush.bf16.msra.mxu0 %v2804
        %2952 = vmatpush.bf16.msra.mxu0 %v2801
        %2953 = vmatpush.bf16.msra.mxu0 %v2798
        %2954 = vmatpush.bf16.msra.mxu0 %v2795
        %2955 = vmatmul.bf16.gmra.mxu0 %v2605
        %v2956 = vpop.f32.mrf.mxu0
        %v2957 = vadd.f32 %v2549, %v2956
        %v2958 = vpop.f32.mrf.mxu0
        %v2959 = vadd.f32 %v2551, %v2958
        %2960 = vdwg.mxu0
        %2961 = vmatpush.bf16.msra.mxu0 %v2840
        %2962 = vmatpush.bf16.msra.mxu0 %v2837
        %2963 = vmatpush.bf16.msra.mxu0 %v2834
        %2964 = vmatpush.bf16.msra.mxu0 %v2831
        %2965 = vmatpush.bf16.msra.mxu0 %v2828
        %2966 = vmatpush.bf16.msra.mxu0 %v2825
        %2967 = vmatpush.bf16.msra.mxu0 %v2822
        %2968 = vmatpush.bf16.msra.mxu0 %v2819
        %2969 = vmatmul.bf16.gmra.mxu0 %v2608
        %v2970 = vpop.f32.mrf.mxu0
        %v2971 = vadd.f32 %v2957, %v2970
        %v2972 = vpop.f32.mrf.mxu0
        %v2973 = vadd.f32 %v2959, %v2972
        %2974 = vdwg.mxu0
        %2975 = vmatpush.bf16.msra.mxu0 0
        %2976 = vmatpush.bf16.msra.mxu0 0
        %2977 = vmatpush.bf16.msra.mxu0 0
        %2978 = vmatpush.bf16.msra.mxu0 0
        %2979 = vmatpush.bf16.msra.mxu0 0
        %2980 = vmatpush.bf16.msra.mxu0 0
        %2981 = vmatpush.bf16.msra.mxu0 %v2846
        %2982 = vmatpush.bf16.msra.mxu0 %v2843
        %2983 = vmatmul.bf16.gmra.mxu0 %v2903
        %v2984 = vpop.f32.mrf.mxu0
        %v2985 = vadd.f32 %v2971, %v2984
        %v2986 = vpop.f32.mrf.mxu0
        %v2987 = vadd.f32 %v2973, %v2986
        %2988 = vdwg.mxu0
        %2989 = vmatpush.bf16.msra.mxu0 %v2817
        %2990 = vmatpush.bf16.msra.mxu0 %v2814
        %2991 = vmatpush.bf16.msra.mxu0 %v2811
        %2992 = vmatpush.bf16.msra.mxu0 %v2808
        %2993 = vmatpush.bf16.msra.mxu0 %v2805
        %2994 = vmatpush.bf16.msra.mxu0 %v2802
        %2995 = vmatpush.bf16.msra.mxu0 %v2799
        %2996 = vmatpush.bf16.msra.mxu0 %v2796
        %2997 = vmatmul.bf16.gmra.mxu0 %v2605
        %v2998 = vpop.f32.mrf.mxu0
        %v2999 = vadd.f32 %v2591, %v2998
        %v3000 = vpop.f32.mrf.mxu0
        %v3001 = vadd.f32 %v2593, %v3000
        %3002 = vdwg.mxu0
        %3003 = vmatpush.bf16.msra.mxu0 %v2841
        %3004 = vmatpush.bf16.msra.mxu0 %v2838
        %3005 = vmatpush.bf16.msra.mxu0 %v2835
        %3006 = vmatpush.bf16.msra.mxu0 %v2832
        %3007 = vmatpush.bf16.msra.mxu0 %v2829
        %3008 = vmatpush.bf16.msra.mxu0 %v2826
        %3009 = vmatpush.bf16.msra.mxu0 %v2823
        %3010 = vmatpush.bf16.msra.mxu0 %v2820
        %3011 = vmatmul.bf16.gmra.mxu0 %v2608
        %v3012 = vpop.f32.mrf.mxu0
        %v3013 = vadd.f32 %v2999, %v3012
        %v3014 = vpop.f32.mrf.mxu0
        %v3015 = vadd.f32 %v3001, %v3014
        %3016 = vdwg.mxu0
        %3017 = vmatpush.bf16.msra.mxu0 0
        %3018 = vmatpush.bf16.msra.mxu0 0
        %3019 = vmatpush.bf16.msra.mxu0 0
        %3020 = vmatpush.bf16.msra.mxu0 0
        %3021 = vmatpush.bf16.msra.mxu0 0
        %3022 = vmatpush.bf16.msra.mxu0 0
        %3023 = vmatpush.bf16.msra.mxu0 %v2847
        %3024 = vmatpush.bf16.msra.mxu0 %v2844
        %3025 = vmatmul.bf16.gmra.mxu0 %v2903
        %v3026 = vpop.f32.mrf.mxu0
        %v3027 = vadd.f32 %v3013, %v3026
        %v3028 = vpop.f32.mrf.mxu0
        %v3029 = vadd.f32 %v3015, %v3028
        %3030 = vdwg.mxu0
        %v3031 = vld [vmem:[%s249 + $0x18] sm:$0xcc]
        %v3032 = vld [vmem:[%s249 + $0x20] sm:$0xc]
        %v3033 = vld [vmem:[%s1345] sm:$0xff]
        %v3034 = vld [vmem:[%s1345 + $0x8] sm:$0xf]
        %v3035 = vld [vmem:[%s1345 + $0xc] sm:$0xff]
        %v3036 = vld [vmem:[%s1345 + $0x14] sm:$0xf]
        %v3037 = vld [vmem:[%s1345 + $0x18] sm:$0xff]
        %v3038 = vld [vmem:[%s1345 + $0x20] sm:$0xf]
        %v3039 = vld [vmem:[%s1345 + $0x24] sm:$0xff]
        %v3040 = vld [vmem:[%s1345 + $0x2c] sm:$0xf]
        %v3041 = vld [vmem:[%s1345 + $0x30] sm:$0xff]
        %v3042 = vld [vmem:[%s1345 + $0x38] sm:$0xf]
        %v3043 = vld [vmem:[%s1345 + $0x3c] sm:$0xff]
        %v3044 = vld [vmem:[%s1345 + $0x44] sm:$0xf]
        %v3045 = vld [vmem:[%s1345 + $0x48] sm:$0xff]
        %v3046 = vld [vmem:[%s1345 + $0x50] sm:$0xf]
        %v3047 = vld [vmem:[%s1345 + $0x54] sm:$0xff]
        %v3048 = vld [vmem:[%s1345 + $0x5c] sm:$0xf]
        %v3049 = vld [vmem:[%s1345 + $0x60] sm:$0xff]
        %v3050 = vld [vmem:[%s1345 + $0x68] sm:$0xf]
        %v3051 = vld [vmem:[%s1345 + $0x6c] sm:$0xff]
        %v3052 = vld [vmem:[%s1345 + $0x74] sm:$0xf]
        %v3053 = vld [vmem:[%s1345 + $0x78] sm:$0xff]
        %v3054 = vld [vmem:[%s1345 + $0x80] sm:$0xf]
        %v3055 = vld [vmem:[%s1345 + $0x84] sm:$0xff]
        %v3056 = vld [vmem:[%s1345 + $0x8c] sm:$0xf]
        %v3057 = vld [vmem:[%s1345 + $0x90] sm:$0xff]
        %v3058 = vld [vmem:[%s1345 + $0x98] sm:$0xf]
        %v3059 = vld [vmem:[%s1345 + $0x9c] sm:$0xff]
        %v3060 = vld [vmem:[%s1345 + $0xa4] sm:$0xf]
        %v3061 = vld [vmem:[%s1345 + $0xa8] sm:$0xff]
        %v3062 = vld [vmem:[%s1345 + $0xb0] sm:$0xf]
        %v3063 = vld [vmem:[%s1345 + $0xb4] sm:$0xff]
        %v3064 = vld [vmem:[%s1345 + $0xbc] sm:$0xf]
        %v3065 = vld [vmem:[%s1345 + $0xc0] sm:$0xff]
        %v3066 = vld [vmem:[%s1345 + $0xc8] sm:$0xf]
        %v3067 = vld [vmem:[%s1345 + $0xcc] sm:$0xff]
        %v3068 = vld [vmem:[%s1345 + $0xd4] sm:$0xf]
        %v3069 = vld [vmem:[%s1345 + $0xd8] sm:$0xff]
        %v3070 = vld [vmem:[%s1345 + $0xe0] sm:$0xf]
        %v3071 = vld [vmem:[%s1345 + $0xe4] sm:$0xff]
        %v3072 = vld [vmem:[%s1345 + $0xec] sm:$0xf]
        %v3073 = vld [vmem:[%s1345 + $0xf0] sm:$0xff]
        %v3074 = vld [vmem:[%s1345 + $0xf8] sm:$0xf]
        %v3075 = vld [vmem:[%s1345 + $0xfc] sm:$0xff]
        %v3076 = vld [vmem:[%s1345 + $0x104] sm:$0xf]
        %v3077 = vld [vmem:[%s1345 + $0x108] sm:$0xff]
        %v3078 = vld [vmem:[%s1345 + $0x110] sm:$0xf]
        %v3079 = vld [vmem:[%s1345 + $0x114] sm:$0xff]
        %v3080 = vld [vmem:[%s1345 + $0x11c] sm:$0xf]
        %v3081 = vld [vmem:[%s1345 + $0x120] sm:$0xff]
        %v3082 = vld [vmem:[%s1345 + $0x128] sm:$0xf]
        %v3083 = vld [vmem:[%s1345 + $0x12c] sm:$0xff]
        %v3084 = vld [vmem:[%s1345 + $0x134] sm:$0xf]
        %v3085 = vld [vmem:[%s1345 + $0x138] sm:$0xff]
        %v3086 = vld [vmem:[%s1345 + $0x140] sm:$0xf]
        %v3087 = vld [vmem:[%s1345 + $0x144] sm:$0xff]
        %v3088 = vld [vmem:[%s1345 + $0x14c] sm:$0xf]
        %v3089 = vld [vmem:[%s1345 + $0x150] sm:$0xff]
        %v3090 = vld [vmem:[%s1345 + $0x158] sm:$0xf]
        %v3091 = vld [vmem:[%s1345 + $0x15c] sm:$0xff]
        %v3092 = vld [vmem:[%s1345 + $0x164] sm:$0xf]
        %v3093 = vld [vmem:[%s1345 + $0x168] sm:$0xff]
        %v3094 = vld [vmem:[%s1345 + $0x170] sm:$0xf]
        %v3095 = vld [vmem:[%s1345 + $0x174] sm:$0xff]
        %v3096 = vld [vmem:[%s1345 + $0x17c] sm:$0xf]
        %v3097 = vld [vmem:[%s1345 + $0x180] sm:$0xff]
        %v3098 = vld [vmem:[%s1345 + $0x188] sm:$0xf]
        %v3099 = vld [vmem:[%s1345 + $0x18c] sm:$0xff]
        %v3100 = vld [vmem:[%s1345 + $0x194] sm:$0xf]
        %v3101 = vld [vmem:[%s1345 + $0x198] sm:$0xff]
        %v3102 = vld [vmem:[%s1345 + $0x1a0] sm:$0xf]
        %v3103 = vld [vmem:[%s1345 + $0x1a4] sm:$0xff]
        %v3104 = vld [vmem:[%s1345 + $0x1ac] sm:$0xf]
        %v3107 = vunpack.c.l.b16 %v3031
        %v3108 = vunpack.c.h.b16 %v3031
        %v3109 = vunpack.c.l.b16 %v3032
        %v3110 = vpack.c.b16 %v2112, %v3107
        %v3111 = vpack.c.b16 %v2113, %v3108
        %v3112 = vpack.c.b16 %v2114, %v3109
        %vm3113 = vcmask 1045504
        %v3114 = vrot.slane %v3110, 2
        %v3115 = vrot.slane %v2121, 2
        %v3116 = vsel %vm3113, %v3114, %v3115
        %v3117 = vrot.slane %v3111, 2
        %v3118 = vrot.slane %v2122, 2
        %v3119 = vsel %vm3113, %v3117, %v3118
        %v3120 = vrot.slane %v3112, 2
        %v3121 = vrot.slane %v2123, 2
        %v3122 = vsel %vm3113, %v3120, %v3121
        %v3197 = vunpack.c.l.b16 %v3033
        %v3198 = vunpack.c.h.b16 %v3033
        %v3199 = vunpack.c.l.b16 %v3034
        %v3200 = vunpack.c.l.b16 %v3035
        %v3201 = vunpack.c.h.b16 %v3035
        %v3202 = vunpack.c.l.b16 %v3036
        %v3203 = vunpack.c.l.b16 %v3037
        %v3204 = vunpack.c.h.b16 %v3037
        %v3205 = vunpack.c.l.b16 %v3038
        %v3206 = vunpack.c.l.b16 %v3039
        %v3207 = vunpack.c.h.b16 %v3039
        %v3208 = vunpack.c.l.b16 %v3040
        %v3209 = vunpack.c.l.b16 %v3041
        %v3210 = vunpack.c.h.b16 %v3041
        %v3211 = vunpack.c.l.b16 %v3042
        %v3212 = vunpack.c.l.b16 %v3043
        %v3213 = vunpack.c.h.b16 %v3043
        %v3214 = vunpack.c.l.b16 %v3044
        %v3215 = vunpack.c.l.b16 %v3045
        %v3216 = vunpack.c.h.b16 %v3045
        %v3217 = vunpack.c.l.b16 %v3046
        %v3218 = vunpack.c.l.b16 %v3047
        %v3219 = vunpack.c.h.b16 %v3047
        %v3220 = vunpack.c.l.b16 %v3048
        %v3221 = vunpack.c.l.b16 %v3049
        %v3222 = vunpack.c.h.b16 %v3049
        %v3223 = vunpack.c.l.b16 %v3050
        %v3224 = vunpack.c.l.b16 %v3051
        %v3225 = vunpack.c.h.b16 %v3051
        %v3226 = vunpack.c.l.b16 %v3052
        %v3227 = vunpack.c.l.b16 %v3053
        %v3228 = vunpack.c.h.b16 %v3053
        %v3229 = vunpack.c.l.b16 %v3054
        %v3230 = vunpack.c.l.b16 %v3055
        %v3231 = vunpack.c.h.b16 %v3055
        %v3232 = vunpack.c.l.b16 %v3056
        %v3233 = vunpack.c.l.b16 %v3057
        %v3234 = vunpack.c.h.b16 %v3057
        %v3235 = vunpack.c.l.b16 %v3058
        %v3236 = vunpack.c.l.b16 %v3059
        %v3237 = vunpack.c.h.b16 %v3059
        %v3238 = vunpack.c.l.b16 %v3060
        %v3239 = vunpack.c.l.b16 %v3061
        %v3240 = vunpack.c.h.b16 %v3061
        %v3241 = vunpack.c.l.b16 %v3062
        %v3242 = vunpack.c.l.b16 %v3063
        %v3243 = vunpack.c.h.b16 %v3063
        %v3244 = vunpack.c.l.b16 %v3064
        %v3245 = vunpack.c.l.b16 %v3065
        %v3246 = vunpack.c.h.b16 %v3065
        %v3247 = vunpack.c.l.b16 %v3066
        %v3248 = vunpack.c.l.b16 %v3067
        %v3249 = vunpack.c.h.b16 %v3067
        %v3250 = vunpack.c.l.b16 %v3068
        %v3251 = vunpack.c.l.b16 %v3069
        %v3252 = vunpack.c.h.b16 %v3069
        %v3253 = vunpack.c.l.b16 %v3070
        %v3254 = vunpack.c.l.b16 %v3071
        %v3255 = vunpack.c.h.b16 %v3071
        %v3256 = vunpack.c.l.b16 %v3072
        %v3257 = vunpack.c.l.b16 %v3073
        %v3258 = vunpack.c.h.b16 %v3073
        %v3259 = vunpack.c.l.b16 %v3074
        %v3260 = vunpack.c.l.b16 %v3075
        %v3261 = vunpack.c.h.b16 %v3075
        %v3262 = vunpack.c.l.b16 %v3076
        %v3263 = vunpack.c.l.b16 %v3077
        %v3264 = vunpack.c.h.b16 %v3077
        %v3265 = vunpack.c.l.b16 %v3078
        %v3266 = vunpack.c.l.b16 %v3079
        %v3267 = vunpack.c.h.b16 %v3079
        %v3268 = vunpack.c.l.b16 %v3080
        %v3269 = vunpack.c.l.b16 %v3081
        %v3270 = vunpack.c.h.b16 %v3081
        %v3271 = vunpack.c.l.b16 %v3082
        %v3272 = vunpack.c.l.b16 %v3083
        %v3273 = vunpack.c.h.b16 %v3083
        %v3274 = vunpack.c.l.b16 %v3084
        %v3275 = vunpack.c.l.b16 %v3085
        %v3276 = vunpack.c.h.b16 %v3085
        %v3277 = vunpack.c.l.b16 %v3086
        %v3278 = vunpack.c.l.b16 %v3087
        %v3279 = vunpack.c.h.b16 %v3087
        %v3280 = vunpack.c.l.b16 %v3088
        %v3281 = vunpack.c.l.b16 %v3089
        %v3282 = vunpack.c.h.b16 %v3089
        %v3283 = vunpack.c.l.b16 %v3090
        %v3284 = vunpack.c.l.b16 %v3091
        %v3285 = vunpack.c.h.b16 %v3091
        %v3286 = vunpack.c.l.b16 %v3092
        %v3287 = vunpack.c.l.b16 %v3093
        %v3288 = vunpack.c.h.b16 %v3093
        %v3289 = vunpack.c.l.b16 %v3094
        %v3290 = vunpack.c.l.b16 %v3095
        %v3291 = vunpack.c.h.b16 %v3095
        %v3292 = vunpack.c.l.b16 %v3096
        %v3293 = vunpack.c.l.b16 %v3097
        %v3294 = vunpack.c.h.b16 %v3097
        %v3295 = vunpack.c.l.b16 %v3098
        %v3296 = vunpack.c.l.b16 %v3099
        %v3297 = vunpack.c.h.b16 %v3099
        %v3298 = vunpack.c.l.b16 %v3100
        %v3299 = vunpack.c.l.b16 %v3101
        %v3300 = vunpack.c.h.b16 %v3101
        %v3301 = vunpack.c.l.b16 %v3102
        %v3302 = vunpack.c.l.b16 %v3103
        %v3303 = vunpack.c.h.b16 %v3103
        %v3304 = vunpack.c.l.b16 %v3104
        %v3305 = vpack.c.b16 %v3200, %v3197
        %v3306 = vpack.c.b16 %v3201, %v3198
        %v3307 = vpack.c.b16 %v3202, %v3199
        %v3308 = vpack.c.b16 %v3206, %v3203
        %v3309 = vpack.c.b16 %v3207, %v3204
        %v3310 = vpack.c.b16 %v3208, %v3205
        %v3311 = vpack.c.b16 %v3212, %v3209
        %v3312 = vpack.c.b16 %v3213, %v3210
        %v3313 = vpack.c.b16 %v3214, %v3211
        %v3314 = vpack.c.b16 %v3218, %v3215
        %v3315 = vpack.c.b16 %v3219, %v3216
        %v3316 = vpack.c.b16 %v3220, %v3217
        %v3317 = vpack.c.b16 %v3224, %v3221
        %v3318 = vpack.c.b16 %v3225, %v3222
        %v3319 = vpack.c.b16 %v3226, %v3223
        %v3320 = vpack.c.b16 %v3230, %v3227
        %v3321 = vpack.c.b16 %v3231, %v3228
        %v3322 = vpack.c.b16 %v3232, %v3229
        %v3323 = vpack.c.b16 %v3236, %v3233
        %v3324 = vpack.c.b16 %v3237, %v3234
        %v3325 = vpack.c.b16 %v3238, %v3235
        %v3326 = vpack.c.b16 %v3242, %v3239
        %v3327 = vpack.c.b16 %v3243, %v3240
        %v3328 = vpack.c.b16 %v3244, %v3241
        %v3329 = vpack.c.b16 %v3248, %v3245
        %v3330 = vpack.c.b16 %v3249, %v3246
        %v3331 = vpack.c.b16 %v3250, %v3247
        %v3332 = vpack.c.b16 %v3254, %v3251
        %v3333 = vpack.c.b16 %v3255, %v3252
        %v3334 = vpack.c.b16 %v3256, %v3253
        %v3335 = vpack.c.b16 %v3260, %v3257
        %v3336 = vpack.c.b16 %v3261, %v3258
        %v3337 = vpack.c.b16 %v3262, %v3259
        %v3338 = vpack.c.b16 %v3266, %v3263
        %v3339 = vpack.c.b16 %v3267, %v3264
        %v3340 = vpack.c.b16 %v3268, %v3265
        %v3341 = vpack.c.b16 %v3272, %v3269
        %v3342 = vpack.c.b16 %v3273, %v3270
        %v3343 = vpack.c.b16 %v3274, %v3271
        %v3344 = vpack.c.b16 %v3278, %v3275
        %v3345 = vpack.c.b16 %v3279, %v3276
        %v3346 = vpack.c.b16 %v3280, %v3277
        %v3347 = vpack.c.b16 %v3284, %v3281
        %v3348 = vpack.c.b16 %v3285, %v3282
        %v3349 = vpack.c.b16 %v3286, %v3283
        %v3350 = vpack.c.b16 %v3290, %v3287
        %v3351 = vpack.c.b16 %v3291, %v3288
        %v3352 = vpack.c.b16 %v3292, %v3289
        %v3353 = vpack.c.b16 %v3296, %v3293
        %v3354 = vpack.c.b16 %v3297, %v3294
        %v3355 = vpack.c.b16 %v3298, %v3295
        %v3356 = vpack.c.b16 %v3302, %v3299
        %v3357 = vpack.c.b16 %v3303, %v3300
        %v3358 = vpack.c.b16 %v3304, %v3301
        %v3414 = vsel %vm795, %v3122, 0
        %3416 = vmatpush.bf16.msra.mxu0 %v3326
        %3417 = vmatpush.bf16.msra.mxu0 %v3323
        %3418 = vmatpush.bf16.msra.mxu0 %v3320
        %3419 = vmatpush.bf16.msra.mxu0 %v3317
        %3420 = vmatpush.bf16.msra.mxu0 %v3314
        %3421 = vmatpush.bf16.msra.mxu0 %v3311
        %3422 = vmatpush.bf16.msra.mxu0 %v3308
        %3423 = vmatpush.bf16.msra.mxu0 %v3305
        %3424 = vmatmul.bf16.gmra.mxu0 %v3116
        %v3425 = vpop.f32.mrf.mxu0
        %v3426 = vadd.f32 0.0, %v3425
        %v3427 = vpop.f32.mrf.mxu0
        %v3428 = vadd.f32 0.0, %v3427
        %3429 = vdwg.mxu0
        %3430 = vmatpush.bf16.msra.mxu0 %v3350
        %3431 = vmatpush.bf16.msra.mxu0 %v3347
        %3432 = vmatpush.bf16.msra.mxu0 %v3344
        %3433 = vmatpush.bf16.msra.mxu0 %v3341
        %3434 = vmatpush.bf16.msra.mxu0 %v3338
        %3435 = vmatpush.bf16.msra.mxu0 %v3335
        %3436 = vmatpush.bf16.msra.mxu0 %v3332
        %3437 = vmatpush.bf16.msra.mxu0 %v3329
        %3438 = vmatmul.bf16.gmra.mxu0 %v3119
        %v3439 = vpop.f32.mrf.mxu0
        %v3440 = vadd.f32 %v3426, %v3439
        %v3441 = vpop.f32.mrf.mxu0
        %v3442 = vadd.f32 %v3428, %v3441
        %3443 = vdwg.mxu0
        %3444 = vmatpush.bf16.msra.mxu0 0
        %3445 = vmatpush.bf16.msra.mxu0 0
        %3446 = vmatpush.bf16.msra.mxu0 0
        %3447 = vmatpush.bf16.msra.mxu0 0
        %3448 = vmatpush.bf16.msra.mxu0 0
        %3449 = vmatpush.bf16.msra.mxu0 0
        %3450 = vmatpush.bf16.msra.mxu0 %v3356
        %3451 = vmatpush.bf16.msra.mxu0 %v3353
        %3452 = vmatmul.bf16.gmra.mxu0 %v3414
        %v3453 = vpop.f32.mrf.mxu0
        %v3454 = vadd.f32 %v3440, %v3453
        %v3455 = vpop.f32.mrf.mxu0
        %v3456 = vadd.f32 %v3442, %v3455
        %3457 = vdwg.mxu0
        %3458 = vmatpush.bf16.msra.mxu0 %v3327
        %3459 = vmatpush.bf16.msra.mxu0 %v3324
        %3460 = vmatpush.bf16.msra.mxu0 %v3321
        %3461 = vmatpush.bf16.msra.mxu0 %v3318
        %3462 = vmatpush.bf16.msra.mxu0 %v3315
        %3463 = vmatpush.bf16.msra.mxu0 %v3312
        %3464 = vmatpush.bf16.msra.mxu0 %v3309
        %3465 = vmatpush.bf16.msra.mxu0 %v3306
        %3466 = vmatmul.bf16.gmra.mxu0 %v3116
        %v3467 = vpop.f32.mrf.mxu0
        %v3468 = vadd.f32 0.0, %v3467
        %v3469 = vpop.f32.mrf.mxu0
        %v3470 = vadd.f32 0.0, %v3469
        %3471 = vdwg.mxu0
        %3472 = vmatpush.bf16.msra.mxu0 %v3351
        %3473 = vmatpush.bf16.msra.mxu0 %v3348
        %3474 = vmatpush.bf16.msra.mxu0 %v3345
        %3475 = vmatpush.bf16.msra.mxu0 %v3342
        %3476 = vmatpush.bf16.msra.mxu0 %v3339
        %3477 = vmatpush.bf16.msra.mxu0 %v3336
        %3478 = vmatpush.bf16.msra.mxu0 %v3333
        %3479 = vmatpush.bf16.msra.mxu0 %v3330
        %3480 = vmatmul.bf16.gmra.mxu0 %v3119
        %v3481 = vpop.f32.mrf.mxu0
        %v3482 = vadd.f32 %v3468, %v3481
        %v3483 = vpop.f32.mrf.mxu0
        %v3484 = vadd.f32 %v3470, %v3483
        %3485 = vdwg.mxu0
        %3486 = vmatpush.bf16.msra.mxu0 0
        %3487 = vmatpush.bf16.msra.mxu0 0
        %3488 = vmatpush.bf16.msra.mxu0 0
        %3489 = vmatpush.bf16.msra.mxu0 0
        %3490 = vmatpush.bf16.msra.mxu0 0
        %3491 = vmatpush.bf16.msra.mxu0 0
        %3492 = vmatpush.bf16.msra.mxu0 %v3357
        %3493 = vmatpush.bf16.msra.mxu0 %v3354
        %3494 = vmatmul.bf16.gmra.mxu0 %v3414
        %v3495 = vpop.f32.mrf.mxu0
        %v3496 = vadd.f32 %v3482, %v3495
        %v3497 = vpop.f32.mrf.mxu0
        %v3498 = vadd.f32 %v3484, %v3497
        %3499 = vdwg.mxu0
        %3500 = vmatpush.bf16.msra.mxu0 %v3328
        %3501 = vmatpush.bf16.msra.mxu0 %v3325
        %3502 = vmatpush.bf16.msra.mxu0 %v3322
        %3503 = vmatpush.bf16.msra.mxu0 %v3319
        %3504 = vmatpush.bf16.msra.mxu0 %v3316
        %3505 = vmatpush.bf16.msra.mxu0 %v3313
        %3506 = vmatpush.bf16.msra.mxu0 %v3310
        %3507 = vmatpush.bf16.msra.mxu0 %v3307
        %3508 = vmatmul.bf16.gmra.mxu0 %v3116
        %v3509 = vpop.f32.mrf.mxu0
        %v3510 = vadd.f32 0.0, %v3509
        %v3511 = vpop.f32.mrf.mxu0
        %v3512 = vadd.f32 0.0, %v3511
        %3513 = vdwg.mxu0
        %3514 = vmatpush.bf16.msra.mxu0 %v3352
        %3515 = vmatpush.bf16.msra.mxu0 %v3349
        %3516 = vmatpush.bf16.msra.mxu0 %v3346
        %3517 = vmatpush.bf16.msra.mxu0 %v3343
        %3518 = vmatpush.bf16.msra.mxu0 %v3340
        %3519 = vmatpush.bf16.msra.mxu0 %v3337
        %3520 = vmatpush.bf16.msra.mxu0 %v3334
        %3521 = vmatpush.bf16.msra.mxu0 %v3331
        %3522 = vmatmul.bf16.gmra.mxu0 %v3119
        %v3523 = vpop.f32.mrf.mxu0
        %v3524 = vadd.f32 %v3510, %v3523
        %v3525 = vpop.f32.mrf.mxu0
        %v3526 = vadd.f32 %v3512, %v3525
        %3527 = vdwg.mxu0
        %3528 = vmatpush.bf16.msra.mxu0 0
        %3529 = vmatpush.bf16.msra.mxu0 0
        %3530 = vmatpush.bf16.msra.mxu0 0
        %3531 = vmatpush.bf16.msra.mxu0 0
        %3532 = vmatpush.bf16.msra.mxu0 0
        %3533 = vmatpush.bf16.msra.mxu0 0
        %3534 = vmatpush.bf16.msra.mxu0 %v3358
        %3535 = vmatpush.bf16.msra.mxu0 %v3355
        %3536 = vmatmul.bf16.gmra.mxu0 %v3414
        %v3537 = vpop.f32.mrf.mxu0
        %v3538 = vadd.f32 %v3524, %v3537
        %v3539 = vpop.f32.mrf.mxu0
        %v3540 = vadd.f32 %v3526, %v3539
        %3541 = vdwg.mxu0
        %v3542 = vadd.f32 %v2943, %v3454
        %v3543 = vadd.f32 %v2985, %v3496
        %v3544 = vadd.f32 %v3027, %v3538
        %v3545 = vadd.f32 %v2945, %v3456
        %v3546 = vadd.f32 %v2987, %v3498
        %v3547 = vadd.f32 %v3029, %v3540
        %v3548 = vld [vmem:[%s3] sm:$0x7]
        %v3550 = vperm.slane %v3548, 0
        %v3551 = vperm.slane %v3548, 1
        %v3552 = vperm.slane %v3548, 2
        %v3556 = vadd.f32 %v3542, %v3550
        %v3557 = vadd.f32 %v3543, %v3551
        %v3558 = vadd.f32 %v3544, %v3552
        %v3559 = vadd.f32 %v3545, %v3550
        %v3560 = vadd.f32 %v3546, %v3551
        %v3561 = vadd.f32 %v3547, %v3552
        %v3562 = vmax.f32 %v3556, 0.0
        %v3563 = vmax.f32 %v3557, 0.0
        %v3564 = vmax.f32 %v3558, 0.0
        %v3565 = vmax.f32 %v3559, 0.0
        %v3566 = vmax.f32 %v3560, 0.0
        %v3567 = vmax.f32 %v3561, 0.0
        %v3568 = vpack.c.bf16 %v3563, %v3562
        %v3569 = vpack.c.bf16 %v3564, %v3564
        %v3570 = vpack.c.bf16 %v3566, %v3565
        %v3571 = vpack.c.bf16 %v3567, %v3567
        %vm3572 = vsmask.f32 1280
        %vm3573 = vsmask.f32 5392
        %vm3574 = vmor %vm3572, %vm3573
        %v3576 = vshrl.u32 %v3568, 16
        %v3578 = vrot.slane %v3576, 6
        %v3579 = vshll.u32 %v3568, 16
        %v3581 = vrot.slane %v3579, 7
        %v3582 = vor.u32 %v3578, %v3581
        %v3584 = vshrl.u32 %v3569, 16
        %v3586 = vrot.slane %v3584, 6
        %v3587 = vshll.u32 %v3569, 16
        %v3589 = vrot.slane %v3587, 7
        %v3590 = vor.u32 %v3586, %v3589
        %v3591 = vrot.slane %v3582, 4
        %v3593 = vshrl.u32 %v3570, 16
        %v3595 = vrot.slane %v3593, 6
        %v3596 = vshll.u32 %v3570, 16
        %v3598 = vrot.slane %v3596, 7
        %v3599 = vor.u32 %v3595, %v3598
        %v3600 = vsel %vm3574, %v3591, %v3599
        %v3601 = vrot.slane %v3590, 4
        %v3603 = vshrl.u32 %v3571, 16
        %v3605 = vrot.slane %v3603, 6
        %v3606 = vshll.u32 %v3571, 16
        %v3608 = vrot.slane %v3606, 7
        %v3609 = vor.u32 %v3605, %v3608
        %v3610 = vsel %vm3574, %v3601, %v3609
        %v3611 = vrot.slane %v3599, 4
        %v3612 = vrot.slane %v3609, 4
        %vm3619 = vcmask 1043457
        %vm3620 = vmand %vm3619, %vm282
        %vm3621 = vcmask 1047557
        %vm3622 = vmand %vm3621, %vm285
        %vm3623 = vmor %vm3622, %vm3620
        %v3624 = vld [vmem:[#allocation2 + $0x18] sm:$0xee]
        %v3625 = vsel %vm3623, %v3582, %v3624
        %3626 = vst [vmem:[#allocation2 + $0x18] sm:$0xee] %v3625
        %vm3627 = vcmask 257025
        %vm3628 = vmand %vm3627, %vm282
        %v3629 = vld [vmem:[#allocation2 + $0x20] sm:$0xe]
        %v3630 = vsel %vm3628, %v3590, %v3629
        %3631 = vst [vmem:[#allocation2 + $0x20] sm:$0xe] %v3630
        %3632 = vst [vmem:[#allocation2 + $0x24] sm:$0xff] %v3600
        %3633 = vst.msk [vmem:[#allocation2 + $0x2c] sm:$0xf] %vm1943, %v3610
        %vm3634 = vmand %vm266, %vm3572
        %vm3635 = vsmask.f32 5376
        %vm3636 = vmand %vm269, %vm3635
        %vm3637 = vmor %vm3636, %vm3634
        %v3638 = vld [vmem:[#allocation2 + $0x30] sm:$0x33]
        %v3639 = vsel %vm3637, %v3611, %v3638
        %3640 = vst [vmem:[#allocation2 + $0x30] sm:$0x33] %v3639
        %vm3641 = vmand %vm276, %vm3572
        %v3642 = vld [vmem:[#allocation2 + $0x38] sm:$0x3]
        %v3643 = vsel %vm3641, %v3612, %v3642
        %3644 = vst [vmem:[#allocation2 + $0x38] sm:$0x3] %v3643
        %v3645 = vld [vmem:[#allocation2] sm:$0xff]
        %v3646 = vld [vmem:[#allocation2 + $0x8] sm:$0xf]
        %v3647 = vld [vmem:[#allocation2 + $0xc] sm:$0xff]
        %v3648 = vld [vmem:[#allocation2 + $0x14] sm:$0xf]
        %v3649 = vld [vmem:[%s4] sm:$0xff]
        %v3650 = vld [vmem:[%s4 + $0x8] sm:$0xf]
        %v3651 = vld [vmem:[%s4 + $0xc] sm:$0xff]
        %v3652 = vld [vmem:[%s4 + $0x14] sm:$0xf]
        %v3653 = vld [vmem:[%s4 + $0x18] sm:$0xff]
        %v3654 = vld [vmem:[%s4 + $0x20] sm:$0xf]
        %v3655 = vld [vmem:[%s4 + $0x24] sm:$0xff]
        %v3656 = vld [vmem:[%s4 + $0x2c] sm:$0xf]
        %v3657 = vld [vmem:[%s4 + $0x30] sm:$0xff]
        %v3658 = vld [vmem:[%s4 + $0x38] sm:$0xf]
        %v3659 = vld [vmem:[%s4 + $0x3c] sm:$0xff]
        %v3660 = vld [vmem:[%s4 + $0x44] sm:$0xf]
        %v3661 = vld [vmem:[%s4 + $0x48] sm:$0xff]
        %v3662 = vld [vmem:[%s4 + $0x50] sm:$0xf]
        %v3663 = vld [vmem:[%s4 + $0x54] sm:$0xff]
        %v3664 = vld [vmem:[%s4 + $0x5c] sm:$0xf]
        %v3665 = vld [vmem:[%s4 + $0x60] sm:$0xff]
        %v3666 = vld [vmem:[%s4 + $0x68] sm:$0xf]
        %v3667 = vld [vmem:[%s4 + $0x6c] sm:$0xff]
        %v3668 = vld [vmem:[%s4 + $0x74] sm:$0xf]
        %v3669 = vld [vmem:[%s4 + $0x78] sm:$0xff]
        %v3670 = vld [vmem:[%s4 + $0x80] sm:$0xf]
        %v3671 = vld [vmem:[%s4 + $0x84] sm:$0xff]
        %v3672 = vld [vmem:[%s4 + $0x8c] sm:$0xf]
        %v3673 = vld [vmem:[%s4 + $0x90] sm:$0xff]
        %v3674 = vld [vmem:[%s4 + $0x98] sm:$0xf]
        %v3675 = vld [vmem:[%s4 + $0x9c] sm:$0xff]
        %v3676 = vld [vmem:[%s4 + $0xa4] sm:$0xf]
        %v3677 = vld [vmem:[%s4 + $0xa8] sm:$0xff]
        %v3678 = vld [vmem:[%s4 + $0xb0] sm:$0xf]
        %v3679 = vld [vmem:[%s4 + $0xb4] sm:$0xff]
        %v3680 = vld [vmem:[%s4 + $0xbc] sm:$0xf]
        %v3681 = vld [vmem:[%s4 + $0xc0] sm:$0xff]
        %v3682 = vld [vmem:[%s4 + $0xc8] sm:$0xf]
        %v3683 = vld [vmem:[%s4 + $0xcc] sm:$0xff]
        %v3684 = vld [vmem:[%s4 + $0xd4] sm:$0xf]
        %v3685 = vld [vmem:[%s4 + $0xd8] sm:$0xff]
        %v3686 = vld [vmem:[%s4 + $0xe0] sm:$0xf]
        %v3687 = vld [vmem:[%s4 + $0xe4] sm:$0xff]
        %v3688 = vld [vmem:[%s4 + $0xec] sm:$0xf]
        %v3689 = vld [vmem:[%s4 + $0xf0] sm:$0xff]
        %v3690 = vld [vmem:[%s4 + $0xf8] sm:$0xf]
        %v3691 = vld [vmem:[%s4 + $0xfc] sm:$0xff]
        %v3692 = vld [vmem:[%s4 + $0x104] sm:$0xf]
        %v3693 = vld [vmem:[%s4 + $0x108] sm:$0xff]
        %v3694 = vld [vmem:[%s4 + $0x110] sm:$0xf]
        %v3695 = vld [vmem:[%s4 + $0x114] sm:$0xff]
        %v3696 = vld [vmem:[%s4 + $0x11c] sm:$0xf]
        %v3697 = vld [vmem:[%s4 + $0x120] sm:$0xff]
        %v3698 = vld [vmem:[%s4 + $0x128] sm:$0xf]
        %v3699 = vld [vmem:[%s4 + $0x12c] sm:$0xff]
        %v3700 = vld [vmem:[%s4 + $0x134] sm:$0xf]
        %v3701 = vld [vmem:[%s4 + $0x138] sm:$0xff]
        %v3702 = vld [vmem:[%s4 + $0x140] sm:$0xf]
        %v3703 = vld [vmem:[%s4 + $0x144] sm:$0xff]
        %v3704 = vld [vmem:[%s4 + $0x14c] sm:$0xf]
        %v3705 = vld [vmem:[%s4 + $0x150] sm:$0xff]
        %v3706 = vld [vmem:[%s4 + $0x158] sm:$0xf]
        %v3707 = vld [vmem:[%s4 + $0x15c] sm:$0xff]
        %v3708 = vld [vmem:[%s4 + $0x164] sm:$0xf]
        %v3709 = vld [vmem:[%s4 + $0x168] sm:$0xff]
        %v3710 = vld [vmem:[%s4 + $0x170] sm:$0xf]
        %v3711 = vld [vmem:[%s4 + $0x174] sm:$0xff]
        %v3712 = vld [vmem:[%s4 + $0x17c] sm:$0xf]
        %v3713 = vld [vmem:[%s4 + $0x180] sm:$0xff]
        %v3714 = vld [vmem:[%s4 + $0x188] sm:$0xf]
        %v3715 = vld [vmem:[%s4 + $0x18c] sm:$0xff]
        %v3716 = vld [vmem:[%s4 + $0x194] sm:$0xf]
        %v3717 = vld [vmem:[%s4 + $0x198] sm:$0xff]
        %v3718 = vld [vmem:[%s4 + $0x1a0] sm:$0xf]
        %v3719 = vld [vmem:[%s4 + $0x1a4] sm:$0xff]
        %v3720 = vld [vmem:[%s4 + $0x1ac] sm:$0xf]
        %v3721 = vld [vmem:[#allocation2 + $0x18] sm:$0x11]
        %v3722 = vld [vmem:[#allocation2 + $0x20] sm:$0x1]
        %s3723 = scalar_lea.vmem %s4, 432
        %v3724 = vld [vmem:[%s3723] sm:$0xff]
        %v3725 = vld [vmem:[%s3723 + $0x8] sm:$0xf]
        %v3726 = vld [vmem:[%s3723 + $0xc] sm:$0xff]
        %v3727 = vld [vmem:[%s3723 + $0x14] sm:$0xf]
        %v3728 = vld [vmem:[%s3723 + $0x18] sm:$0xff]
        %v3729 = vld [vmem:[%s3723 + $0x20] sm:$0xf]
        %v3730 = vld [vmem:[%s3723 + $0x24] sm:$0xff]
        %v3731 = vld [vmem:[%s3723 + $0x2c] sm:$0xf]
        %v3732 = vld [vmem:[%s3723 + $0x30] sm:$0xff]
        %v3733 = vld [vmem:[%s3723 + $0x38] sm:$0xf]
        %v3734 = vld [vmem:[%s3723 + $0x3c] sm:$0xff]
        %v3735 = vld [vmem:[%s3723 + $0x44] sm:$0xf]
        %v3736 = vld [vmem:[%s3723 + $0x48] sm:$0xff]
        %v3737 = vld [vmem:[%s3723 + $0x50] sm:$0xf]
        %v3738 = vld [vmem:[%s3723 + $0x54] sm:$0xff]
        %v3739 = vld [vmem:[%s3723 + $0x5c] sm:$0xf]
        %v3740 = vld [vmem:[%s3723 + $0x60] sm:$0xff]
        %v3741 = vld [vmem:[%s3723 + $0x68] sm:$0xf]
        %v3742 = vld [vmem:[%s3723 + $0x6c] sm:$0xff]
        %v3743 = vld [vmem:[%s3723 + $0x74] sm:$0xf]
        %v3744 = vld [vmem:[%s3723 + $0x78] sm:$0xff]
        %v3745 = vld [vmem:[%s3723 + $0x80] sm:$0xf]
        %v3746 = vld [vmem:[%s3723 + $0x84] sm:$0xff]
        %v3747 = vld [vmem:[%s3723 + $0x8c] sm:$0xf]
        %v3748 = vld [vmem:[%s3723 + $0x90] sm:$0xff]
        %v3749 = vld [vmem:[%s3723 + $0x98] sm:$0xf]
        %v3750 = vld [vmem:[%s3723 + $0x9c] sm:$0xff]
        %v3751 = vld [vmem:[%s3723 + $0xa4] sm:$0xf]
        %v3752 = vld [vmem:[%s3723 + $0xa8] sm:$0xff]
        %v3753 = vld [vmem:[%s3723 + $0xb0] sm:$0xf]
        %v3754 = vld [vmem:[%s3723 + $0xb4] sm:$0xff]
        %v3755 = vld [vmem:[%s3723 + $0xbc] sm:$0xf]
        %v3756 = vld [vmem:[%s3723 + $0xc0] sm:$0xff]
        %v3757 = vld [vmem:[%s3723 + $0xc8] sm:$0xf]
        %v3758 = vld [vmem:[%s3723 + $0xcc] sm:$0xff]
        %v3759 = vld [vmem:[%s3723 + $0xd4] sm:$0xf]
        %v3760 = vld [vmem:[%s3723 + $0xd8] sm:$0xff]
        %v3761 = vld [vmem:[%s3723 + $0xe0] sm:$0xf]
        %v3762 = vld [vmem:[%s3723 + $0xe4] sm:$0xff]
        %v3763 = vld [vmem:[%s3723 + $0xec] sm:$0xf]
        %v3764 = vld [vmem:[%s3723 + $0xf0] sm:$0xff]
        %v3765 = vld [vmem:[%s3723 + $0xf8] sm:$0xf]
        %v3766 = vld [vmem:[%s3723 + $0xfc] sm:$0xff]
        %v3767 = vld [vmem:[%s3723 + $0x104] sm:$0xf]
        %v3768 = vld [vmem:[%s3723 + $0x108] sm:$0xff]
        %v3769 = vld [vmem:[%s3723 + $0x110] sm:$0xf]
        %v3770 = vld [vmem:[%s3723 + $0x114] sm:$0xff]
        %v3771 = vld [vmem:[%s3723 + $0x11c] sm:$0xf]
        %v3772 = vld [vmem:[%s3723 + $0x120] sm:$0xff]
        %v3773 = vld [vmem:[%s3723 + $0x128] sm:$0xf]
        %v3774 = vld [vmem:[%s3723 + $0x12c] sm:$0xff]
        %v3775 = vld [vmem:[%s3723 + $0x134] sm:$0xf]
        %v3776 = vld [vmem:[%s3723 + $0x138] sm:$0xff]
        %v3777 = vld [vmem:[%s3723 + $0x140] sm:$0xf]
        %v3778 = vld [vmem:[%s3723 + $0x144] sm:$0xff]
        %v3779 = vld [vmem:[%s3723 + $0x14c] sm:$0xf]
        %v3780 = vld [vmem:[%s3723 + $0x150] sm:$0xff]
        %v3781 = vld [vmem:[%s3723 + $0x158] sm:$0xf]
        %v3782 = vld [vmem:[%s3723 + $0x15c] sm:$0xff]
        %v3783 = vld [vmem:[%s3723 + $0x164] sm:$0xf]
        %v3784 = vld [vmem:[%s3723 + $0x168] sm:$0xff]
        %v3785 = vld [vmem:[%s3723 + $0x170] sm:$0xf]
        %v3786 = vld [vmem:[%s3723 + $0x174] sm:$0xff]
        %v3787 = vld [vmem:[%s3723 + $0x17c] sm:$0xf]
        %v3788 = vld [vmem:[%s3723 + $0x180] sm:$0xff]
        %v3789 = vld [vmem:[%s3723 + $0x188] sm:$0xf]
        %v3790 = vld [vmem:[%s3723 + $0x18c] sm:$0xff]
        %v3791 = vld [vmem:[%s3723 + $0x194] sm:$0xf]
        %v3792 = vld [vmem:[%s3723 + $0x198] sm:$0xff]
        %v3793 = vld [vmem:[%s3723 + $0x1a0] sm:$0xf]
        %v3794 = vld [vmem:[%s3723 + $0x1a4] sm:$0xff]
        %v3795 = vld [vmem:[%s3723 + $0x1ac] sm:$0xf]
        %v3802 = vunpack.c.l.b16 %v3645
        %v3803 = vunpack.c.h.b16 %v3645
        %v3804 = vunpack.c.l.b16 %v3646
        %v3805 = vunpack.c.l.b16 %v3647
        %v3806 = vunpack.c.h.b16 %v3647
        %v3807 = vunpack.c.l.b16 %v3648
        %v3808 = vunpack.c.l.b16 %v3721
        %v3809 = vunpack.c.h.b16 %v3721
        %v3810 = vunpack.c.l.b16 %v3722
        %v3811 = vpack.c.b16 %v3805, %v3802
        %v3812 = vpack.c.b16 %v3806, %v3803
        %v3813 = vpack.c.b16 %v3807, %v3804
        %v3814 = vpack.c.b16 %v3808, %v3808
        %v3815 = vpack.c.b16 %v3809, %v3809
        %v3816 = vpack.c.b16 %v3810, %v3810
        %v3818 = vshrl.u32 %v3811, 16
        %v3820 = vshll.u32 %v3811, 16
        %v3822 = vrot.slane %v3820, 1
        %v3823 = vor.u32 %v3818, %v3822
        %v3825 = vshll.u32 %v3814, 16
        %v3827 = vrot.slane %v3825, 1
        %v3828 = vsel %vm468, %v3823, %v3827
        %v3830 = vshrl.u32 %v3812, 16
        %v3832 = vshll.u32 %v3812, 16
        %v3834 = vrot.slane %v3832, 1
        %v3835 = vor.u32 %v3830, %v3834
        %v3837 = vshll.u32 %v3815, 16
        %v3839 = vrot.slane %v3837, 1
        %v3840 = vsel %vm468, %v3835, %v3839
        %v3842 = vshrl.u32 %v3813, 16
        %v3844 = vshll.u32 %v3813, 16
        %v3846 = vrot.slane %v3844, 1
        %v3847 = vor.u32 %v3842, %v3846
        %v3849 = vshll.u32 %v3816, 16
        %v3851 = vrot.slane %v3849, 1
        %v3852 = vsel %vm468, %v3847, %v3851
        %v3927 = vunpack.c.l.b16 %v3724
        %v3928 = vunpack.c.h.b16 %v3724
        %v3929 = vunpack.c.l.b16 %v3725
        %v3930 = vunpack.c.l.b16 %v3726
        %v3931 = vunpack.c.h.b16 %v3726
        %v3932 = vunpack.c.l.b16 %v3727
        %v3933 = vunpack.c.l.b16 %v3728
        %v3934 = vunpack.c.h.b16 %v3728
        %v3935 = vunpack.c.l.b16 %v3729
        %v3936 = vunpack.c.l.b16 %v3730
        %v3937 = vunpack.c.h.b16 %v3730
        %v3938 = vunpack.c.l.b16 %v3731
        %v3939 = vunpack.c.l.b16 %v3732
        %v3940 = vunpack.c.h.b16 %v3732
        %v3941 = vunpack.c.l.b16 %v3733
        %v3942 = vunpack.c.l.b16 %v3734
        %v3943 = vunpack.c.h.b16 %v3734
        %v3944 = vunpack.c.l.b16 %v3735
        %v3945 = vunpack.c.l.b16 %v3736
        %v3946 = vunpack.c.h.b16 %v3736
        %v3947 = vunpack.c.l.b16 %v3737
        %v3948 = vunpack.c.l.b16 %v3738
        %v3949 = vunpack.c.h.b16 %v3738
        %v3950 = vunpack.c.l.b16 %v3739
        %v3951 = vunpack.c.l.b16 %v3740
        %v3952 = vunpack.c.h.b16 %v3740
        %v3953 = vunpack.c.l.b16 %v3741
        %v3954 = vunpack.c.l.b16 %v3742
        %v3955 = vunpack.c.h.b16 %v3742
        %v3956 = vunpack.c.l.b16 %v3743
        %v3957 = vunpack.c.l.b16 %v3744
        %v3958 = vunpack.c.h.b16 %v3744
        %v3959 = vunpack.c.l.b16 %v3745
        %v3960 = vunpack.c.l.b16 %v3746
        %v3961 = vunpack.c.h.b16 %v3746
        %v3962 = vunpack.c.l.b16 %v3747
        %v3963 = vunpack.c.l.b16 %v3748
        %v3964 = vunpack.c.h.b16 %v3748
        %v3965 = vunpack.c.l.b16 %v3749
        %v3966 = vunpack.c.l.b16 %v3750
        %v3967 = vunpack.c.h.b16 %v3750
        %v3968 = vunpack.c.l.b16 %v3751
        %v3969 = vunpack.c.l.b16 %v3752
        %v3970 = vunpack.c.h.b16 %v3752
        %v3971 = vunpack.c.l.b16 %v3753
        %v3972 = vunpack.c.l.b16 %v3754
        %v3973 = vunpack.c.h.b16 %v3754
        %v3974 = vunpack.c.l.b16 %v3755
        %v3975 = vunpack.c.l.b16 %v3756
        %v3976 = vunpack.c.h.b16 %v3756
        %v3977 = vunpack.c.l.b16 %v3757
        %v3978 = vunpack.c.l.b16 %v3758
        %v3979 = vunpack.c.h.b16 %v3758
        %v3980 = vunpack.c.l.b16 %v3759
        %v3981 = vunpack.c.l.b16 %v3760
        %v3982 = vunpack.c.h.b16 %v3760
        %v3983 = vunpack.c.l.b16 %v3761
        %v3984 = vunpack.c.l.b16 %v3762
        %v3985 = vunpack.c.h.b16 %v3762
        %v3986 = vunpack.c.l.b16 %v3763
        %v3987 = vunpack.c.l.b16 %v3764
        %v3988 = vunpack.c.h.b16 %v3764
        %v3989 = vunpack.c.l.b16 %v3765
        %v3990 = vunpack.c.l.b16 %v3766
        %v3991 = vunpack.c.h.b16 %v3766
        %v3992 = vunpack.c.l.b16 %v3767
        %v3993 = vunpack.c.l.b16 %v3768
        %v3994 = vunpack.c.h.b16 %v3768
        %v3995 = vunpack.c.l.b16 %v3769
        %v3996 = vunpack.c.l.b16 %v3770
        %v3997 = vunpack.c.h.b16 %v3770
        %v3998 = vunpack.c.l.b16 %v3771
        %v3999 = vunpack.c.l.b16 %v3772
        %v4000 = vunpack.c.h.b16 %v3772
        %v4001 = vunpack.c.l.b16 %v3773
        %v4002 = vunpack.c.l.b16 %v3774
        %v4003 = vunpack.c.h.b16 %v3774
        %v4004 = vunpack.c.l.b16 %v3775
        %v4005 = vunpack.c.l.b16 %v3776
        %v4006 = vunpack.c.h.b16 %v3776
        %v4007 = vunpack.c.l.b16 %v3777
        %v4008 = vunpack.c.l.b16 %v3778
        %v4009 = vunpack.c.h.b16 %v3778
        %v4010 = vunpack.c.l.b16 %v3779
        %v4011 = vunpack.c.l.b16 %v3780
        %v4012 = vunpack.c.h.b16 %v3780
        %v4013 = vunpack.c.l.b16 %v3781
        %v4014 = vunpack.c.l.b16 %v3782
        %v4015 = vunpack.c.h.b16 %v3782
        %v4016 = vunpack.c.l.b16 %v3783
        %v4017 = vunpack.c.l.b16 %v3784
        %v4018 = vunpack.c.h.b16 %v3784
        %v4019 = vunpack.c.l.b16 %v3785
        %v4020 = vunpack.c.l.b16 %v3786
        %v4021 = vunpack.c.h.b16 %v3786
        %v4022 = vunpack.c.l.b16 %v3787
        %v4023 = vunpack.c.l.b16 %v3788
        %v4024 = vunpack.c.h.b16 %v3788
        %v4025 = vunpack.c.l.b16 %v3789
        %v4026 = vunpack.c.l.b16 %v3790
        %v4027 = vunpack.c.h.b16 %v3790
        %v4028 = vunpack.c.l.b16 %v3791
        %v4029 = vunpack.c.l.b16 %v3792
        %v4030 = vunpack.c.h.b16 %v3792
        %v4031 = vunpack.c.l.b16 %v3793
        %v4032 = vunpack.c.l.b16 %v3794
        %v4033 = vunpack.c.h.b16 %v3794
        %v4034 = vunpack.c.l.b16 %v3795
        %v4035 = vpack.c.b16 %v3930, %v3927
        %v4036 = vpack.c.b16 %v3931, %v3928
        %v4037 = vpack.c.b16 %v3932, %v3929
        %v4038 = vpack.c.b16 %v3936, %v3933
        %v4039 = vpack.c.b16 %v3937, %v3934
        %v4040 = vpack.c.b16 %v3938, %v3935
        %v4041 = vpack.c.b16 %v3942, %v3939
        %v4042 = vpack.c.b16 %v3943, %v3940
        %v4043 = vpack.c.b16 %v3944, %v3941
        %v4044 = vpack.c.b16 %v3948, %v3945
        %v4045 = vpack.c.b16 %v3949, %v3946
        %v4046 = vpack.c.b16 %v3950, %v3947
        %v4047 = vpack.c.b16 %v3954, %v3951
        %v4048 = vpack.c.b16 %v3955, %v3952
        %v4049 = vpack.c.b16 %v3956, %v3953
        %v4050 = vpack.c.b16 %v3960, %v3957
        %v4051 = vpack.c.b16 %v3961, %v3958
        %v4052 = vpack.c.b16 %v3962, %v3959
        %v4053 = vpack.c.b16 %v3966, %v3963
        %v4054 = vpack.c.b16 %v3967, %v3964
        %v4055 = vpack.c.b16 %v3968, %v3965
        %v4056 = vpack.c.b16 %v3972, %v3969
        %v4057 = vpack.c.b16 %v3973, %v3970
        %v4058 = vpack.c.b16 %v3974, %v3971
        %v4059 = vpack.c.b16 %v3978, %v3975
        %v4060 = vpack.c.b16 %v3979, %v3976
        %v4061 = vpack.c.b16 %v3980, %v3977
        %v4062 = vpack.c.b16 %v3984, %v3981
        %v4063 = vpack.c.b16 %v3985, %v3982
        %v4064 = vpack.c.b16 %v3986, %v3983
        %v4065 = vpack.c.b16 %v3990, %v3987
        %v4066 = vpack.c.b16 %v3991, %v3988
        %v4067 = vpack.c.b16 %v3992, %v3989
        %v4068 = vpack.c.b16 %v3996, %v3993
        %v4069 = vpack.c.b16 %v3997, %v3994
        %v4070 = vpack.c.b16 %v3998, %v3995
        %v4071 = vpack.c.b16 %v4002, %v3999
        %v4072 = vpack.c.b16 %v4003, %v4000
        %v4073 = vpack.c.b16 %v4004, %v4001
        %v4074 = vpack.c.b16 %v4008, %v4005
        %v4075 = vpack.c.b16 %v4009, %v4006
        %v4076 = vpack.c.b16 %v4010, %v4007
        %v4077 = vpack.c.b16 %v4014, %v4011
        %v4078 = vpack.c.b16 %v4015, %v4012
        %v4079 = vpack.c.b16 %v4016, %v4013
        %v4080 = vpack.c.b16 %v4020, %v4017
        %v4081 = vpack.c.b16 %v4021, %v4018
        %v4082 = vpack.c.b16 %v4022, %v4019
        %v4083 = vpack.c.b16 %v4026, %v4023
        %v4084 = vpack.c.b16 %v4027, %v4024
        %v4085 = vpack.c.b16 %v4028, %v4025
        %v4086 = vpack.c.b16 %v4032, %v4029
        %v4087 = vpack.c.b16 %v4033, %v4030
        %v4088 = vpack.c.b16 %v4034, %v4031
        %v4144 = vsel %vm795, %v3852, 0
        %4146 = vmatpush.bf16.msra.mxu0 %v4056
        %4147 = vmatpush.bf16.msra.mxu0 %v4053
        %4148 = vmatpush.bf16.msra.mxu0 %v4050
        %4149 = vmatpush.bf16.msra.mxu0 %v4047
        %4150 = vmatpush.bf16.msra.mxu0 %v4044
        %4151 = vmatpush.bf16.msra.mxu0 %v4041
        %4152 = vmatpush.bf16.msra.mxu0 %v4038
        %4153 = vmatpush.bf16.msra.mxu0 %v4035
        %4154 = vmatmul.bf16.gmra.mxu0 %v3828
        %v4155 = vpop.f32.mrf.mxu0
        %v4156 = vadd.f32 0.0, %v4155
        %v4157 = vpop.f32.mrf.mxu0
        %v4158 = vadd.f32 0.0, %v4157
        %4159 = vdwg.mxu0
        %4160 = vmatpush.bf16.msra.mxu0 %v4080
        %4161 = vmatpush.bf16.msra.mxu0 %v4077
        %4162 = vmatpush.bf16.msra.mxu0 %v4074
        %4163 = vmatpush.bf16.msra.mxu0 %v4071
        %4164 = vmatpush.bf16.msra.mxu0 %v4068
        %4165 = vmatpush.bf16.msra.mxu0 %v4065
        %4166 = vmatpush.bf16.msra.mxu0 %v4062
        %4167 = vmatpush.bf16.msra.mxu0 %v4059
        %4168 = vmatmul.bf16.gmra.mxu0 %v3840
        %v4169 = vpop.f32.mrf.mxu0
        %v4170 = vadd.f32 %v4156, %v4169
        %v4171 = vpop.f32.mrf.mxu0
        %v4172 = vadd.f32 %v4158, %v4171
        %4173 = vdwg.mxu0
        %4174 = vmatpush.bf16.msra.mxu0 0
        %4175 = vmatpush.bf16.msra.mxu0 0
        %4176 = vmatpush.bf16.msra.mxu0 0
        %4177 = vmatpush.bf16.msra.mxu0 0
        %4178 = vmatpush.bf16.msra.mxu0 0
        %4179 = vmatpush.bf16.msra.mxu0 0
        %4180 = vmatpush.bf16.msra.mxu0 %v4086
        %4181 = vmatpush.bf16.msra.mxu0 %v4083
        %4182 = vmatmul.bf16.gmra.mxu0 %v4144
        %v4183 = vpop.f32.mrf.mxu0
        %v4184 = vadd.f32 %v4170, %v4183
        %v4185 = vpop.f32.mrf.mxu0
        %v4186 = vadd.f32 %v4172, %v4185
        %4187 = vdwg.mxu0
        %4188 = vmatpush.bf16.msra.mxu0 %v4057
        %4189 = vmatpush.bf16.msra.mxu0 %v4054
        %4190 = vmatpush.bf16.msra.mxu0 %v4051
        %4191 = vmatpush.bf16.msra.mxu0 %v4048
        %4192 = vmatpush.bf16.msra.mxu0 %v4045
        %4193 = vmatpush.bf16.msra.mxu0 %v4042
        %4194 = vmatpush.bf16.msra.mxu0 %v4039
        %4195 = vmatpush.bf16.msra.mxu0 %v4036
        %4196 = vmatmul.bf16.gmra.mxu0 %v3828
        %v4197 = vpop.f32.mrf.mxu0
        %v4198 = vadd.f32 0.0, %v4197
        %v4199 = vpop.f32.mrf.mxu0
        %v4200 = vadd.f32 0.0, %v4199
        %4201 = vdwg.mxu0
        %4202 = vmatpush.bf16.msra.mxu0 %v4081
        %4203 = vmatpush.bf16.msra.mxu0 %v4078
        %4204 = vmatpush.bf16.msra.mxu0 %v4075
        %4205 = vmatpush.bf16.msra.mxu0 %v4072
        %4206 = vmatpush.bf16.msra.mxu0 %v4069
        %4207 = vmatpush.bf16.msra.mxu0 %v4066
        %4208 = vmatpush.bf16.msra.mxu0 %v4063
        %4209 = vmatpush.bf16.msra.mxu0 %v4060
        %4210 = vmatmul.bf16.gmra.mxu0 %v3840
        %v4211 = vpop.f32.mrf.mxu0
        %v4212 = vadd.f32 %v4198, %v4211
        %v4213 = vpop.f32.mrf.mxu0
        %v4214 = vadd.f32 %v4200, %v4213
        %4215 = vdwg.mxu0
        %4216 = vmatpush.bf16.msra.mxu0 0
        %4217 = vmatpush.bf16.msra.mxu0 0
        %4218 = vmatpush.bf16.msra.mxu0 0
        %4219 = vmatpush.bf16.msra.mxu0 0
        %4220 = vmatpush.bf16.msra.mxu0 0
        %4221 = vmatpush.bf16.msra.mxu0 0
        %4222 = vmatpush.bf16.msra.mxu0 %v4087
        %4223 = vmatpush.bf16.msra.mxu0 %v4084
        %4224 = vmatmul.bf16.gmra.mxu0 %v4144
        %v4225 = vpop.f32.mrf.mxu0
        %v4226 = vadd.f32 %v4212, %v4225
        %v4227 = vpop.f32.mrf.mxu0
        %v4228 = vadd.f32 %v4214, %v4227
        %4229 = vdwg.mxu0
        %4230 = vmatpush.bf16.msra.mxu0 %v4058
        %4231 = vmatpush.bf16.msra.mxu0 %v4055
        %4232 = vmatpush.bf16.msra.mxu0 %v4052
        %4233 = vmatpush.bf16.msra.mxu0 %v4049
        %4234 = vmatpush.bf16.msra.mxu0 %v4046
        %4235 = vmatpush.bf16.msra.mxu0 %v4043
        %4236 = vmatpush.bf16.msra.mxu0 %v4040
        %4237 = vmatpush.bf16.msra.mxu0 %v4037
        %4238 = vmatmul.bf16.gmra.mxu0 %v3828
        %v4239 = vpop.f32.mrf.mxu0
        %v4240 = vadd.f32 0.0, %v4239
        %v4241 = vpop.f32.mrf.mxu0
        %v4242 = vadd.f32 0.0, %v4241
        %4243 = vdwg.mxu0
        %4244 = vmatpush.bf16.msra.mxu0 %v4082
        %4245 = vmatpush.bf16.msra.mxu0 %v4079
        %4246 = vmatpush.bf16.msra.mxu0 %v4076
        %4247 = vmatpush.bf16.msra.mxu0 %v4073
        %4248 = vmatpush.bf16.msra.mxu0 %v4070
        %4249 = vmatpush.bf16.msra.mxu0 %v4067
        %4250 = vmatpush.bf16.msra.mxu0 %v4064
        %4251 = vmatpush.bf16.msra.mxu0 %v4061
        %4252 = vmatmul.bf16.gmra.mxu0 %v3840
        %v4253 = vpop.f32.mrf.mxu0
        %v4254 = vadd.f32 %v4240, %v4253
        %v4255 = vpop.f32.mrf.mxu0
        %v4256 = vadd.f32 %v4242, %v4255
        %4257 = vdwg.mxu0
        %4258 = vmatpush.bf16.msra.mxu0 0
        %4259 = vmatpush.bf16.msra.mxu0 0
        %4260 = vmatpush.bf16.msra.mxu0 0
        %4261 = vmatpush.bf16.msra.mxu0 0
        %4262 = vmatpush.bf16.msra.mxu0 0
        %4263 = vmatpush.bf16.msra.mxu0 0
        %4264 = vmatpush.bf16.msra.mxu0 %v4088
        %4265 = vmatpush.bf16.msra.mxu0 %v4085
        %4266 = vmatmul.bf16.gmra.mxu0 %v4144
        %v4267 = vpop.f32.mrf.mxu0
        %v4268 = vadd.f32 %v4254, %v4267
        %v4269 = vpop.f32.mrf.mxu0
        %v4270 = vadd.f32 %v4256, %v4269
        %4271 = vdwg.mxu0
        %v4346 = vunpack.c.l.b16 %v3649
        %v4347 = vunpack.c.h.b16 %v3649
        %v4348 = vunpack.c.l.b16 %v3650
        %v4349 = vunpack.c.l.b16 %v3651
        %v4350 = vunpack.c.h.b16 %v3651
        %v4351 = vunpack.c.l.b16 %v3652
        %v4352 = vunpack.c.l.b16 %v3653
        %v4353 = vunpack.c.h.b16 %v3653
        %v4354 = vunpack.c.l.b16 %v3654
        %v4355 = vunpack.c.l.b16 %v3655
        %v4356 = vunpack.c.h.b16 %v3655
        %v4357 = vunpack.c.l.b16 %v3656
        %v4358 = vunpack.c.l.b16 %v3657
        %v4359 = vunpack.c.h.b16 %v3657
        %v4360 = vunpack.c.l.b16 %v3658
        %v4361 = vunpack.c.l.b16 %v3659
        %v4362 = vunpack.c.h.b16 %v3659
        %v4363 = vunpack.c.l.b16 %v3660
        %v4364 = vunpack.c.l.b16 %v3661
        %v4365 = vunpack.c.h.b16 %v3661
        %v4366 = vunpack.c.l.b16 %v3662
        %v4367 = vunpack.c.l.b16 %v3663
        %v4368 = vunpack.c.h.b16 %v3663
        %v4369 = vunpack.c.l.b16 %v3664
        %v4370 = vunpack.c.l.b16 %v3665
        %v4371 = vunpack.c.h.b16 %v3665
        %v4372 = vunpack.c.l.b16 %v3666
        %v4373 = vunpack.c.l.b16 %v3667
        %v4374 = vunpack.c.h.b16 %v3667
        %v4375 = vunpack.c.l.b16 %v3668
        %v4376 = vunpack.c.l.b16 %v3669
        %v4377 = vunpack.c.h.b16 %v3669
        %v4378 = vunpack.c.l.b16 %v3670
        %v4379 = vunpack.c.l.b16 %v3671
        %v4380 = vunpack.c.h.b16 %v3671
        %v4381 = vunpack.c.l.b16 %v3672
        %v4382 = vunpack.c.l.b16 %v3673
        %v4383 = vunpack.c.h.b16 %v3673
        %v4384 = vunpack.c.l.b16 %v3674
        %v4385 = vunpack.c.l.b16 %v3675
        %v4386 = vunpack.c.h.b16 %v3675
        %v4387 = vunpack.c.l.b16 %v3676
        %v4388 = vunpack.c.l.b16 %v3677
        %v4389 = vunpack.c.h.b16 %v3677
        %v4390 = vunpack.c.l.b16 %v3678
        %v4391 = vunpack.c.l.b16 %v3679
        %v4392 = vunpack.c.h.b16 %v3679
        %v4393 = vunpack.c.l.b16 %v3680
        %v4394 = vunpack.c.l.b16 %v3681
        %v4395 = vunpack.c.h.b16 %v3681
        %v4396 = vunpack.c.l.b16 %v3682
        %v4397 = vunpack.c.l.b16 %v3683
        %v4398 = vunpack.c.h.b16 %v3683
        %v4399 = vunpack.c.l.b16 %v3684
        %v4400 = vunpack.c.l.b16 %v3685
        %v4401 = vunpack.c.h.b16 %v3685
        %v4402 = vunpack.c.l.b16 %v3686
        %v4403 = vunpack.c.l.b16 %v3687
        %v4404 = vunpack.c.h.b16 %v3687
        %v4405 = vunpack.c.l.b16 %v3688
        %v4406 = vunpack.c.l.b16 %v3689
        %v4407 = vunpack.c.h.b16 %v3689
        %v4408 = vunpack.c.l.b16 %v3690
        %v4409 = vunpack.c.l.b16 %v3691
        %v4410 = vunpack.c.h.b16 %v3691
        %v4411 = vunpack.c.l.b16 %v3692
        %v4412 = vunpack.c.l.b16 %v3693
        %v4413 = vunpack.c.h.b16 %v3693
        %v4414 = vunpack.c.l.b16 %v3694
        %v4415 = vunpack.c.l.b16 %v3695
        %v4416 = vunpack.c.h.b16 %v3695
        %v4417 = vunpack.c.l.b16 %v3696
        %v4418 = vunpack.c.l.b16 %v3697
        %v4419 = vunpack.c.h.b16 %v3697
        %v4420 = vunpack.c.l.b16 %v3698
        %v4421 = vunpack.c.l.b16 %v3699
        %v4422 = vunpack.c.h.b16 %v3699
        %v4423 = vunpack.c.l.b16 %v3700
        %v4424 = vunpack.c.l.b16 %v3701
        %v4425 = vunpack.c.h.b16 %v3701
        %v4426 = vunpack.c.l.b16 %v3702
        %v4427 = vunpack.c.l.b16 %v3703
        %v4428 = vunpack.c.h.b16 %v3703
        %v4429 = vunpack.c.l.b16 %v3704
        %v4430 = vunpack.c.l.b16 %v3705
        %v4431 = vunpack.c.h.b16 %v3705
        %v4432 = vunpack.c.l.b16 %v3706
        %v4433 = vunpack.c.l.b16 %v3707
        %v4434 = vunpack.c.h.b16 %v3707
        %v4435 = vunpack.c.l.b16 %v3708
        %v4436 = vunpack.c.l.b16 %v3709
        %v4437 = vunpack.c.h.b16 %v3709
        %v4438 = vunpack.c.l.b16 %v3710
        %v4439 = vunpack.c.l.b16 %v3711
        %v4440 = vunpack.c.h.b16 %v3711
        %v4441 = vunpack.c.l.b16 %v3712
        %v4442 = vunpack.c.l.b16 %v3713
        %v4443 = vunpack.c.h.b16 %v3713
        %v4444 = vunpack.c.l.b16 %v3714
        %v4445 = vunpack.c.l.b16 %v3715
        %v4446 = vunpack.c.h.b16 %v3715
        %v4447 = vunpack.c.l.b16 %v3716
        %v4448 = vunpack.c.l.b16 %v3717
        %v4449 = vunpack.c.h.b16 %v3717
        %v4450 = vunpack.c.l.b16 %v3718
        %v4451 = vunpack.c.l.b16 %v3719
        %v4452 = vunpack.c.h.b16 %v3719
        %v4453 = vunpack.c.l.b16 %v3720
        %v4454 = vpack.c.b16 %v4349, %v4346
        %v4455 = vpack.c.b16 %v4350, %v4347
        %v4456 = vpack.c.b16 %v4351, %v4348
        %v4457 = vpack.c.b16 %v4355, %v4352
        %v4458 = vpack.c.b16 %v4356, %v4353
        %v4459 = vpack.c.b16 %v4357, %v4354
        %v4460 = vpack.c.b16 %v4361, %v4358
        %v4461 = vpack.c.b16 %v4362, %v4359
        %v4462 = vpack.c.b16 %v4363, %v4360
        %v4463 = vpack.c.b16 %v4367, %v4364
        %v4464 = vpack.c.b16 %v4368, %v4365
        %v4465 = vpack.c.b16 %v4369, %v4366
        %v4466 = vpack.c.b16 %v4373, %v4370
        %v4467 = vpack.c.b16 %v4374, %v4371
        %v4468 = vpack.c.b16 %v4375, %v4372
        %v4469 = vpack.c.b16 %v4379, %v4376
        %v4470 = vpack.c.b16 %v4380, %v4377
        %v4471 = vpack.c.b16 %v4381, %v4378
        %v4472 = vpack.c.b16 %v4385, %v4382
        %v4473 = vpack.c.b16 %v4386, %v4383
        %v4474 = vpack.c.b16 %v4387, %v4384
        %v4475 = vpack.c.b16 %v4391, %v4388
        %v4476 = vpack.c.b16 %v4392, %v4389
        %v4477 = vpack.c.b16 %v4393, %v4390
        %v4478 = vpack.c.b16 %v4397, %v4394
        %v4479 = vpack.c.b16 %v4398, %v4395
        %v4480 = vpack.c.b16 %v4399, %v4396
        %v4481 = vpack.c.b16 %v4403, %v4400
        %v4482 = vpack.c.b16 %v4404, %v4401
        %v4483 = vpack.c.b16 %v4405, %v4402
        %v4484 = vpack.c.b16 %v4409, %v4406
        %v4485 = vpack.c.b16 %v4410, %v4407
        %v4486 = vpack.c.b16 %v4411, %v4408
        %v4487 = vpack.c.b16 %v4415, %v4412
        %v4488 = vpack.c.b16 %v4416, %v4413
        %v4489 = vpack.c.b16 %v4417, %v4414
        %v4490 = vpack.c.b16 %v4421, %v4418
        %v4491 = vpack.c.b16 %v4422, %v4419
        %v4492 = vpack.c.b16 %v4423, %v4420
        %v4493 = vpack.c.b16 %v4427, %v4424
        %v4494 = vpack.c.b16 %v4428, %v4425
        %v4495 = vpack.c.b16 %v4429, %v4426
        %v4496 = vpack.c.b16 %v4433, %v4430
        %v4497 = vpack.c.b16 %v4434, %v4431
        %v4498 = vpack.c.b16 %v4435, %v4432
        %v4499 = vpack.c.b16 %v4439, %v4436
        %v4500 = vpack.c.b16 %v4440, %v4437
        %v4501 = vpack.c.b16 %v4441, %v4438
        %v4502 = vpack.c.b16 %v4445, %v4442
        %v4503 = vpack.c.b16 %v4446, %v4443
        %v4504 = vpack.c.b16 %v4447, %v4444
        %v4505 = vpack.c.b16 %v4451, %v4448
        %v4506 = vpack.c.b16 %v4452, %v4449
        %v4507 = vpack.c.b16 %v4453, %v4450
        %v4562 = vsel %vm795, %v3813, 0
        %4564 = vmatpush.bf16.msra.mxu0 %v4475
        %4565 = vmatpush.bf16.msra.mxu0 %v4472
        %4566 = vmatpush.bf16.msra.mxu0 %v4469
        %4567 = vmatpush.bf16.msra.mxu0 %v4466
        %4568 = vmatpush.bf16.msra.mxu0 %v4463
        %4569 = vmatpush.bf16.msra.mxu0 %v4460
        %4570 = vmatpush.bf16.msra.mxu0 %v4457
        %4571 = vmatpush.bf16.msra.mxu0 %v4454
        %4572 = vmatmul.bf16.gmra.mxu0 %v3811
        %v4573 = vpop.f32.mrf.mxu0
        %v4574 = vadd.f32 %v4184, %v4573
        %v4575 = vpop.f32.mrf.mxu0
        %v4576 = vadd.f32 %v4186, %v4575
        %4577 = vdwg.mxu0
        %4578 = vmatpush.bf16.msra.mxu0 %v4499
        %4579 = vmatpush.bf16.msra.mxu0 %v4496
        %4580 = vmatpush.bf16.msra.mxu0 %v4493
        %4581 = vmatpush.bf16.msra.mxu0 %v4490
        %4582 = vmatpush.bf16.msra.mxu0 %v4487
        %4583 = vmatpush.bf16.msra.mxu0 %v4484
        %4584 = vmatpush.bf16.msra.mxu0 %v4481
        %4585 = vmatpush.bf16.msra.mxu0 %v4478
        %4586 = vmatmul.bf16.gmra.mxu0 %v3812
        %v4587 = vpop.f32.mrf.mxu0
        %v4588 = vadd.f32 %v4574, %v4587
        %v4589 = vpop.f32.mrf.mxu0
        %v4590 = vadd.f32 %v4576, %v4589
        %4591 = vdwg.mxu0
        %4592 = vmatpush.bf16.msra.mxu0 0
        %4593 = vmatpush.bf16.msra.mxu0 0
        %4594 = vmatpush.bf16.msra.mxu0 0
        %4595 = vmatpush.bf16.msra.mxu0 0
        %4596 = vmatpush.bf16.msra.mxu0 0
        %4597 = vmatpush.bf16.msra.mxu0 0
        %4598 = vmatpush.bf16.msra.mxu0 %v4505
        %4599 = vmatpush.bf16.msra.mxu0 %v4502
        %4600 = vmatmul.bf16.gmra.mxu0 %v4562
        %v4601 = vpop.f32.mrf.mxu0
        %v4602 = vadd.f32 %v4588, %v4601
        %v4603 = vpop.f32.mrf.mxu0
        %v4604 = vadd.f32 %v4590, %v4603
        %4605 = vdwg.mxu0
        %4606 = vmatpush.bf16.msra.mxu0 %v4476
        %4607 = vmatpush.bf16.msra.mxu0 %v4473
        %4608 = vmatpush.bf16.msra.mxu0 %v4470
        %4609 = vmatpush.bf16.msra.mxu0 %v4467
        %4610 = vmatpush.bf16.msra.mxu0 %v4464
        %4611 = vmatpush.bf16.msra.mxu0 %v4461
        %4612 = vmatpush.bf16.msra.mxu0 %v4458
        %4613 = vmatpush.bf16.msra.mxu0 %v4455
        %4614 = vmatmul.bf16.gmra.mxu0 %v3811
        %v4615 = vpop.f32.mrf.mxu0
        %v4616 = vadd.f32 %v4226, %v4615
        %v4617 = vpop.f32.mrf.mxu0
        %v4618 = vadd.f32 %v4228, %v4617
        %4619 = vdwg.mxu0
        %4620 = vmatpush.bf16.msra.mxu0 %v4500
        %4621 = vmatpush.bf16.msra.mxu0 %v4497
        %4622 = vmatpush.bf16.msra.mxu0 %v4494
        %4623 = vmatpush.bf16.msra.mxu0 %v4491
        %4624 = vmatpush.bf16.msra.mxu0 %v4488
        %4625 = vmatpush.bf16.msra.mxu0 %v4485
        %4626 = vmatpush.bf16.msra.mxu0 %v4482
        %4627 = vmatpush.bf16.msra.mxu0 %v4479
        %4628 = vmatmul.bf16.gmra.mxu0 %v3812
        %v4629 = vpop.f32.mrf.mxu0
        %v4630 = vadd.f32 %v4616, %v4629
        %v4631 = vpop.f32.mrf.mxu0
        %v4632 = vadd.f32 %v4618, %v4631
        %4633 = vdwg.mxu0
        %4634 = vmatpush.bf16.msra.mxu0 0
        %4635 = vmatpush.bf16.msra.mxu0 0
        %4636 = vmatpush.bf16.msra.mxu0 0
        %4637 = vmatpush.bf16.msra.mxu0 0
        %4638 = vmatpush.bf16.msra.mxu0 0
        %4639 = vmatpush.bf16.msra.mxu0 0
        %4640 = vmatpush.bf16.msra.mxu0 %v4506
        %4641 = vmatpush.bf16.msra.mxu0 %v4503
        %4642 = vmatmul.bf16.gmra.mxu0 %v4562
        %v4643 = vpop.f32.mrf.mxu0
        %v4644 = vadd.f32 %v4630, %v4643
        %v4645 = vpop.f32.mrf.mxu0
        %v4646 = vadd.f32 %v4632, %v4645
        %4647 = vdwg.mxu0
        %4648 = vmatpush.bf16.msra.mxu0 %v4477
        %4649 = vmatpush.bf16.msra.mxu0 %v4474
        %4650 = vmatpush.bf16.msra.mxu0 %v4471
        %4651 = vmatpush.bf16.msra.mxu0 %v4468
        %4652 = vmatpush.bf16.msra.mxu0 %v4465
        %4653 = vmatpush.bf16.msra.mxu0 %v4462
        %4654 = vmatpush.bf16.msra.mxu0 %v4459
        %4655 = vmatpush.bf16.msra.mxu0 %v4456
        %4656 = vmatmul.bf16.gmra.mxu0 %v3811
        %v4657 = vpop.f32.mrf.mxu0
        %v4658 = vadd.f32 %v4268, %v4657
        %v4659 = vpop.f32.mrf.mxu0
        %v4660 = vadd.f32 %v4270, %v4659
        %4661 = vdwg.mxu0
        %4662 = vmatpush.bf16.msra.mxu0 %v4501
        %4663 = vmatpush.bf16.msra.mxu0 %v4498
        %4664 = vmatpush.bf16.msra.mxu0 %v4495
        %4665 = vmatpush.bf16.msra.mxu0 %v4492
        %4666 = vmatpush.bf16.msra.mxu0 %v4489
        %4667 = vmatpush.bf16.msra.mxu0 %v4486
        %4668 = vmatpush.bf16.msra.mxu0 %v4483
        %4669 = vmatpush.bf16.msra.mxu0 %v4480
        %4670 = vmatmul.bf16.gmra.mxu0 %v3812
        %v4671 = vpop.f32.mrf.mxu0
        %v4672 = vadd.f32 %v4658, %v4671
        %v4673 = vpop.f32.mrf.mxu0
        %v4674 = vadd.f32 %v4660, %v4673
        %4675 = vdwg.mxu0
        %4676 = vmatpush.bf16.msra.mxu0 0
        %4677 = vmatpush.bf16.msra.mxu0 0
        %4678 = vmatpush.bf16.msra.mxu0 0
        %4679 = vmatpush.bf16.msra.mxu0 0
        %4680 = vmatpush.bf16.msra.mxu0 0
        %4681 = vmatpush.bf16.msra.mxu0 0
        %4682 = vmatpush.bf16.msra.mxu0 %v4507
        %4683 = vmatpush.bf16.msra.mxu0 %v4504
        %4684 = vmatmul.bf16.gmra.mxu0 %v4562
        %v4685 = vpop.f32.mrf.mxu0
        %v4686 = vadd.f32 %v4672, %v4685
        %v4687 = vpop.f32.mrf.mxu0
        %v4688 = vadd.f32 %v4674, %v4687
        %4689 = vdwg.mxu0
        %v4690 = vld [vmem:[#allocation2] sm:$0xee]
        %v4691 = vld [vmem:[#allocation2 + $0x8] sm:$0xe]
        %s4692 = scalar_lea.vmem %s4, 864
        %v4693 = vld [vmem:[%s4692] sm:$0xff]
        %v4694 = vld [vmem:[%s4692 + $0x8] sm:$0xf]
        %v4695 = vld [vmem:[%s4692 + $0xc] sm:$0xff]
        %v4696 = vld [vmem:[%s4692 + $0x14] sm:$0xf]
        %v4697 = vld [vmem:[%s4692 + $0x18] sm:$0xff]
        %v4698 = vld [vmem:[%s4692 + $0x20] sm:$0xf]
        %v4699 = vld [vmem:[%s4692 + $0x24] sm:$0xff]
        %v4700 = vld [vmem:[%s4692 + $0x2c] sm:$0xf]
        %v4701 = vld [vmem:[%s4692 + $0x30] sm:$0xff]
        %v4702 = vld [vmem:[%s4692 + $0x38] sm:$0xf]
        %v4703 = vld [vmem:[%s4692 + $0x3c] sm:$0xff]
        %v4704 = vld [vmem:[%s4692 + $0x44] sm:$0xf]
        %v4705 = vld [vmem:[%s4692 + $0x48] sm:$0xff]
        %v4706 = vld [vmem:[%s4692 + $0x50] sm:$0xf]
        %v4707 = vld [vmem:[%s4692 + $0x54] sm:$0xff]
        %v4708 = vld [vmem:[%s4692 + $0x5c] sm:$0xf]
        %v4709 = vld [vmem:[%s4692 + $0x60] sm:$0xff]
        %v4710 = vld [vmem:[%s4692 + $0x68] sm:$0xf]
        %v4711 = vld [vmem:[%s4692 + $0x6c] sm:$0xff]
        %v4712 = vld [vmem:[%s4692 + $0x74] sm:$0xf]
        %v4713 = vld [vmem:[%s4692 + $0x78] sm:$0xff]
        %v4714 = vld [vmem:[%s4692 + $0x80] sm:$0xf]
        %v4715 = vld [vmem:[%s4692 + $0x84] sm:$0xff]
        %v4716 = vld [vmem:[%s4692 + $0x8c] sm:$0xf]
        %v4717 = vld [vmem:[%s4692 + $0x90] sm:$0xff]
        %v4718 = vld [vmem:[%s4692 + $0x98] sm:$0xf]
        %v4719 = vld [vmem:[%s4692 + $0x9c] sm:$0xff]
        %v4720 = vld [vmem:[%s4692 + $0xa4] sm:$0xf]
        %v4721 = vld [vmem:[%s4692 + $0xa8] sm:$0xff]
        %v4722 = vld [vmem:[%s4692 + $0xb0] sm:$0xf]
        %v4723 = vld [vmem:[%s4692 + $0xb4] sm:$0xff]
        %v4724 = vld [vmem:[%s4692 + $0xbc] sm:$0xf]
        %v4725 = vld [vmem:[%s4692 + $0xc0] sm:$0xff]
        %v4726 = vld [vmem:[%s4692 + $0xc8] sm:$0xf]
        %v4727 = vld [vmem:[%s4692 + $0xcc] sm:$0xff]
        %v4728 = vld [vmem:[%s4692 + $0xd4] sm:$0xf]
        %v4729 = vld [vmem:[%s4692 + $0xd8] sm:$0xff]
        %v4730 = vld [vmem:[%s4692 + $0xe0] sm:$0xf]
        %v4731 = vld [vmem:[%s4692 + $0xe4] sm:$0xff]
        %v4732 = vld [vmem:[%s4692 + $0xec] sm:$0xf]
        %v4733 = vld [vmem:[%s4692 + $0xf0] sm:$0xff]
        %v4734 = vld [vmem:[%s4692 + $0xf8] sm:$0xf]
        %v4735 = vld [vmem:[%s4692 + $0xfc] sm:$0xff]
        %v4736 = vld [vmem:[%s4692 + $0x104] sm:$0xf]
        %v4737 = vld [vmem:[%s4692 + $0x108] sm:$0xff]
        %v4738 = vld [vmem:[%s4692 + $0x110] sm:$0xf]
        %v4739 = vld [vmem:[%s4692 + $0x114] sm:$0xff]
        %v4740 = vld [vmem:[%s4692 + $0x11c] sm:$0xf]
        %v4741 = vld [vmem:[%s4692 + $0x120] sm:$0xff]
        %v4742 = vld [vmem:[%s4692 + $0x128] sm:$0xf]
        %v4743 = vld [vmem:[%s4692 + $0x12c] sm:$0xff]
        %v4744 = vld [vmem:[%s4692 + $0x134] sm:$0xf]
        %v4745 = vld [vmem:[%s4692 + $0x138] sm:$0xff]
        %v4746 = vld [vmem:[%s4692 + $0x140] sm:$0xf]
        %v4747 = vld [vmem:[%s4692 + $0x144] sm:$0xff]
        %v4748 = vld [vmem:[%s4692 + $0x14c] sm:$0xf]
        %v4749 = vld [vmem:[%s4692 + $0x150] sm:$0xff]
        %v4750 = vld [vmem:[%s4692 + $0x158] sm:$0xf]
        %v4751 = vld [vmem:[%s4692 + $0x15c] sm:$0xff]
        %v4752 = vld [vmem:[%s4692 + $0x164] sm:$0xf]
        %v4753 = vld [vmem:[%s4692 + $0x168] sm:$0xff]
        %v4754 = vld [vmem:[%s4692 + $0x170] sm:$0xf]
        %v4755 = vld [vmem:[%s4692 + $0x174] sm:$0xff]
        %v4756 = vld [vmem:[%s4692 + $0x17c] sm:$0xf]
        %v4757 = vld [vmem:[%s4692 + $0x180] sm:$0xff]
        %v4758 = vld [vmem:[%s4692 + $0x188] sm:$0xf]
        %v4759 = vld [vmem:[%s4692 + $0x18c] sm:$0xff]
        %v4760 = vld [vmem:[%s4692 + $0x194] sm:$0xf]
        %v4761 = vld [vmem:[%s4692 + $0x198] sm:$0xff]
        %v4762 = vld [vmem:[%s4692 + $0x1a0] sm:$0xf]
        %v4763 = vld [vmem:[%s4692 + $0x1a4] sm:$0xff]
        %v4764 = vld [vmem:[%s4692 + $0x1ac] sm:$0xf]
        %v4767 = vunpack.c.l.b16 %v4690
        %v4768 = vunpack.c.h.b16 %v4690
        %v4769 = vunpack.c.l.b16 %v4691
        %v4770 = vpack.c.b16 %v3805, %v4767
        %v4771 = vpack.c.b16 %v3806, %v4768
        %v4772 = vpack.c.b16 %v3807, %v4769
        %v4773 = vrot.slane %v4770, 1
        %v4774 = vrot.slane %v3814, 1
        %v4775 = vsel %vm1426, %v4773, %v4774
        %v4776 = vrot.slane %v4771, 1
        %v4777 = vrot.slane %v3815, 1
        %v4778 = vsel %vm1426, %v4776, %v4777
        %v4779 = vrot.slane %v4772, 1
        %v4780 = vrot.slane %v3816, 1
        %v4781 = vsel %vm1426, %v4779, %v4780
        %v4856 = vunpack.c.l.b16 %v4693
        %v4857 = vunpack.c.h.b16 %v4693
        %v4858 = vunpack.c.l.b16 %v4694
        %v4859 = vunpack.c.l.b16 %v4695
        %v4860 = vunpack.c.h.b16 %v4695
        %v4861 = vunpack.c.l.b16 %v4696
        %v4862 = vunpack.c.l.b16 %v4697
        %v4863 = vunpack.c.h.b16 %v4697
        %v4864 = vunpack.c.l.b16 %v4698
        %v4865 = vunpack.c.l.b16 %v4699
        %v4866 = vunpack.c.h.b16 %v4699
        %v4867 = vunpack.c.l.b16 %v4700
        %v4868 = vunpack.c.l.b16 %v4701
        %v4869 = vunpack.c.h.b16 %v4701
        %v4870 = vunpack.c.l.b16 %v4702
        %v4871 = vunpack.c.l.b16 %v4703
        %v4872 = vunpack.c.h.b16 %v4703
        %v4873 = vunpack.c.l.b16 %v4704
        %v4874 = vunpack.c.l.b16 %v4705
        %v4875 = vunpack.c.h.b16 %v4705
        %v4876 = vunpack.c.l.b16 %v4706
        %v4877 = vunpack.c.l.b16 %v4707
        %v4878 = vunpack.c.h.b16 %v4707
        %v4879 = vunpack.c.l.b16 %v4708
        %v4880 = vunpack.c.l.b16 %v4709
        %v4881 = vunpack.c.h.b16 %v4709
        %v4882 = vunpack.c.l.b16 %v4710
        %v4883 = vunpack.c.l.b16 %v4711
        %v4884 = vunpack.c.h.b16 %v4711
        %v4885 = vunpack.c.l.b16 %v4712
        %v4886 = vunpack.c.l.b16 %v4713
        %v4887 = vunpack.c.h.b16 %v4713
        %v4888 = vunpack.c.l.b16 %v4714
        %v4889 = vunpack.c.l.b16 %v4715
        %v4890 = vunpack.c.h.b16 %v4715
        %v4891 = vunpack.c.l.b16 %v4716
        %v4892 = vunpack.c.l.b16 %v4717
        %v4893 = vunpack.c.h.b16 %v4717
        %v4894 = vunpack.c.l.b16 %v4718
        %v4895 = vunpack.c.l.b16 %v4719
        %v4896 = vunpack.c.h.b16 %v4719
        %v4897 = vunpack.c.l.b16 %v4720
        %v4898 = vunpack.c.l.b16 %v4721
        %v4899 = vunpack.c.h.b16 %v4721
        %v4900 = vunpack.c.l.b16 %v4722
        %v4901 = vunpack.c.l.b16 %v4723
        %v4902 = vunpack.c.h.b16 %v4723
        %v4903 = vunpack.c.l.b16 %v4724
        %v4904 = vunpack.c.l.b16 %v4725
        %v4905 = vunpack.c.h.b16 %v4725
        %v4906 = vunpack.c.l.b16 %v4726
        %v4907 = vunpack.c.l.b16 %v4727
        %v4908 = vunpack.c.h.b16 %v4727
        %v4909 = vunpack.c.l.b16 %v4728
        %v4910 = vunpack.c.l.b16 %v4729
        %v4911 = vunpack.c.h.b16 %v4729
        %v4912 = vunpack.c.l.b16 %v4730
        %v4913 = vunpack.c.l.b16 %v4731
        %v4914 = vunpack.c.h.b16 %v4731
        %v4915 = vunpack.c.l.b16 %v4732
        %v4916 = vunpack.c.l.b16 %v4733
        %v4917 = vunpack.c.h.b16 %v4733
        %v4918 = vunpack.c.l.b16 %v4734
        %v4919 = vunpack.c.l.b16 %v4735
        %v4920 = vunpack.c.h.b16 %v4735
        %v4921 = vunpack.c.l.b16 %v4736
        %v4922 = vunpack.c.l.b16 %v4737
        %v4923 = vunpack.c.h.b16 %v4737
        %v4924 = vunpack.c.l.b16 %v4738
        %v4925 = vunpack.c.l.b16 %v4739
        %v4926 = vunpack.c.h.b16 %v4739
        %v4927 = vunpack.c.l.b16 %v4740
        %v4928 = vunpack.c.l.b16 %v4741
        %v4929 = vunpack.c.h.b16 %v4741
        %v4930 = vunpack.c.l.b16 %v4742
        %v4931 = vunpack.c.l.b16 %v4743
        %v4932 = vunpack.c.h.b16 %v4743
        %v4933 = vunpack.c.l.b16 %v4744
        %v4934 = vunpack.c.l.b16 %v4745
        %v4935 = vunpack.c.h.b16 %v4745
        %v4936 = vunpack.c.l.b16 %v4746
        %v4937 = vunpack.c.l.b16 %v4747
        %v4938 = vunpack.c.h.b16 %v4747
        %v4939 = vunpack.c.l.b16 %v4748
        %v4940 = vunpack.c.l.b16 %v4749
        %v4941 = vunpack.c.h.b16 %v4749
        %v4942 = vunpack.c.l.b16 %v4750
        %v4943 = vunpack.c.l.b16 %v4751
        %v4944 = vunpack.c.h.b16 %v4751
        %v4945 = vunpack.c.l.b16 %v4752
        %v4946 = vunpack.c.l.b16 %v4753
        %v4947 = vunpack.c.h.b16 %v4753
        %v4948 = vunpack.c.l.b16 %v4754
        %v4949 = vunpack.c.l.b16 %v4755
        %v4950 = vunpack.c.h.b16 %v4755
        %v4951 = vunpack.c.l.b16 %v4756
        %v4952 = vunpack.c.l.b16 %v4757
        %v4953 = vunpack.c.h.b16 %v4757
        %v4954 = vunpack.c.l.b16 %v4758
        %v4955 = vunpack.c.l.b16 %v4759
        %v4956 = vunpack.c.h.b16 %v4759
        %v4957 = vunpack.c.l.b16 %v4760
        %v4958 = vunpack.c.l.b16 %v4761
        %v4959 = vunpack.c.h.b16 %v4761
        %v4960 = vunpack.c.l.b16 %v4762
        %v4961 = vunpack.c.l.b16 %v4763
        %v4962 = vunpack.c.h.b16 %v4763
        %v4963 = vunpack.c.l.b16 %v4764
        %v4964 = vpack.c.b16 %v4859, %v4856
        %v4965 = vpack.c.b16 %v4860, %v4857
        %v4966 = vpack.c.b16 %v4861, %v4858
        %v4967 = vpack.c.b16 %v4865, %v4862
        %v4968 = vpack.c.b16 %v4866, %v4863
        %v4969 = vpack.c.b16 %v4867, %v4864
        %v4970 = vpack.c.b16 %v4871, %v4868
        %v4971 = vpack.c.b16 %v4872, %v4869
        %v4972 = vpack.c.b16 %v4873, %v4870
        %v4973 = vpack.c.b16 %v4877, %v4874
        %v4974 = vpack.c.b16 %v4878, %v4875
        %v4975 = vpack.c.b16 %v4879, %v4876
        %v4976 = vpack.c.b16 %v4883, %v4880
        %v4977 = vpack.c.b16 %v4884, %v4881
        %v4978 = vpack.c.b16 %v4885, %v4882
        %v4979 = vpack.c.b16 %v4889, %v4886
        %v4980 = vpack.c.b16 %v4890, %v4887
        %v4981 = vpack.c.b16 %v4891, %v4888
        %v4982 = vpack.c.b16 %v4895, %v4892
        %v4983 = vpack.c.b16 %v4896, %v4893
        %v4984 = vpack.c.b16 %v4897, %v4894
        %v4985 = vpack.c.b16 %v4901, %v4898
        %v4986 = vpack.c.b16 %v4902, %v4899
        %v4987 = vpack.c.b16 %v4903, %v4900
        %v4988 = vpack.c.b16 %v4907, %v4904
        %v4989 = vpack.c.b16 %v4908, %v4905
        %v4990 = vpack.c.b16 %v4909, %v4906
        %v4991 = vpack.c.b16 %v4913, %v4910
        %v4992 = vpack.c.b16 %v4914, %v4911
        %v4993 = vpack.c.b16 %v4915, %v4912
        %v4994 = vpack.c.b16 %v4919, %v4916
        %v4995 = vpack.c.b16 %v4920, %v4917
        %v4996 = vpack.c.b16 %v4921, %v4918
        %v4997 = vpack.c.b16 %v4925, %v4922
        %v4998 = vpack.c.b16 %v4926, %v4923
        %v4999 = vpack.c.b16 %v4927, %v4924
        %v5000 = vpack.c.b16 %v4931, %v4928
        %v5001 = vpack.c.b16 %v4932, %v4929
        %v5002 = vpack.c.b16 %v4933, %v4930
        %v5003 = vpack.c.b16 %v4937, %v4934
        %v5004 = vpack.c.b16 %v4938, %v4935
        %v5005 = vpack.c.b16 %v4939, %v4936
        %v5006 = vpack.c.b16 %v4943, %v4940
        %v5007 = vpack.c.b16 %v4944, %v4941
        %v5008 = vpack.c.b16 %v4945, %v4942
        %v5009 = vpack.c.b16 %v4949, %v4946
        %v5010 = vpack.c.b16 %v4950, %v4947
        %v5011 = vpack.c.b16 %v4951, %v4948
        %v5012 = vpack.c.b16 %v4955, %v4952
        %v5013 = vpack.c.b16 %v4956, %v4953
        %v5014 = vpack.c.b16 %v4957, %v4954
        %v5015 = vpack.c.b16 %v4961, %v4958
        %v5016 = vpack.c.b16 %v4962, %v4959
        %v5017 = vpack.c.b16 %v4963, %v4960
        %v5073 = vsel %vm795, %v4781, 0
        %5075 = vmatpush.bf16.msra.mxu0 %v4985
        %5076 = vmatpush.bf16.msra.mxu0 %v4982
        %5077 = vmatpush.bf16.msra.mxu0 %v4979
        %5078 = vmatpush.bf16.msra.mxu0 %v4976
        %5079 = vmatpush.bf16.msra.mxu0 %v4973
        %5080 = vmatpush.bf16.msra.mxu0 %v4970
        %5081 = vmatpush.bf16.msra.mxu0 %v4967
        %5082 = vmatpush.bf16.msra.mxu0 %v4964
        %5083 = vmatmul.bf16.gmra.mxu0 %v4775
        %v5084 = vpop.f32.mrf.mxu0
        %v5085 = vadd.f32 0.0, %v5084
        %v5086 = vpop.f32.mrf.mxu0
        %v5087 = vadd.f32 0.0, %v5086
        %5088 = vdwg.mxu0
        %5089 = vmatpush.bf16.msra.mxu0 %v5009
        %5090 = vmatpush.bf16.msra.mxu0 %v5006
        %5091 = vmatpush.bf16.msra.mxu0 %v5003
        %5092 = vmatpush.bf16.msra.mxu0 %v5000
        %5093 = vmatpush.bf16.msra.mxu0 %v4997
        %5094 = vmatpush.bf16.msra.mxu0 %v4994
        %5095 = vmatpush.bf16.msra.mxu0 %v4991
        %5096 = vmatpush.bf16.msra.mxu0 %v4988
        %5097 = vmatmul.bf16.gmra.mxu0 %v4778
        %v5098 = vpop.f32.mrf.mxu0
        %v5099 = vadd.f32 %v5085, %v5098
        %v5100 = vpop.f32.mrf.mxu0
        %v5101 = vadd.f32 %v5087, %v5100
        %5102 = vdwg.mxu0
        %5103 = vmatpush.bf16.msra.mxu0 0
        %5104 = vmatpush.bf16.msra.mxu0 0
        %5105 = vmatpush.bf16.msra.mxu0 0
        %5106 = vmatpush.bf16.msra.mxu0 0
        %5107 = vmatpush.bf16.msra.mxu0 0
        %5108 = vmatpush.bf16.msra.mxu0 0
        %5109 = vmatpush.bf16.msra.mxu0 %v5015
        %5110 = vmatpush.bf16.msra.mxu0 %v5012
        %5111 = vmatmul.bf16.gmra.mxu0 %v5073
        %v5112 = vpop.f32.mrf.mxu0
        %v5113 = vadd.f32 %v5099, %v5112
        %v5114 = vpop.f32.mrf.mxu0
        %v5115 = vadd.f32 %v5101, %v5114
        %5116 = vdwg.mxu0
        %5117 = vmatpush.bf16.msra.mxu0 %v4986
        %5118 = vmatpush.bf16.msra.mxu0 %v4983
        %5119 = vmatpush.bf16.msra.mxu0 %v4980
        %5120 = vmatpush.bf16.msra.mxu0 %v4977
        %5121 = vmatpush.bf16.msra.mxu0 %v4974
        %5122 = vmatpush.bf16.msra.mxu0 %v4971
        %5123 = vmatpush.bf16.msra.mxu0 %v4968
        %5124 = vmatpush.bf16.msra.mxu0 %v4965
        %5125 = vmatmul.bf16.gmra.mxu0 %v4775
        %v5126 = vpop.f32.mrf.mxu0
        %v5127 = vadd.f32 0.0, %v5126
        %v5128 = vpop.f32.mrf.mxu0
        %v5129 = vadd.f32 0.0, %v5128
        %5130 = vdwg.mxu0
        %5131 = vmatpush.bf16.msra.mxu0 %v5010
        %5132 = vmatpush.bf16.msra.mxu0 %v5007
        %5133 = vmatpush.bf16.msra.mxu0 %v5004
        %5134 = vmatpush.bf16.msra.mxu0 %v5001
        %5135 = vmatpush.bf16.msra.mxu0 %v4998
        %5136 = vmatpush.bf16.msra.mxu0 %v4995
        %5137 = vmatpush.bf16.msra.mxu0 %v4992
        %5138 = vmatpush.bf16.msra.mxu0 %v4989
        %5139 = vmatmul.bf16.gmra.mxu0 %v4778
        %v5140 = vpop.f32.mrf.mxu0
        %v5141 = vadd.f32 %v5127, %v5140
        %v5142 = vpop.f32.mrf.mxu0
        %v5143 = vadd.f32 %v5129, %v5142
        %5144 = vdwg.mxu0
        %5145 = vmatpush.bf16.msra.mxu0 0
        %5146 = vmatpush.bf16.msra.mxu0 0
        %5147 = vmatpush.bf16.msra.mxu0 0
        %5148 = vmatpush.bf16.msra.mxu0 0
        %5149 = vmatpush.bf16.msra.mxu0 0
        %5150 = vmatpush.bf16.msra.mxu0 0
        %5151 = vmatpush.bf16.msra.mxu0 %v5016
        %5152 = vmatpush.bf16.msra.mxu0 %v5013
        %5153 = vmatmul.bf16.gmra.mxu0 %v5073
        %v5154 = vpop.f32.mrf.mxu0
        %v5155 = vadd.f32 %v5141, %v5154
        %v5156 = vpop.f32.mrf.mxu0
        %v5157 = vadd.f32 %v5143, %v5156
        %5158 = vdwg.mxu0
        %5159 = vmatpush.bf16.msra.mxu0 %v4987
        %5160 = vmatpush.bf16.msra.mxu0 %v4984
        %5161 = vmatpush.bf16.msra.mxu0 %v4981
        %5162 = vmatpush.bf16.msra.mxu0 %v4978
        %5163 = vmatpush.bf16.msra.mxu0 %v4975
        %5164 = vmatpush.bf16.msra.mxu0 %v4972
        %5165 = vmatpush.bf16.msra.mxu0 %v4969
        %5166 = vmatpush.bf16.msra.mxu0 %v4966
        %5167 = vmatmul.bf16.gmra.mxu0 %v4775
        %v5168 = vpop.f32.mrf.mxu0
        %v5169 = vadd.f32 0.0, %v5168
        %v5170 = vpop.f32.mrf.mxu0
        %v5171 = vadd.f32 0.0, %v5170
        %5172 = vdwg.mxu0
        %5173 = vmatpush.bf16.msra.mxu0 %v5011
        %5174 = vmatpush.bf16.msra.mxu0 %v5008
        %5175 = vmatpush.bf16.msra.mxu0 %v5005
        %5176 = vmatpush.bf16.msra.mxu0 %v5002
        %5177 = vmatpush.bf16.msra.mxu0 %v4999
        %5178 = vmatpush.bf16.msra.mxu0 %v4996
        %5179 = vmatpush.bf16.msra.mxu0 %v4993
        %5180 = vmatpush.bf16.msra.mxu0 %v4990
        %5181 = vmatmul.bf16.gmra.mxu0 %v4778
        %v5182 = vpop.f32.mrf.mxu0
        %v5183 = vadd.f32 %v5169, %v5182
        %v5184 = vpop.f32.mrf.mxu0
        %v5185 = vadd.f32 %v5171, %v5184
        %5186 = vdwg.mxu0
        %5187 = vmatpush.bf16.msra.mxu0 0
        %5188 = vmatpush.bf16.msra.mxu0 0
        %5189 = vmatpush.bf16.msra.mxu0 0
        %5190 = vmatpush.bf16.msra.mxu0 0
        %5191 = vmatpush.bf16.msra.mxu0 0
        %5192 = vmatpush.bf16.msra.mxu0 0
        %5193 = vmatpush.bf16.msra.mxu0 %v5017
        %5194 = vmatpush.bf16.msra.mxu0 %v5014
        %5195 = vmatmul.bf16.gmra.mxu0 %v5073
        %v5196 = vpop.f32.mrf.mxu0
        %v5197 = vadd.f32 %v5183, %v5196
        %v5198 = vpop.f32.mrf.mxu0
        %v5199 = vadd.f32 %v5185, %v5198
        %5200 = vdwg.mxu0
        %v5201 = vadd.f32 %v4602, %v5113
        %v5202 = vadd.f32 %v4644, %v5155
        %v5203 = vadd.f32 %v4686, %v5197
        %v5204 = vadd.f32 %v4604, %v5115
        %v5205 = vadd.f32 %v4646, %v5157
        %v5206 = vadd.f32 %v4688, %v5199
        %v5207 = vld [vmem:[%s5] sm:$0x7]
        %v5209 = vperm.slane %v5207, 0
        %v5210 = vperm.slane %v5207, 1
        %v5211 = vperm.slane %v5207, 2
        %v5215 = vadd.f32 %v5201, %v5209
        %v5216 = vadd.f32 %v5202, %v5210
        %v5217 = vadd.f32 %v5203, %v5211
        %v5218 = vadd.f32 %v5204, %v5209
        %v5219 = vadd.f32 %v5205, %v5210
        %v5220 = vadd.f32 %v5206, %v5211
        %v5221 = vmax.f32 %v5215, 0.0
        %v5222 = vmax.f32 %v5216, 0.0
        %v5223 = vmax.f32 %v5217, 0.0
        %v5224 = vmax.f32 %v5218, 0.0
        %v5225 = vmax.f32 %v5219, 0.0
        %v5226 = vmax.f32 %v5220, 0.0
        %v5227 = vld [vmem:[#allocation2 + $0x18] sm:$0xee]
        %v5228 = vld [vmem:[#allocation2 + $0x20] sm:$0xe]
        %v5229 = vld [vmem:[#allocation2 + $0x24] sm:$0xff]
        %v5230 = vld [vmem:[#allocation2 + $0x2c] sm:$0xf]
        %v5231 = vld [vmem:[#allocation2 + $0x30] sm:$0x11]
        %v5232 = vld [vmem:[#allocation2 + $0x38] sm:$0x1]
        %v5233 = vld [vmem:[#allocation2 + $0x30] sm:$0x33]
        %v5234 = vld [vmem:[#allocation2 + $0x38] sm:$0x3]
        %v5241 = vunpack.c.l.b16 %v5227
        %v5242 = vunpack.c.h.b16 %v5227
        %v5243 = vunpack.c.l.b16 %v5228
        %v5244 = vunpack.c.l.b16 %v5229
        %v5245 = vunpack.c.h.b16 %v5229
        %v5246 = vunpack.c.l.b16 %v5230
        %v5247 = vunpack.c.l.b16 %v5233
        %v5248 = vunpack.c.h.b16 %v5233
        %v5249 = vunpack.c.l.b16 %v5234
        %v5250 = vpack.c.b16 %v5244, %v5241
        %v5251 = vpack.c.b16 %v5245, %v5242
        %v5252 = vpack.c.b16 %v5246, %v5243
        %v5253 = vpack.c.b16 %v5247, %v5247
        %v5254 = vpack.c.b16 %v5248, %v5248
        %v5255 = vpack.c.b16 %v5249, %v5249
        %v5257 = vshrl.u32 %v5250, 16
        %v5259 = vrot.slane %v5257, 1
        %v5260 = vshll.u32 %v5250, 16
        %v5262 = vrot.slane %v5260, 2
        %v5263 = vor.u32 %v5259, %v5262
        %v5265 = vshrl.u32 %v5253, 16
        %v5267 = vrot.slane %v5265, 1
        %v5268 = vshll.u32 %v5253, 16
        %v5270 = vrot.slane %v5268, 2
        %v5271 = vor.u32 %v5267, %v5270
        %v5272 = vsel %vm2124, %v5263, %v5271
        %v5274 = vshrl.u32 %v5251, 16
        %v5276 = vrot.slane %v5274, 1
        %v5277 = vshll.u32 %v5251, 16
        %v5279 = vrot.slane %v5277, 2
        %v5280 = vor.u32 %v5276, %v5279
        %v5282 = vshrl.u32 %v5254, 16
        %v5284 = vrot.slane %v5282, 1
        %v5285 = vshll.u32 %v5254, 16
        %v5287 = vrot.slane %v5285, 2
        %v5288 = vor.u32 %v5284, %v5287
        %v5289 = vsel %vm2124, %v5280, %v5288
        %v5291 = vshrl.u32 %v5252, 16
        %v5293 = vrot.slane %v5291, 1
        %v5294 = vshll.u32 %v5252, 16
        %v5296 = vrot.slane %v5294, 2
        %v5297 = vor.u32 %v5293, %v5296
        %v5299 = vshrl.u32 %v5255, 16
        %v5301 = vrot.slane %v5299, 1
        %v5302 = vshll.u32 %v5255, 16
        %v5304 = vrot.slane %v5302, 2
        %v5305 = vor.u32 %v5301, %v5304
        %v5306 = vsel %vm2124, %v5297, %v5305
        %v5310 = vsel %vm795, %v5306, 0
        %5312 = vmatpush.bf16.msra.mxu0 %v4056
        %5313 = vmatpush.bf16.msra.mxu0 %v4053
        %5314 = vmatpush.bf16.msra.mxu0 %v4050
        %5315 = vmatpush.bf16.msra.mxu0 %v4047
        %5316 = vmatpush.bf16.msra.mxu0 %v4044
        %5317 = vmatpush.bf16.msra.mxu0 %v4041
        %5318 = vmatpush.bf16.msra.mxu0 %v4038
        %5319 = vmatpush.bf16.msra.mxu0 %v4035
        %5320 = vmatmul.bf16.gmra.mxu0 %v5272
        %v5321 = vpop.f32.mrf.mxu0
        %v5322 = vadd.f32 0.0, %v5321
        %v5323 = vpop.f32.mrf.mxu0
        %v5324 = vadd.f32 0.0, %v5323
        %5325 = vdwg.mxu0
        %5326 = vmatpush.bf16.msra.mxu0 %v4080
        %5327 = vmatpush.bf16.msra.mxu0 %v4077
        %5328 = vmatpush.bf16.msra.mxu0 %v4074
        %5329 = vmatpush.bf16.msra.mxu0 %v4071
        %5330 = vmatpush.bf16.msra.mxu0 %v4068
        %5331 = vmatpush.bf16.msra.mxu0 %v4065
        %5332 = vmatpush.bf16.msra.mxu0 %v4062
        %5333 = vmatpush.bf16.msra.mxu0 %v4059
        %5334 = vmatmul.bf16.gmra.mxu0 %v5289
        %v5335 = vpop.f32.mrf.mxu0
        %v5336 = vadd.f32 %v5322, %v5335
        %v5337 = vpop.f32.mrf.mxu0
        %v5338 = vadd.f32 %v5324, %v5337
        %5339 = vdwg.mxu0
        %5340 = vmatpush.bf16.msra.mxu0 0
        %5341 = vmatpush.bf16.msra.mxu0 0
        %5342 = vmatpush.bf16.msra.mxu0 0
        %5343 = vmatpush.bf16.msra.mxu0 0
        %5344 = vmatpush.bf16.msra.mxu0 0
        %5345 = vmatpush.bf16.msra.mxu0 0
        %5346 = vmatpush.bf16.msra.mxu0 %v4086
        %5347 = vmatpush.bf16.msra.mxu0 %v4083
        %5348 = vmatmul.bf16.gmra.mxu0 %v5310
        %v5349 = vpop.f32.mrf.mxu0
        %v5350 = vadd.f32 %v5336, %v5349
        %v5351 = vpop.f32.mrf.mxu0
        %v5352 = vadd.f32 %v5338, %v5351
        %5353 = vdwg.mxu0
        %5354 = vmatpush.bf16.msra.mxu0 %v4057
        %5355 = vmatpush.bf16.msra.mxu0 %v4054
        %5356 = vmatpush.bf16.msra.mxu0 %v4051
        %5357 = vmatpush.bf16.msra.mxu0 %v4048
        %5358 = vmatpush.bf16.msra.mxu0 %v4045
        %5359 = vmatpush.bf16.msra.mxu0 %v4042
        %5360 = vmatpush.bf16.msra.mxu0 %v4039
        %5361 = vmatpush.bf16.msra.mxu0 %v4036
        %5362 = vmatmul.bf16.gmra.mxu0 %v5272
        %v5363 = vpop.f32.mrf.mxu0
        %v5364 = vadd.f32 0.0, %v5363
        %v5365 = vpop.f32.mrf.mxu0
        %v5366 = vadd.f32 0.0, %v5365
        %5367 = vdwg.mxu0
        %5368 = vmatpush.bf16.msra.mxu0 %v4081
        %5369 = vmatpush.bf16.msra.mxu0 %v4078
        %5370 = vmatpush.bf16.msra.mxu0 %v4075
        %5371 = vmatpush.bf16.msra.mxu0 %v4072
        %5372 = vmatpush.bf16.msra.mxu0 %v4069
        %5373 = vmatpush.bf16.msra.mxu0 %v4066
        %5374 = vmatpush.bf16.msra.mxu0 %v4063
        %5375 = vmatpush.bf16.msra.mxu0 %v4060
        %5376 = vmatmul.bf16.gmra.mxu0 %v5289
        %v5377 = vpop.f32.mrf.mxu0
        %v5378 = vadd.f32 %v5364, %v5377
        %v5379 = vpop.f32.mrf.mxu0
        %v5380 = vadd.f32 %v5366, %v5379
        %5381 = vdwg.mxu0
        %5382 = vmatpush.bf16.msra.mxu0 0
        %5383 = vmatpush.bf16.msra.mxu0 0
        %5384 = vmatpush.bf16.msra.mxu0 0
        %5385 = vmatpush.bf16.msra.mxu0 0
        %5386 = vmatpush.bf16.msra.mxu0 0
        %5387 = vmatpush.bf16.msra.mxu0 0
        %5388 = vmatpush.bf16.msra.mxu0 %v4087
        %5389 = vmatpush.bf16.msra.mxu0 %v4084
        %5390 = vmatmul.bf16.gmra.mxu0 %v5310
        %v5391 = vpop.f32.mrf.mxu0
        %v5392 = vadd.f32 %v5378, %v5391
        %v5393 = vpop.f32.mrf.mxu0
        %v5394 = vadd.f32 %v5380, %v5393
        %5395 = vdwg.mxu0
        %5396 = vmatpush.bf16.msra.mxu0 %v4058
        %5397 = vmatpush.bf16.msra.mxu0 %v4055
        %5398 = vmatpush.bf16.msra.mxu0 %v4052
        %5399 = vmatpush.bf16.msra.mxu0 %v4049
        %5400 = vmatpush.bf16.msra.mxu0 %v4046
        %5401 = vmatpush.bf16.msra.mxu0 %v4043
        %5402 = vmatpush.bf16.msra.mxu0 %v4040
        %5403 = vmatpush.bf16.msra.mxu0 %v4037
        %5404 = vmatmul.bf16.gmra.mxu0 %v5272
        %v5405 = vpop.f32.mrf.mxu0
        %v5406 = vadd.f32 0.0, %v5405
        %v5407 = vpop.f32.mrf.mxu0
        %v5408 = vadd.f32 0.0, %v5407
        %5409 = vdwg.mxu0
        %5410 = vmatpush.bf16.msra.mxu0 %v4082
        %5411 = vmatpush.bf16.msra.mxu0 %v4079
        %5412 = vmatpush.bf16.msra.mxu0 %v4076
        %5413 = vmatpush.bf16.msra.mxu0 %v4073
        %5414 = vmatpush.bf16.msra.mxu0 %v4070
        %5415 = vmatpush.bf16.msra.mxu0 %v4067
        %5416 = vmatpush.bf16.msra.mxu0 %v4064
        %5417 = vmatpush.bf16.msra.mxu0 %v4061
        %5418 = vmatmul.bf16.gmra.mxu0 %v5289
        %v5419 = vpop.f32.mrf.mxu0
        %v5420 = vadd.f32 %v5406, %v5419
        %v5421 = vpop.f32.mrf.mxu0
        %v5422 = vadd.f32 %v5408, %v5421
        %5423 = vdwg.mxu0
        %5424 = vmatpush.bf16.msra.mxu0 0
        %5425 = vmatpush.bf16.msra.mxu0 0
        %5426 = vmatpush.bf16.msra.mxu0 0
        %5427 = vmatpush.bf16.msra.mxu0 0
        %5428 = vmatpush.bf16.msra.mxu0 0
        %5429 = vmatpush.bf16.msra.mxu0 0
        %5430 = vmatpush.bf16.msra.mxu0 %v4088
        %5431 = vmatpush.bf16.msra.mxu0 %v4085
        %5432 = vmatmul.bf16.gmra.mxu0 %v5310
        %v5433 = vpop.f32.mrf.mxu0
        %v5434 = vadd.f32 %v5420, %v5433
        %v5435 = vpop.f32.mrf.mxu0
        %v5436 = vadd.f32 %v5422, %v5435
        %5437 = vdwg.mxu0
        %v5440 = vunpack.c.l.b16 %v5231
        %v5441 = vunpack.c.h.b16 %v5231
        %v5442 = vunpack.c.l.b16 %v5232
        %v5443 = vpack.c.b16 %v5440, %v5440
        %v5444 = vpack.c.b16 %v5441, %v5441
        %v5445 = vpack.c.b16 %v5442, %v5442
        %v5446 = vrot.slane %v5250, 1
        %v5447 = vrot.slane %v5443, 1
        %v5448 = vsel %vm1426, %v5446, %v5447
        %v5449 = vrot.slane %v5251, 1
        %v5450 = vrot.slane %v5444, 1
        %v5451 = vsel %vm1426, %v5449, %v5450
        %v5452 = vrot.slane %v5252, 1
        %v5453 = vrot.slane %v5445, 1
        %v5454 = vsel %vm1426, %v5452, %v5453
        %v5458 = vsel %vm795, %v5454, 0
        %5460 = vmatpush.bf16.msra.mxu0 %v4475
        %5461 = vmatpush.bf16.msra.mxu0 %v4472
        %5462 = vmatpush.bf16.msra.mxu0 %v4469
        %5463 = vmatpush.bf16.msra.mxu0 %v4466
        %5464 = vmatpush.bf16.msra.mxu0 %v4463
        %5465 = vmatpush.bf16.msra.mxu0 %v4460
        %5466 = vmatpush.bf16.msra.mxu0 %v4457
        %5467 = vmatpush.bf16.msra.mxu0 %v4454
        %5468 = vmatmul.bf16.gmra.mxu0 %v5448
        %v5469 = vpop.f32.mrf.mxu0
        %v5470 = vadd.f32 %v5350, %v5469
        %v5471 = vpop.f32.mrf.mxu0
        %v5472 = vadd.f32 %v5352, %v5471
        %5473 = vdwg.mxu0
        %5474 = vmatpush.bf16.msra.mxu0 %v4499
        %5475 = vmatpush.bf16.msra.mxu0 %v4496
        %5476 = vmatpush.bf16.msra.mxu0 %v4493
        %5477 = vmatpush.bf16.msra.mxu0 %v4490
        %5478 = vmatpush.bf16.msra.mxu0 %v4487
        %5479 = vmatpush.bf16.msra.mxu0 %v4484
        %5480 = vmatpush.bf16.msra.mxu0 %v4481
        %5481 = vmatpush.bf16.msra.mxu0 %v4478
        %5482 = vmatmul.bf16.gmra.mxu0 %v5451
        %v5483 = vpop.f32.mrf.mxu0
        %v5484 = vadd.f32 %v5470, %v5483
        %v5485 = vpop.f32.mrf.mxu0
        %v5486 = vadd.f32 %v5472, %v5485
        %5487 = vdwg.mxu0
        %5488 = vmatpush.bf16.msra.mxu0 0
        %5489 = vmatpush.bf16.msra.mxu0 0
        %5490 = vmatpush.bf16.msra.mxu0 0
        %5491 = vmatpush.bf16.msra.mxu0 0
        %5492 = vmatpush.bf16.msra.mxu0 0
        %5493 = vmatpush.bf16.msra.mxu0 0
        %5494 = vmatpush.bf16.msra.mxu0 %v4505
        %5495 = vmatpush.bf16.msra.mxu0 %v4502
        %5496 = vmatmul.bf16.gmra.mxu0 %v5458
        %v5497 = vpop.f32.mrf.mxu0
        %v5498 = vadd.f32 %v5484, %v5497
        %v5499 = vpop.f32.mrf.mxu0
        %v5500 = vadd.f32 %v5486, %v5499
        %5501 = vdwg.mxu0
        %5502 = vmatpush.bf16.msra.mxu0 %v4476
        %5503 = vmatpush.bf16.msra.mxu0 %v4473
        %5504 = vmatpush.bf16.msra.mxu0 %v4470
        %5505 = vmatpush.bf16.msra.mxu0 %v4467
        %5506 = vmatpush.bf16.msra.mxu0 %v4464
        %5507 = vmatpush.bf16.msra.mxu0 %v4461
        %5508 = vmatpush.bf16.msra.mxu0 %v4458
        %5509 = vmatpush.bf16.msra.mxu0 %v4455
        %5510 = vmatmul.bf16.gmra.mxu0 %v5448
        %v5511 = vpop.f32.mrf.mxu0
        %v5512 = vadd.f32 %v5392, %v5511
        %v5513 = vpop.f32.mrf.mxu0
        %v5514 = vadd.f32 %v5394, %v5513
        %5515 = vdwg.mxu0
        %5516 = vmatpush.bf16.msra.mxu0 %v4500
        %5517 = vmatpush.bf16.msra.mxu0 %v4497
        %5518 = vmatpush.bf16.msra.mxu0 %v4494
        %5519 = vmatpush.bf16.msra.mxu0 %v4491
        %5520 = vmatpush.bf16.msra.mxu0 %v4488
        %5521 = vmatpush.bf16.msra.mxu0 %v4485
        %5522 = vmatpush.bf16.msra.mxu0 %v4482
        %5523 = vmatpush.bf16.msra.mxu0 %v4479
        %5524 = vmatmul.bf16.gmra.mxu0 %v5451
        %v5525 = vpop.f32.mrf.mxu0
        %v5526 = vadd.f32 %v5512, %v5525
        %v5527 = vpop.f32.mrf.mxu0
        %v5528 = vadd.f32 %v5514, %v5527
        %5529 = vdwg.mxu0
        %5530 = vmatpush.bf16.msra.mxu0 0
        %5531 = vmatpush.bf16.msra.mxu0 0
        %5532 = vmatpush.bf16.msra.mxu0 0
        %5533 = vmatpush.bf16.msra.mxu0 0
        %5534 = vmatpush.bf16.msra.mxu0 0
        %5535 = vmatpush.bf16.msra.mxu0 0
        %5536 = vmatpush.bf16.msra.mxu0 %v4506
        %5537 = vmatpush.bf16.msra.mxu0 %v4503
        %5538 = vmatmul.bf16.gmra.mxu0 %v5458
        %v5539 = vpop.f32.mrf.mxu0
        %v5540 = vadd.f32 %v5526, %v5539
        %v5541 = vpop.f32.mrf.mxu0
        %v5542 = vadd.f32 %v5528, %v5541
        %5543 = vdwg.mxu0
        %5544 = vmatpush.bf16.msra.mxu0 %v4477
        %5545 = vmatpush.bf16.msra.mxu0 %v4474
        %5546 = vmatpush.bf16.msra.mxu0 %v4471
        %5547 = vmatpush.bf16.msra.mxu0 %v4468
        %5548 = vmatpush.bf16.msra.mxu0 %v4465
        %5549 = vmatpush.bf16.msra.mxu0 %v4462
        %5550 = vmatpush.bf16.msra.mxu0 %v4459
        %5551 = vmatpush.bf16.msra.mxu0 %v4456
        %5552 = vmatmul.bf16.gmra.mxu0 %v5448
        %v5553 = vpop.f32.mrf.mxu0
        %v5554 = vadd.f32 %v5434, %v5553
        %v5555 = vpop.f32.mrf.mxu0
        %v5556 = vadd.f32 %v5436, %v5555
        %5557 = vdwg.mxu0
        %5558 = vmatpush.bf16.msra.mxu0 %v4501
        %5559 = vmatpush.bf16.msra.mxu0 %v4498
        %5560 = vmatpush.bf16.msra.mxu0 %v4495
        %5561 = vmatpush.bf16.msra.mxu0 %v4492
        %5562 = vmatpush.bf16.msra.mxu0 %v4489
        %5563 = vmatpush.bf16.msra.mxu0 %v4486
        %5564 = vmatpush.bf16.msra.mxu0 %v4483
        %5565 = vmatpush.bf16.msra.mxu0 %v4480
        %5566 = vmatmul.bf16.gmra.mxu0 %v5451
        %v5567 = vpop.f32.mrf.mxu0
        %v5568 = vadd.f32 %v5554, %v5567
        %v5569 = vpop.f32.mrf.mxu0
        %v5570 = vadd.f32 %v5556, %v5569
        %5571 = vdwg.mxu0
        %5572 = vmatpush.bf16.msra.mxu0 0
        %5573 = vmatpush.bf16.msra.mxu0 0
        %5574 = vmatpush.bf16.msra.mxu0 0
        %5575 = vmatpush.bf16.msra.mxu0 0
        %5576 = vmatpush.bf16.msra.mxu0 0
        %5577 = vmatpush.bf16.msra.mxu0 0
        %5578 = vmatpush.bf16.msra.mxu0 %v4507
        %5579 = vmatpush.bf16.msra.mxu0 %v4504
        %5580 = vmatmul.bf16.gmra.mxu0 %v5458
        %v5581 = vpop.f32.mrf.mxu0
        %v5582 = vadd.f32 %v5568, %v5581
        %v5583 = vpop.f32.mrf.mxu0
        %v5584 = vadd.f32 %v5570, %v5583
        %5585 = vdwg.mxu0
        %v5586 = vld [vmem:[#allocation2 + $0x18] sm:$0xcc]
        %v5587 = vld [vmem:[#allocation2 + $0x20] sm:$0xc]
        %v5590 = vunpack.c.l.b16 %v5586
        %v5591 = vunpack.c.h.b16 %v5586
        %v5592 = vunpack.c.l.b16 %v5587
        %v5593 = vpack.c.b16 %v5244, %v5590
        %v5594 = vpack.c.b16 %v5245, %v5591
        %v5595 = vpack.c.b16 %v5246, %v5592
        %v5596 = vrot.slane %v5593, 2
        %v5597 = vrot.slane %v5253, 2
        %v5598 = vsel %vm3113, %v5596, %v5597
        %v5599 = vrot.slane %v5594, 2
        %v5600 = vrot.slane %v5254, 2
        %v5601 = vsel %vm3113, %v5599, %v5600
        %v5602 = vrot.slane %v5595, 2
        %v5603 = vrot.slane %v5255, 2
        %v5604 = vsel %vm3113, %v5602, %v5603
        %v5608 = vsel %vm795, %v5604, 0
        %5610 = vmatpush.bf16.msra.mxu0 %v4985
        %5611 = vmatpush.bf16.msra.mxu0 %v4982
        %5612 = vmatpush.bf16.msra.mxu0 %v4979
        %5613 = vmatpush.bf16.msra.mxu0 %v4976
        %5614 = vmatpush.bf16.msra.mxu0 %v4973
        %5615 = vmatpush.bf16.msra.mxu0 %v4970
        %5616 = vmatpush.bf16.msra.mxu0 %v4967
        %5617 = vmatpush.bf16.msra.mxu0 %v4964
        %5618 = vmatmul.bf16.gmra.mxu0 %v5598
        %v5619 = vpop.f32.mrf.mxu0
        %v5620 = vadd.f32 0.0, %v5619
        %v5621 = vpop.f32.mrf.mxu0
        %v5622 = vadd.f32 0.0, %v5621
        %5623 = vdwg.mxu0
        %5624 = vmatpush.bf16.msra.mxu0 %v5009
        %5625 = vmatpush.bf16.msra.mxu0 %v5006
        %5626 = vmatpush.bf16.msra.mxu0 %v5003
        %5627 = vmatpush.bf16.msra.mxu0 %v5000
        %5628 = vmatpush.bf16.msra.mxu0 %v4997
        %5629 = vmatpush.bf16.msra.mxu0 %v4994
        %5630 = vmatpush.bf16.msra.mxu0 %v4991
        %5631 = vmatpush.bf16.msra.mxu0 %v4988
        %5632 = vmatmul.bf16.gmra.mxu0 %v5601
        %v5633 = vpop.f32.mrf.mxu0
        %v5634 = vadd.f32 %v5620, %v5633
        %v5635 = vpop.f32.mrf.mxu0
        %v5636 = vadd.f32 %v5622, %v5635
        %5637 = vdwg.mxu0
        %5638 = vmatpush.bf16.msra.mxu0 0
        %5639 = vmatpush.bf16.msra.mxu0 0
        %5640 = vmatpush.bf16.msra.mxu0 0
        %5641 = vmatpush.bf16.msra.mxu0 0
        %5642 = vmatpush.bf16.msra.mxu0 0
        %5643 = vmatpush.bf16.msra.mxu0 0
        %5644 = vmatpush.bf16.msra.mxu0 %v5015
        %5645 = vmatpush.bf16.msra.mxu0 %v5012
        %5646 = vmatmul.bf16.gmra.mxu0 %v5608
        %v5647 = vpop.f32.mrf.mxu0
        %v5648 = vadd.f32 %v5634, %v5647
        %v5649 = vpop.f32.mrf.mxu0
        %v5650 = vadd.f32 %v5636, %v5649
        %5651 = vdwg.mxu0
        %5652 = vmatpush.bf16.msra.mxu0 %v4986
        %5653 = vmatpush.bf16.msra.mxu0 %v4983
        %5654 = vmatpush.bf16.msra.mxu0 %v4980
        %5655 = vmatpush.bf16.msra.mxu0 %v4977
        %5656 = vmatpush.bf16.msra.mxu0 %v4974
        %5657 = vmatpush.bf16.msra.mxu0 %v4971
        %5658 = vmatpush.bf16.msra.mxu0 %v4968
        %5659 = vmatpush.bf16.msra.mxu0 %v4965
        %5660 = vmatmul.bf16.gmra.mxu0 %v5598
        %v5661 = vpop.f32.mrf.mxu0
        %v5662 = vadd.f32 0.0, %v5661
        %v5663 = vpop.f32.mrf.mxu0
        %v5664 = vadd.f32 0.0, %v5663
        %5665 = vdwg.mxu0
        %5666 = vmatpush.bf16.msra.mxu0 %v5010
        %5667 = vmatpush.bf16.msra.mxu0 %v5007
        %5668 = vmatpush.bf16.msra.mxu0 %v5004
        %5669 = vmatpush.bf16.msra.mxu0 %v5001
        %5670 = vmatpush.bf16.msra.mxu0 %v4998
        %5671 = vmatpush.bf16.msra.mxu0 %v4995
        %5672 = vmatpush.bf16.msra.mxu0 %v4992
        %5673 = vmatpush.bf16.msra.mxu0 %v4989
        %5674 = vmatmul.bf16.gmra.mxu0 %v5601
        %v5675 = vpop.f32.mrf.mxu0
        %v5676 = vadd.f32 %v5662, %v5675
        %v5677 = vpop.f32.mrf.mxu0
        %v5678 = vadd.f32 %v5664, %v5677
        %5679 = vdwg.mxu0
        %5680 = vmatpush.bf16.msra.mxu0 0
        %5681 = vmatpush.bf16.msra.mxu0 0
        %5682 = vmatpush.bf16.msra.mxu0 0
        %5683 = vmatpush.bf16.msra.mxu0 0
        %5684 = vmatpush.bf16.msra.mxu0 0
        %5685 = vmatpush.bf16.msra.mxu0 0
        %5686 = vmatpush.bf16.msra.mxu0 %v5016
        %5687 = vmatpush.bf16.msra.mxu0 %v5013
        %5688 = vmatmul.bf16.gmra.mxu0 %v5608
        %v5689 = vpop.f32.mrf.mxu0
        %v5690 = vadd.f32 %v5676, %v5689
        %v5691 = vpop.f32.mrf.mxu0
        %v5692 = vadd.f32 %v5678, %v5691
        %5693 = vdwg.mxu0
        %5694 = vmatpush.bf16.msra.mxu0 %v4987
        %5695 = vmatpush.bf16.msra.mxu0 %v4984
        %5696 = vmatpush.bf16.msra.mxu0 %v4981
        %5697 = vmatpush.bf16.msra.mxu0 %v4978
        %5698 = vmatpush.bf16.msra.mxu0 %v4975
        %5699 = vmatpush.bf16.msra.mxu0 %v4972
        %5700 = vmatpush.bf16.msra.mxu0 %v4969
        %5701 = vmatpush.bf16.msra.mxu0 %v4966
        %5702 = vmatmul.bf16.gmra.mxu0 %v5598
        %v5703 = vpop.f32.mrf.mxu0
        %v5704 = vadd.f32 0.0, %v5703
        %v5705 = vpop.f32.mrf.mxu0
        %v5706 = vadd.f32 0.0, %v5705
        %5707 = vdwg.mxu0
        %5708 = vmatpush.bf16.msra.mxu0 %v5011
        %5709 = vmatpush.bf16.msra.mxu0 %v5008
        %5710 = vmatpush.bf16.msra.mxu0 %v5005
        %5711 = vmatpush.bf16.msra.mxu0 %v5002
        %5712 = vmatpush.bf16.msra.mxu0 %v4999
        %5713 = vmatpush.bf16.msra.mxu0 %v4996
        %5714 = vmatpush.bf16.msra.mxu0 %v4993
        %5715 = vmatpush.bf16.msra.mxu0 %v4990
        %5716 = vmatmul.bf16.gmra.mxu0 %v5601
        %v5717 = vpop.f32.mrf.mxu0
        %v5718 = vadd.f32 %v5704, %v5717
        %v5719 = vpop.f32.mrf.mxu0
        %v5720 = vadd.f32 %v5706, %v5719
        %5721 = vdwg.mxu0
        %5722 = vmatpush.bf16.msra.mxu0 0
        %5723 = vmatpush.bf16.msra.mxu0 0
        %5724 = vmatpush.bf16.msra.mxu0 0
        %5725 = vmatpush.bf16.msra.mxu0 0
        %5726 = vmatpush.bf16.msra.mxu0 0
        %5727 = vmatpush.bf16.msra.mxu0 0
        %5728 = vmatpush.bf16.msra.mxu0 %v5017
        %5729 = vmatpush.bf16.msra.mxu0 %v5014
        %5730 = vmatmul.bf16.gmra.mxu0 %v5608
        %v5731 = vpop.f32.mrf.mxu0
        %v5732 = vadd.f32 %v5718, %v5731
        %v5733 = vpop.f32.mrf.mxu0
        %v5734 = vadd.f32 %v5720, %v5733
        %5735 = vdwg.mxu0
        %v5736 = vadd.f32 %v5498, %v5648
        %v5737 = vadd.f32 %v5540, %v5690
        %v5738 = vadd.f32 %v5582, %v5732
        %v5739 = vadd.f32 %v5500, %v5650
        %v5740 = vadd.f32 %v5542, %v5692
        %v5741 = vadd.f32 %v5584, %v5734
        %v5742 = vadd.f32 %v5736, %v5209
        %v5743 = vadd.f32 %v5737, %v5210
        %v5744 = vadd.f32 %v5738, %v5211
        %v5745 = vadd.f32 %v5739, %v5209
        %v5746 = vadd.f32 %v5740, %v5210
        %v5747 = vadd.f32 %v5741, %v5211
        %v5748 = vmax.f32 %v5742, 0.0
        %v5749 = vmax.f32 %v5743, 0.0
        %v5750 = vmax.f32 %v5744, 0.0
        %v5751 = vmax.f32 %v5745, 0.0
        %v5752 = vmax.f32 %v5746, 0.0
        %v5753 = vmax.f32 %v5747, 0.0
        %v5754 = vmul.f32 %v5221, %v5748
        %v5755 = vmul.f32 %v5222, %v5749
        %v5756 = vmul.f32 %v5223, %v5750
        %v5757 = vmul.f32 %v5224, %v5751
        %v5758 = vmul.f32 %v5225, %v5752
        %v5759 = vmul.f32 %v5226, %v5753
        %v5760 = vld [vmem:[%s1] sm:$0xff]
        %v5761 = vld [vmem:[%s1 + $0x8] sm:$0xff]
        %v5762 = vld [vmem:[%s1 + $0x10] sm:$0xff]
        %v5763 = vld [vmem:[%s1 + $0x18] sm:$0xff]
        %v5764 = vld [vmem:[%s1 + $0x20] sm:$0xff]
        %v5765 = vld [vmem:[%s1 + $0x28] sm:$0xff]
        %v5766 = vld [vmem:[%s1 + $0x30] sm:$0xff]
        %v5767 = vld [vmem:[%s1 + $0x38] sm:$0xff]
        %v5768 = vld [vmem:[%s1 + $0x40] sm:$0xff]
        %v5769 = vld [vmem:[%s1 + $0x48] sm:$0xff]
        %v5770 = vld [vmem:[%s1 + $0x50] sm:$0xff]
        %v5771 = vld [vmem:[%s1 + $0x58] sm:$0xff]
        %v5772 = vld [vmem:[%s1 + $0x60] sm:$0xff]
        %v5773 = vld [vmem:[%s1 + $0x68] sm:$0xff]
        %v5774 = vld [vmem:[%s1 + $0x70] sm:$0xff]
        %v5775 = vld [vmem:[%s1 + $0x78] sm:$0xff]
        %v5776 = vld [vmem:[%s1 + $0x80] sm:$0xff]
        %v5777 = vld [vmem:[%s1 + $0x88] sm:$0xff]
        %v5778 = vld [vmem:[%s1 + $0x90] sm:$0xff]
        %v5779 = vld [vmem:[%s1 + $0x98] sm:$0xff]
        %v5780 = vld [vmem:[%s1 + $0xa0] sm:$0xff]
        %v5781 = vld [vmem:[%s1 + $0xa8] sm:$0xff]
        %v5782 = vld [vmem:[%s1 + $0xb0] sm:$0xff]
        %v5783 = vld [vmem:[%s1 + $0xb8] sm:$0xff]
        %v5784 = vld [vmem:[%s1 + $0xc0] sm:$0xff]
        %v5785 = vld [vmem:[%s1 + $0xc8] sm:$0xff]
        %v5786 = vld [vmem:[%s1 + $0xd0] sm:$0xff]
        %v5787 = vld [vmem:[%s1 + $0xd8] sm:$0xff]
        %v5788 = vld [vmem:[%s1 + $0xe0] sm:$0xff]
        %v5789 = vld [vmem:[%s1 + $0xe8] sm:$0xff]
        %v5790 = vld [vmem:[%s1 + $0xf0] sm:$0xff]
        %v5791 = vld [vmem:[%s1 + $0xf8] sm:$0xff]
        %v5792 = vld [vmem:[%s1 + $0x100] sm:$0xff]
        %v5793 = vld [vmem:[%s1 + $0x108] sm:$0xff]
        %v5794 = vld [vmem:[%s1 + $0x110] sm:$0xff]
        %v5795 = vld [vmem:[%s1 + $0x118] sm:$0xff]
        %v5797 = vsel %vm795, %v5756, 0
        %v5800 = vsel %vm795, %v5759, 0
        %5802 = vmatpush.msra.mxu0 %v5775
        %5803 = vmatpush.msra.mxu0 %v5774
        %5804 = vmatpush.msra.mxu0 %v5773
        %5805 = vmatpush.msra.mxu0 %v5772
        %5806 = vmatpush.msra.mxu0 %v5771
        %5807 = vmatpush.msra.mxu0 %v5770
        %5808 = vmatpush.msra.mxu0 %v5769
        %5809 = vmatpush.msra.mxu0 %v5768
        %5810 = vmatpush.msra.mxu0 %v5767
        %5811 = vmatpush.msra.mxu0 %v5766
        %5812 = vmatpush.msra.mxu0 %v5765
        %5813 = vmatpush.msra.mxu0 %v5764
        %5814 = vmatpush.msra.mxu0 %v5763
        %5815 = vmatpush.msra.mxu0 %v5762
        %5816 = vmatpush.msra.mxu0 %v5761
        %5817 = vmatpush.msra.mxu0 %v5760
        %5818 = vmatmul.f32.gmra.mxu0 %v5754
        %v5819 = vpop.f32.mrf.mxu0
        %v5820 = vadd.f32 0.0, %v5819
        %5821 = vmatmul.f32.gmra.mxu0 %v5757
        %v5822 = vpop.f32.mrf.mxu0
        %v5823 = vadd.f32 0.0, %v5822
        %5824 = vdwg.mxu0
        %5825 = vmatpush.msra.mxu0 %v5791
        %5826 = vmatpush.msra.mxu0 %v5790
        %5827 = vmatpush.msra.mxu0 %v5789
        %5828 = vmatpush.msra.mxu0 %v5788
        %5829 = vmatpush.msra.mxu0 %v5787
        %5830 = vmatpush.msra.mxu0 %v5786
        %5831 = vmatpush.msra.mxu0 %v5785
        %5832 = vmatpush.msra.mxu0 %v5784
        %5833 = vmatpush.msra.mxu0 %v5783
        %5834 = vmatpush.msra.mxu0 %v5782
        %5835 = vmatpush.msra.mxu0 %v5781
        %5836 = vmatpush.msra.mxu0 %v5780
        %5837 = vmatpush.msra.mxu0 %v5779
        %5838 = vmatpush.msra.mxu0 %v5778
        %5839 = vmatpush.msra.mxu0 %v5777
        %5840 = vmatpush.msra.mxu0 %v5776
        %5841 = vmatmul.f32.gmra.mxu0 %v5755
        %v5842 = vpop.f32.mrf.mxu0
        %v5843 = vadd.f32 %v5820, %v5842
        %5844 = vmatmul.f32.gmra.mxu0 %v5758
        %v5845 = vpop.f32.mrf.mxu0
        %v5846 = vadd.f32 %v5823, %v5845
        %5847 = vdwg.mxu0
        %5848 = vmatpush.msra.mxu0 0.0
        %5849 = vmatpush.msra.mxu0 0.0
        %5850 = vmatpush.msra.mxu0 0.0
        %5851 = vmatpush.msra.mxu0 0.0
        %5852 = vmatpush.msra.mxu0 0.0
        %5853 = vmatpush.msra.mxu0 0.0
        %5854 = vmatpush.msra.mxu0 0.0
        %5855 = vmatpush.msra.mxu0 0.0
        %5856 = vmatpush.msra.mxu0 0.0
        %5857 = vmatpush.msra.mxu0 0.0
        %5858 = vmatpush.msra.mxu0 0.0
        %5859 = vmatpush.msra.mxu0 0.0
        %5860 = vmatpush.msra.mxu0 %v5795
        %5861 = vmatpush.msra.mxu0 %v5794
        %5862 = vmatpush.msra.mxu0 %v5793
        %5863 = vmatpush.msra.mxu0 %v5792
        %5864 = vmatmul.f32.gmra.mxu0 %v5797
        %v5865 = vpop.f32.mrf.mxu0
        %v5866 = vadd.f32 %v5843, %v5865
        %5867 = vmatmul.f32.gmra.mxu0 %v5800
        %v5868 = vpop.f32.mrf.mxu0
        %v5869 = vadd.f32 %v5846, %v5868
        %5870 = vdwg.mxu0
        %5871 = vst [vmem:[%s244] sm:$0xff] %v5866
        %5872 = vst [vmem:[%s244 + $0x8] sm:$0xff] %v5869
        %5879 = vrot.lane.b32.xlu0 %v5748, 16
        %v5880 = vpop.permute.xlu0 %5879
        %5881 = vrot.lane.b32.xlu0 %v5749, 16
        %v5882 = vpop.permute.xlu0 %5881
        %5883 = vrot.lane.b32.xlu0 %v5750, 16
        %v5884 = vpop.permute.xlu0 %5883
        %5885 = vrot.lane.b32.xlu0 %v5751, 16
        %v5886 = vpop.permute.xlu0 %5885
        %5887 = vrot.lane.b32.xlu0 %v5752, 16
        %v5888 = vpop.permute.xlu0 %5887
        %5889 = vrot.lane.b32.xlu0 %v5753, 16
        %v5890 = vpop.permute.xlu0 %5889
        %vm5891 = vcmask 130048
        %v5892 = vsel %vm5891, %v5880, %v5882
        %v5893 = vsel %vm5891, %v5882, %v5884
        %v5894 = vsel %vm5891, %v5886, %v5888
        %v5895 = vsel %vm5891, %v5888, %v5890
        %v5902 = vmul.f32 %v5221, %v5880
        %v5903 = vmul.f32 %v5222, %v5892
        %v5904 = vmul.f32 %v5223, %v5893
        %v5905 = vmul.f32 %v5224, %v5886
        %v5906 = vmul.f32 %v5225, %v5894
        %v5907 = vmul.f32 %v5226, %v5895
        %v5908 = vld [vmem:[%s1 + $0x10] sm:$0xff]
        %v5909 = vld [vmem:[%s1 + $0x18] sm:$0xff]
        %v5910 = vld [vmem:[%s1 + $0x20] sm:$0xff]
        %v5911 = vld [vmem:[%s1 + $0x28] sm:$0xff]
        %v5912 = vld [vmem:[%s1 + $0x30] sm:$0xff]
        %v5913 = vld [vmem:[%s1 + $0x38] sm:$0xff]
        %v5914 = vld [vmem:[%s1 + $0x40] sm:$0xff]
        %v5915 = vld [vmem:[%s1 + $0x48] sm:$0xff]
        %v5916 = vld [vmem:[%s1 + $0x50] sm:$0xff]
        %v5917 = vld [vmem:[%s1 + $0x58] sm:$0xff]
        %v5918 = vld [vmem:[%s1 + $0x60] sm:$0xff]
        %v5919 = vld [vmem:[%s1 + $0x68] sm:$0xff]
        %v5920 = vld [vmem:[%s1 + $0x70] sm:$0xff]
        %v5921 = vld [vmem:[%s1 + $0x78] sm:$0xff]
        %v5922 = vld [vmem:[%s1 + $0x80] sm:$0xff]
        %v5923 = vld [vmem:[%s1 + $0x88] sm:$0xff]
        %v5924 = vld [vmem:[%s1 + $0x90] sm:$0xff]
        %v5925 = vld [vmem:[%s1 + $0x98] sm:$0xff]
        %v5926 = vld [vmem:[%s1 + $0xa0] sm:$0xff]
        %v5927 = vld [vmem:[%s1 + $0xa8] sm:$0xff]
        %v5928 = vld [vmem:[%s1 + $0xb0] sm:$0xff]
        %v5929 = vld [vmem:[%s1 + $0xb8] sm:$0xff]
        %v5930 = vld [vmem:[%s1 + $0xc0] sm:$0xff]
        %v5931 = vld [vmem:[%s1 + $0xc8] sm:$0xff]
        %v5932 = vld [vmem:[%s1 + $0xd0] sm:$0xff]
        %v5933 = vld [vmem:[%s1 + $0xd8] sm:$0xff]
        %v5934 = vld [vmem:[%s1 + $0xe0] sm:$0xff]
        %v5935 = vld [vmem:[%s1 + $0xe8] sm:$0xff]
        %v5936 = vld [vmem:[%s1 + $0xf0] sm:$0xff]
        %v5937 = vld [vmem:[%s1 + $0xf8] sm:$0xff]
        %v5938 = vld [vmem:[%s1 + $0x100] sm:$0xff]
        %v5939 = vld [vmem:[%s1 + $0x108] sm:$0xff]
        %v5940 = vld [vmem:[%s1 + $0x110] sm:$0xff]
        %v5941 = vld [vmem:[%s1 + $0x118] sm:$0xff]
        %5948 = vrot.lane.b32.xlu0 %v5902, 112
        %v5949 = vpop.permute.xlu0 %5948
        %5950 = vrot.lane.b32.xlu0 %v5903, 112
        %v5951 = vpop.permute.xlu0 %5950
        %5952 = vrot.lane.b32.xlu0 %v5904, 112
        %v5953 = vpop.permute.xlu0 %5952
        %5954 = vrot.lane.b32.xlu0 %v5905, 112
        %v5955 = vpop.permute.xlu0 %5954
        %5956 = vrot.lane.b32.xlu0 %v5906, 112
        %v5957 = vpop.permute.xlu0 %5956
        %5958 = vrot.lane.b32.xlu0 %v5907, 112
        %v5959 = vpop.permute.xlu0 %5958
        %vm5960 = vcmask 916480
        %v5961 = vsel %vm5960, %v5949, %v5951
        %v5962 = vsel %vm5960, %v5951, %v5953
        %v5963 = vsel %vm5960, %v5955, %v5957
        %v5964 = vsel %vm5960, %v5957, %v5959
        %v5969 = vsel %vm5891, %v5953, 0
        %v5971 = vsel %vm5891, %v5959, 0
        %5973 = vmatpush.msra.mxu0 %v5923
        %5974 = vmatpush.msra.mxu0 %v5922
        %5975 = vmatpush.msra.mxu0 %v5921
        %5976 = vmatpush.msra.mxu0 %v5920
        %5977 = vmatpush.msra.mxu0 %v5919
        %5978 = vmatpush.msra.mxu0 %v5918
        %5979 = vmatpush.msra.mxu0 %v5917
        %5980 = vmatpush.msra.mxu0 %v5916
        %5981 = vmatpush.msra.mxu0 %v5915
        %5982 = vmatpush.msra.mxu0 %v5914
        %5983 = vmatpush.msra.mxu0 %v5913
        %5984 = vmatpush.msra.mxu0 %v5912
        %5985 = vmatpush.msra.mxu0 %v5911
        %5986 = vmatpush.msra.mxu0 %v5910
        %5987 = vmatpush.msra.mxu0 %v5909
        %5988 = vmatpush.msra.mxu0 %v5908
        %5989 = vmatmul.f32.gmra.mxu0 %v5961
        %v5990 = vpop.f32.mrf.mxu0
        %v5991 = vadd.f32 0.0, %v5990
        %5992 = vmatmul.f32.gmra.mxu0 %v5963
        %v5993 = vpop.f32.mrf.mxu0
        %v5994 = vadd.f32 0.0, %v5993
        %5995 = vdwg.mxu0
        %5996 = vmatpush.msra.mxu0 %v5939
        %5997 = vmatpush.msra.mxu0 %v5938
        %5998 = vmatpush.msra.mxu0 %v5937
        %5999 = vmatpush.msra.mxu0 %v5936
        %6000 = vmatpush.msra.mxu0 %v5935
        %6001 = vmatpush.msra.mxu0 %v5934
        %6002 = vmatpush.msra.mxu0 %v5933
        %6003 = vmatpush.msra.mxu0 %v5932
        %6004 = vmatpush.msra.mxu0 %v5931
        %6005 = vmatpush.msra.mxu0 %v5930
        %6006 = vmatpush.msra.mxu0 %v5929
        %6007 = vmatpush.msra.mxu0 %v5928
        %6008 = vmatpush.msra.mxu0 %v5927
        %6009 = vmatpush.msra.mxu0 %v5926
        %6010 = vmatpush.msra.mxu0 %v5925
        %6011 = vmatpush.msra.mxu0 %v5924
        %6012 = vmatmul.f32.gmra.mxu0 %v5962
        %v6013 = vpop.f32.mrf.mxu0
        %v6014 = vadd.f32 %v5991, %v6013
        %6015 = vmatmul.f32.gmra.mxu0 %v5964
        %v6016 = vpop.f32.mrf.mxu0
        %v6017 = vadd.f32 %v5994, %v6016
        %6018 = vdwg.mxu0
        %6019 = vmatpush.msra.mxu0 0.0
        %6020 = vmatpush.msra.mxu0 0.0
        %6021 = vmatpush.msra.mxu0 0.0
        %6022 = vmatpush.msra.mxu0 0.0
        %6023 = vmatpush.msra.mxu0 0.0
        %6024 = vmatpush.msra.mxu0 0.0
        %6025 = vmatpush.msra.mxu0 0.0
        %6026 = vmatpush.msra.mxu0 0.0
        %6027 = vmatpush.msra.mxu0 0.0
        %6028 = vmatpush.msra.mxu0 0.0
        %6029 = vmatpush.msra.mxu0 0.0
        %6030 = vmatpush.msra.mxu0 0.0
        %6031 = vmatpush.msra.mxu0 0.0
        %6032 = vmatpush.msra.mxu0 0.0
        %6033 = vmatpush.msra.mxu0 %v5941
        %6034 = vmatpush.msra.mxu0 %v5940
        %6035 = vmatmul.f32.gmra.mxu0 %v5969
        %v6036 = vpop.f32.mrf.mxu0
        %v6037 = vadd.f32 %v6014, %v6036
        %6038 = vmatmul.f32.gmra.mxu0 %v5971
        %v6039 = vpop.f32.mrf.mxu0
        %v6040 = vadd.f32 %v6017, %v6039
        %6041 = vdwg.mxu0
        %s6042 = scalar_lea.vmem %s244, 16 [#allocation3]
        %6043 = vst [vmem:[%s6042] sm:$0xff] %v6037
        %6044 = vst [vmem:[%s6042 + $0x8] sm:$0xff] %v6040
        %6045 = vrot.lane.b32.xlu0 %v5748, 32
        %v6046 = vpop.permute.xlu0 %6045
        %6047 = vrot.lane.b32.xlu0 %v5749, 32
        %v6048 = vpop.permute.xlu0 %6047
        %6049 = vrot.lane.b32.xlu0 %v5751, 32
        %v6050 = vpop.permute.xlu0 %6049
        %6051 = vrot.lane.b32.xlu0 %v5752, 32
        %v6052 = vpop.permute.xlu0 %6051
        %v6053 = vsel %vm795, %v6046, %v6048
        %v6054 = vsel %vm795, %v6050, %v6052
        %v6061 = vmul.f32 %v5221, %v6046
        %v6062 = vmul.f32 %v5222, %v6053
        %v6063 = vmul.f32 %v5223, %v6048
        %v6064 = vmul.f32 %v5224, %v6050
        %v6065 = vmul.f32 %v5225, %v6054
        %v6066 = vmul.f32 %v5226, %v6052
        %v6067 = vld [vmem:[%s1 + $0x20] sm:$0xff]
        %v6068 = vld [vmem:[%s1 + $0x28] sm:$0xff]
        %v6069 = vld [vmem:[%s1 + $0x30] sm:$0xff]
        %v6070 = vld [vmem:[%s1 + $0x38] sm:$0xff]
        %v6071 = vld [vmem:[%s1 + $0x40] sm:$0xff]
        %v6072 = vld [vmem:[%s1 + $0x48] sm:$0xff]
        %v6073 = vld [vmem:[%s1 + $0x50] sm:$0xff]
        %v6074 = vld [vmem:[%s1 + $0x58] sm:$0xff]
        %v6075 = vld [vmem:[%s1 + $0x60] sm:$0xff]
        %v6076 = vld [vmem:[%s1 + $0x68] sm:$0xff]
        %v6077 = vld [vmem:[%s1 + $0x70] sm:$0xff]
        %v6078 = vld [vmem:[%s1 + $0x78] sm:$0xff]
        %v6079 = vld [vmem:[%s1 + $0x80] sm:$0xff]
        %v6080 = vld [vmem:[%s1 + $0x88] sm:$0xff]
        %v6081 = vld [vmem:[%s1 + $0x90] sm:$0xff]
        %v6082 = vld [vmem:[%s1 + $0x98] sm:$0xff]
        %v6083 = vld [vmem:[%s1 + $0xa0] sm:$0xff]
        %v6084 = vld [vmem:[%s1 + $0xa8] sm:$0xff]
        %v6085 = vld [vmem:[%s1 + $0xb0] sm:$0xff]
        %v6086 = vld [vmem:[%s1 + $0xb8] sm:$0xff]
        %v6087 = vld [vmem:[%s1 + $0xc0] sm:$0xff]
        %v6088 = vld [vmem:[%s1 + $0xc8] sm:$0xff]
        %v6089 = vld [vmem:[%s1 + $0xd0] sm:$0xff]
        %v6090 = vld [vmem:[%s1 + $0xd8] sm:$0xff]
        %v6091 = vld [vmem:[%s1 + $0xe0] sm:$0xff]
        %v6092 = vld [vmem:[%s1 + $0xe8] sm:$0xff]
        %v6093 = vld [vmem:[%s1 + $0xf0] sm:$0xff]
        %v6094 = vld [vmem:[%s1 + $0xf8] sm:$0xff]
        %v6095 = vld [vmem:[%s1 + $0x100] sm:$0xff]
        %v6096 = vld [vmem:[%s1 + $0x108] sm:$0xff]
        %v6097 = vld [vmem:[%s1 + $0x110] sm:$0xff]
        %v6098 = vld [vmem:[%s1 + $0x118] sm:$0xff]
        %6105 = vrot.lane.b32.xlu0 %v6061, 96
        %v6106 = vpop.permute.xlu0 %6105
        %6107 = vrot.lane.b32.xlu0 %v6062, 96
        %v6108 = vpop.permute.xlu0 %6107
        %6109 = vrot.lane.b32.xlu0 %v6063, 96
        %v6110 = vpop.permute.xlu0 %6109
        %6111 = vrot.lane.b32.xlu0 %v6064, 96
        %v6112 = vpop.permute.xlu0 %6111
        %6113 = vrot.lane.b32.xlu0 %v6065, 96
        %v6114 = vpop.permute.xlu0 %6113
        %6115 = vrot.lane.b32.xlu0 %v6066, 96
        %v6116 = vpop.permute.xlu0 %6115
        %vm6117 = vcmask 785408
        %v6118 = vsel %vm6117, %v6106, %v6108
        %v6119 = vsel %vm6117, %v6108, %v6110
        %v6120 = vsel %vm6117, %v6112, %v6114
        %v6121 = vsel %vm6117, %v6114, %v6116
        %6126 = vmatpush.msra.mxu0 %v6082
        %6127 = vmatpush.msra.mxu0 %v6081
        %6128 = vmatpush.msra.mxu0 %v6080
        %6129 = vmatpush.msra.mxu0 %v6079
        %6130 = vmatpush.msra.mxu0 %v6078
        %6131 = vmatpush.msra.mxu0 %v6077
        %6132 = vmatpush.msra.mxu0 %v6076
        %6133 = vmatpush.msra.mxu0 %v6075
        %6134 = vmatpush.msra.mxu0 %v6074
        %6135 = vmatpush.msra.mxu0 %v6073
        %6136 = vmatpush.msra.mxu0 %v6072
        %6137 = vmatpush.msra.mxu0 %v6071
        %6138 = vmatpush.msra.mxu0 %v6070
        %6139 = vmatpush.msra.mxu0 %v6069
        %6140 = vmatpush.msra.mxu0 %v6068
        %6141 = vmatpush.msra.mxu0 %v6067
        %6142 = vmatmul.f32.gmra.mxu0 %v6118
        %v6143 = vpop.f32.mrf.mxu0
        %v6144 = vadd.f32 0.0, %v6143
        %6145 = vmatmul.f32.gmra.mxu0 %v6120
        %v6146 = vpop.f32.mrf.mxu0
        %v6147 = vadd.f32 0.0, %v6146
        %6148 = vdwg.mxu0
        %6149 = vmatpush.msra.mxu0 %v6098
        %6150 = vmatpush.msra.mxu0 %v6097
        %6151 = vmatpush.msra.mxu0 %v6096
        %6152 = vmatpush.msra.mxu0 %v6095
        %6153 = vmatpush.msra.mxu0 %v6094
        %6154 = vmatpush.msra.mxu0 %v6093
        %6155 = vmatpush.msra.mxu0 %v6092
        %6156 = vmatpush.msra.mxu0 %v6091
        %6157 = vmatpush.msra.mxu0 %v6090
        %6158 = vmatpush.msra.mxu0 %v6089
        %6159 = vmatpush.msra.mxu0 %v6088
        %6160 = vmatpush.msra.mxu0 %v6087
        %6161 = vmatpush.msra.mxu0 %v6086
        %6162 = vmatpush.msra.mxu0 %v6085
        %6163 = vmatpush.msra.mxu0 %v6084
        %6164 = vmatpush.msra.mxu0 %v6083
        %6165 = vmatmul.f32.gmra.mxu0 %v6119
        %v6166 = vpop.f32.mrf.mxu0
        %v6167 = vadd.f32 %v6144, %v6166
        %6168 = vmatmul.f32.gmra.mxu0 %v6121
        %v6169 = vpop.f32.mrf.mxu0
        %v6170 = vadd.f32 %v6147, %v6169
        %6171 = vdwg.mxu0
        %s6172 = scalar_lea.vmem %s244, 32 [#allocation3]
        %6173 = vst [vmem:[%s6172] sm:$0xff] %v6167
        %6174 = vst [vmem:[%s6172 + $0x8] sm:$0xff] %v6170
        %6175 = vrot.lane.b32.xlu0 %v5748, 48
        %v6176 = vpop.permute.xlu0 %6175
        %6177 = vrot.lane.b32.xlu0 %v5749, 48
        %v6178 = vpop.permute.xlu0 %6177
        %6179 = vrot.lane.b32.xlu0 %v5751, 48
        %v6180 = vpop.permute.xlu0 %6179
        %6181 = vrot.lane.b32.xlu0 %v5752, 48
        %v6182 = vpop.permute.xlu0 %6181
        %vm6183 = vcmask 392192
        %v6184 = vsel %vm6183, %v6176, %v6178
        %v6185 = vsel %vm6183, %v6180, %v6182
        %v6192 = vmul.f32 %v5221, %v6176
        %v6193 = vmul.f32 %v5222, %v6184
        %v6194 = vmul.f32 %v5223, %v6178
        %v6195 = vmul.f32 %v5224, %v6180
        %v6196 = vmul.f32 %v5225, %v6185
        %v6197 = vmul.f32 %v5226, %v6182
        %v6198 = vld [vmem:[%s1 + $0x30] sm:$0xff]
        %v6199 = vld [vmem:[%s1 + $0x38] sm:$0xff]
        %v6200 = vld [vmem:[%s1 + $0x40] sm:$0xff]
        %v6201 = vld [vmem:[%s1 + $0x48] sm:$0xff]
        %v6202 = vld [vmem:[%s1 + $0x50] sm:$0xff]
        %v6203 = vld [vmem:[%s1 + $0x58] sm:$0xff]
        %v6204 = vld [vmem:[%s1 + $0x60] sm:$0xff]
        %v6205 = vld [vmem:[%s1 + $0x68] sm:$0xff]
        %v6206 = vld [vmem:[%s1 + $0x70] sm:$0xff]
        %v6207 = vld [vmem:[%s1 + $0x78] sm:$0xff]
        %v6208 = vld [vmem:[%s1 + $0x80] sm:$0xff]
        %v6209 = vld [vmem:[%s1 + $0x88] sm:$0xff]
        %v6210 = vld [vmem:[%s1 + $0x90] sm:$0xff]
        %v6211 = vld [vmem:[%s1 + $0x98] sm:$0xff]
        %v6212 = vld [vmem:[%s1 + $0xa0] sm:$0xff]
        %v6213 = vld [vmem:[%s1 + $0xa8] sm:$0xff]
        %v6214 = vld [vmem:[%s1 + $0xb0] sm:$0xff]
        %v6215 = vld [vmem:[%s1 + $0xb8] sm:$0xff]
        %v6216 = vld [vmem:[%s1 + $0xc0] sm:$0xff]
        %v6217 = vld [vmem:[%s1 + $0xc8] sm:$0xff]
        %v6218 = vld [vmem:[%s1 + $0xd0] sm:$0xff]
        %v6219 = vld [vmem:[%s1 + $0xd8] sm:$0xff]
        %v6220 = vld [vmem:[%s1 + $0xe0] sm:$0xff]
        %v6221 = vld [vmem:[%s1 + $0xe8] sm:$0xff]
        %v6222 = vld [vmem:[%s1 + $0xf0] sm:$0xff]
        %v6223 = vld [vmem:[%s1 + $0xf8] sm:$0xff]
        %v6224 = vld [vmem:[%s1 + $0x100] sm:$0xff]
        %v6225 = vld [vmem:[%s1 + $0x108] sm:$0xff]
        %v6226 = vld [vmem:[%s1 + $0x110] sm:$0xff]
        %v6227 = vld [vmem:[%s1 + $0x118] sm:$0xff]
        %6234 = vrot.lane.b32.xlu0 %v6192, 80
        %v6235 = vpop.permute.xlu0 %6234
        %6236 = vrot.lane.b32.xlu0 %v6193, 80
        %v6237 = vpop.permute.xlu0 %6236
        %6238 = vrot.lane.b32.xlu0 %v6194, 80
        %v6239 = vpop.permute.xlu0 %6238
        %6240 = vrot.lane.b32.xlu0 %v6195, 80
        %v6241 = vpop.permute.xlu0 %6240
        %6242 = vrot.lane.b32.xlu0 %v6196, 80
        %v6243 = vpop.permute.xlu0 %6242
        %6244 = vrot.lane.b32.xlu0 %v6197, 80
        %v6245 = vpop.permute.xlu0 %6244
        %vm6246 = vcmask 654336
        %v6247 = vsel %vm6246, %v6235, %v6237
        %v6248 = vsel %vm6246, %v6237, %v6239
        %v6249 = vsel %vm6246, %v6241, %v6243
        %v6250 = vsel %vm6246, %v6243, %v6245
        %v6253 = vsel %vm5960, %v6248, 0
        %v6255 = vsel %vm5960, %v6250, 0
        %6257 = vmatpush.msra.mxu0 %v6213
        %6258 = vmatpush.msra.mxu0 %v6212
        %6259 = vmatpush.msra.mxu0 %v6211
        %6260 = vmatpush.msra.mxu0 %v6210
        %6261 = vmatpush.msra.mxu0 %v6209
        %6262 = vmatpush.msra.mxu0 %v6208
        %6263 = vmatpush.msra.mxu0 %v6207
        %6264 = vmatpush.msra.mxu0 %v6206
        %6265 = vmatpush.msra.mxu0 %v6205
        %6266 = vmatpush.msra.mxu0 %v6204
        %6267 = vmatpush.msra.mxu0 %v6203
        %6268 = vmatpush.msra.mxu0 %v6202
        %6269 = vmatpush.msra.mxu0 %v6201
        %6270 = vmatpush.msra.mxu0 %v6200
        %6271 = vmatpush.msra.mxu0 %v6199
        %6272 = vmatpush.msra.mxu0 %v6198
        %6273 = vmatmul.f32.gmra.mxu0 %v6247
        %v6274 = vpop.f32.mrf.mxu0
        %v6275 = vadd.f32 0.0, %v6274
        %6276 = vmatmul.f32.gmra.mxu0 %v6249
        %v6277 = vpop.f32.mrf.mxu0
        %v6278 = vadd.f32 0.0, %v6277
        %6279 = vdwg.mxu0
        %6280 = vmatpush.msra.mxu0 0.0
        %6281 = vmatpush.msra.mxu0 0.0
        %6282 = vmatpush.msra.mxu0 %v6227
        %6283 = vmatpush.msra.mxu0 %v6226
        %6284 = vmatpush.msra.mxu0 %v6225
        %6285 = vmatpush.msra.mxu0 %v6224
        %6286 = vmatpush.msra.mxu0 %v6223
        %6287 = vmatpush.msra.mxu0 %v6222
        %6288 = vmatpush.msra.mxu0 %v6221
        %6289 = vmatpush.msra.mxu0 %v6220
        %6290 = vmatpush.msra.mxu0 %v6219
        %6291 = vmatpush.msra.mxu0 %v6218
        %6292 = vmatpush.msra.mxu0 %v6217
        %6293 = vmatpush.msra.mxu0 %v6216
        %6294 = vmatpush.msra.mxu0 %v6215
        %6295 = vmatpush.msra.mxu0 %v6214
        %6296 = vmatmul.f32.gmra.mxu0 %v6253
        %v6297 = vpop.f32.mrf.mxu0
        %v6298 = vadd.f32 %v6275, %v6297
        %6299 = vmatmul.f32.gmra.mxu0 %v6255
        %v6300 = vpop.f32.mrf.mxu0
        %v6301 = vadd.f32 %v6278, %v6300
        %6302 = vdwg.mxu0
        %s6303 = scalar_lea.vmem %s244, 48 [#allocation3]
        %6304 = vst [vmem:[%s6303] sm:$0xff] %v6298
        %6305 = vst [vmem:[%s6303 + $0x8] sm:$0xff] %v6301
        %s6306 = sand.u32 %s159, 1
        %s6307 = scalar_lea.sflag [#allocation4], %s6306
        %s6308 = sand.u32 %s159, 1
        %s6309 = smul.addr %s6308, 64
        %s6310 = scalar_lea.vmem [#allocation3], %s6309
        // Predicated region
        $region45: #{stereo_cnn_forward.1} parent=43 // pred_check
          %p6311 = pneg %p169
        $region46: #{stereo_cnn_forward.1} parent=43 // pred_check_branch
          %6313 = sbr.rel (%p6311) target = $region48
        $region47: #{stereo_cnn_forward.1} parent=43 // pred_region
          %6315 = vsyncadd %s6307, 0
          %s6316 = smul.addr %s20, 8
          %s6317 = smul.addr %s6316, 8
          %s6318 = scalar_lea.hbm %s6, %s6317
          %s6319 = sshll.u32 %s6310, 4
          %s6320 = int_to_ptr.vmem [resolvable:$true] %s6319
          %s6321 = sshll.u32 %s6318, 4
          %s6322 = int_to_ptr.hbm [resolvable:$true] %s6321
          %6327 = dma.vmem_to_hbm [thread:$0]  %s6320, 1024, %s6322, %s6307, 128, 128, 8
        $region48: #{stereo_cnn_forward.1} parent=43 // pred_fallthru
          _
      $region44: #{stereo_cnn_forward.1} parent=5 // pred_fallthru
        _
      %p6328 = scmp.le.s32.totalorder 2, %s15
      // Predicated region
      $region49: #{stereo_cnn_forward.1} parent=5 // pred_check
        %p6329 = pneg %p6328
      $region50: #{stereo_cnn_forward.1} parent=5 // pred_check_branch
        %6331 = sbr.rel (%p6329) target = $region52
      $region51: #{stereo_cnn_forward.1} parent=5 // pred_region
        %s6332 = ssub.s32 %s15, 2
        // Predicated region
        $region53: #{stereo_cnn_forward.1} parent=51 // pred_check
          %p6333 = pneg %p175
        $region54: #{stereo_cnn_forward.1} parent=51 // pred_check_branch
          %6335 = sbr.rel (%p6333) target = $region56
        $region55: #{stereo_cnn_forward.1} parent=51 // pred_region
          %s6336 = sand.u32 %s160, 1
          %s6337 = scalar_lea.sflag [#allocation4], %s6336
          %s6338 = sand.u32 %s160, 1
          %s6339 = smul.addr %s6338, 64
          %s6340 = scalar_lea.vmem [#allocation3], %s6339
          %6342 = dma.done %s6337, 1024
        $region56: #{stereo_cnn_forward.1} parent=51 // pred_fallthru
          _
      $region52: #{stereo_cnn_forward.1} parent=5 // pred_fallthru
        _
    $region6: #{stereo_cnn_forward.1} parent=1 // loop_footer
      %s19 = sadd.s32 1, %s15
    $region7: #{stereo_cnn_forward.1} parent=1 // loop_footer_branch
      %14 = sbr.rel target = $region3
    $region8: #{stereo_cnn_forward.1} parent=1 // loop_exit
      _
    %6343 = vsyncpa [#allocation4], 1
    %s6344 = scalar_lea.sflag [#allocation4], 1
    %6345 = vsyncpa %s6344, 1

</llo_original>
